<compile_context>
chip_gen: v5e
topology: v5e:2x2
jax: 0.10.0
libtpu: 0.0.40
codegen_flags: <defaults>
</compile_context>

<pallas_src>
import jax
import jax.numpy as jnp
from jax.experimental import pallas as pl
from jax.experimental.pallas import tpu as pltpu


def _pick_tile(n: int, target: int) -> int:
    """Largest tile dividing n that is a multiple of 128 and <= target; else n itself
    (a block equal to the full dimension is always legal)."""
    if n <= target:
        return n
    t = (target // 128) * 128
    while t >= 128:
        if n % t == 0:
            return t
        t -= 128
    return n


# -----------------------------------------------------------------------------------------
# Kernel 1: fused 1x1-conv projections  x -> (Q channels-first, K position-first, V cf)
# -----------------------------------------------------------------------------------------
def _pam_project_kernel(x_ref, wq_ref, wk_ref, wv_ref, bq_ref, bk_ref, bv_ref,
                        q_ref, k_ref, v_ref):
    x = x_ref[...]                                                        # (C, tn)
    q = jnp.dot(wq_ref[...], x, preferred_element_type=jnp.float32) + bq_ref[...]   # (C8, tn)
    k = jnp.dot(wk_ref[...], x, preferred_element_type=jnp.float32) + bk_ref[...]   # (C8, tn)
    v = jnp.dot(wv_ref[...], x, preferred_element_type=jnp.float32) + bv_ref[...]   # (C,  tn)
    q_ref[...] = q.astype(q_ref.dtype)        # channels-first (C8, tn)
    k_ref[...] = k.T.astype(k_ref.dtype)      # position-first (tn, C8)
    v_ref[...] = v.astype(v_ref.dtype)        # channels-first (C, tn)


# -----------------------------------------------------------------------------------------
# Kernel 2: flash-style position attention   out[c, i] = sum_j softmax_j(Q^T K)[i, j] V[c, j]
# -----------------------------------------------------------------------------------------
def _pam_attention_kernel(q_ref, k_ref, v_ref, o_ref, m_sc, l_sc, acc_sc):
    ki = pl.program_id(2)

    @pl.when(ki == 0)
    def _init():
        m_sc[...] = jnp.full(m_sc.shape, -jnp.inf, dtype=m_sc.dtype)
        l_sc[...] = jnp.zeros(l_sc.shape, dtype=l_sc.dtype)
        acc_sc[...] = jnp.zeros(acc_sc.shape, dtype=acc_sc.dtype)

    qt = q_ref[...]      # (C8, tq)  channels-first query tile
    k = k_ref[...]       # (tk, C8)  position-first key tile
    v = v_ref[...]       # (C,  tk)  channels-first value tile

    # Transposed energy tile: s_t[j, i] = sum_c K[c, j] * Q[c, i]  -> (tk, tq), f32 on MXU.
    s_t = jnp.dot(k, qt, preferred_element_type=jnp.float32)

    m_prev = m_sc[...]                                                   # (1, tq)
    m_new = jnp.maximum(m_prev, jnp.max(s_t, axis=0, keepdims=True))
    alpha = jnp.exp(m_prev - m_new)                                      # rescale old partials
    p_t = jnp.exp(s_t - m_new)                                           # (tk, tq)
    l_sc[...] = alpha * l_sc[...] + jnp.sum(p_t, axis=0, keepdims=True)
    acc_sc[...] = alpha * acc_sc[...] + jnp.dot(
        v, p_t.astype(v.dtype), preferred_element_type=jnp.float32)      # (C, tq)
    m_sc[...] = m_new

    @pl.when(ki == pl.num_programs(2) - 1)
    def _finalize():
        inv_l = pl.reciprocal(l_sc[...], approx=True)                    # (1, tq), EUP
        o_ref[...] = (acc_sc[...] * inv_l).astype(o_ref.dtype)           # (C, tq), lane-dense


# -----------------------------------------------------------------------------------------
# Wrapper
# -----------------------------------------------------------------------------------------
def pam_forward(x, wq, bq, wk, bk, wv, bv, *, proj_tile=1024, q_tile=512, k_tile=512):
    """PAM_Module forward.  x: (B, C, H, W, 1) (or (B, C, H, W)); conv weights as (Cout, Cin)."""
    if x.ndim == 5 and x.shape[-1] == 1:
        x4 = x[..., 0]
    else:
        x4 = x
    B, C, H, W = x4.shape
    HW = H * W
    C8 = wq.shape[0]
    dtype = x4.dtype

    xf = x4.reshape(B, C, HW)                 # contiguous -> free reshape, no HBM reshuffle
    # Tiny parameter relayouts only (Cout-sized vectors).
    wq2 = wq.astype(dtype)
    wk2 = wk.astype(dtype)
    wv2 = wv.astype(dtype)
    bq2 = bq.reshape(C8, 1).astype(dtype)
    bk2 = bk.reshape(C8, 1).astype(dtype)
    bv2 = bv.reshape(C, 1).astype(dtype)

    # ---- Stage 1: Q / K / V projections ---------------------------------------------------
    tn = _pick_tile(HW, proj_tile)
    q_cf, k_pf, v_cf = pl.pallas_call(
        _pam_project_kernel,
        out_shape=(jax.ShapeDtypeStruct((B, C8, HW), dtype),   # Q channels-first
                   jax.ShapeDtypeStruct((B, HW, C8), dtype),   # K position-first
                   jax.ShapeDtypeStruct((B, C, HW), dtype)),   # V channels-first
        grid_spec=pltpu.PrefetchScalarGridSpec(
            num_scalar_prefetch=0,
            grid=(B, HW // tn),
            in_specs=[
                pl.BlockSpec((None, C, tn), lambda b, n: (b, 0, n)),
                pl.BlockSpec((C8, C), lambda b, n: (0, 0)),
                pl.BlockSpec((C8, C), lambda b, n: (0, 0)),
                pl.BlockSpec((C, C), lambda b, n: (0, 0)),
                pl.BlockSpec((C8, 1), lambda b, n: (0, 0)),
                pl.BlockSpec((C8, 1), lambda b, n: (0, 0)),
                pl.BlockSpec((C, 1), lambda b, n: (0, 0)),
            ],
            out_specs=[
                pl.BlockSpec((None, C8, tn), lambda b, n: (b, 0, n)),
                pl.BlockSpec((None, tn, C8), lambda b, n: (b, n, 0)),
                pl.BlockSpec((None, C, tn), lambda b, n: (b, 0, n)),
            ],
        ),
        compiler_params=pltpu.CompilerParams(
            dimension_semantics=("parallel", "parallel")),
    )(xf, wq2, wk2, wv2, bq2, bk2, bv2)

    # ---- Stage 2: flash-style position attention ------------------------------------------
    tq = _pick_tile(HW, q_tile)
    tk = _pick_tile(HW, k_tile)
    out_cf = pl.pallas_call(
        _pam_attention_kernel,
        out_shape=jax.ShapeDtypeStruct((B, C, HW), dtype),
        grid_spec=pltpu.PrefetchScalarGridSpec(
            num_scalar_prefetch=0,
            grid=(B, HW // tq, HW // tk),
            in_specs=[
                pl.BlockSpec((None, C8, tq), lambda b, qi, ki: (b, 0, qi)),
                pl.BlockSpec((None, tk, C8), lambda b, qi, ki: (b, ki, 0)),
                pl.BlockSpec((None, C, tk), lambda b, qi, ki: (b, 0, ki)),
            ],
            out_specs=pl.BlockSpec((None, C, tq), lambda b, qi, ki: (b, 0, qi)),
            scratch_shapes=[
                pltpu.VMEM((1, tq), jnp.float32),   # running max
                pltpu.VMEM((1, tq), jnp.float32),   # running softmax denominator
                pltpu.VMEM((C, tq), jnp.float32),   # running un-normalized output
            ],
        ),
        compiler_params=pltpu.CompilerParams(
            dimension_semantics=("parallel", "parallel", "arbitrary")),
    )(q_cf, k_pf, v_cf)

    # Free reshape + unsqueeze(-1) to match the torch module's output layout.
    return out_cf.reshape(B, C, H, W)[..., None]


# -----------------------------------------------------------------------------------------
# Pure-JAX reference (materializes the HW x HW energy; only for the small test shapes)
# -----------------------------------------------------------------------------------------
def pam_reference(x, wq, bq, wk, bk, wv, bv):
    x4 = x[..., 0] if (x.ndim == 5 and x.shape[-1] == 1) else x
    B, C, H, W = x4.shape
    xf = x4.reshape(B, C, H * W).astype(jnp.float32)
    q = jnp.einsum("oc,bcn->bon", wq, xf) + bq[None, :, None]
    k = jnp.einsum("oc,bcn->bon", wk, xf) + bk[None, :, None]
    v = jnp.einsum("oc,bcn->bon", wv, xf) + bv[None, :, None]
    energy = jnp.einsum("bcq,bck->bqk", q, k)
    attn = jax.nn.softmax(energy, axis=-1)
    out = jnp.einsum("bck,bqk->bcq", v, attn)
    return out.reshape(B, C, H, W)[..., None].astype(x.dtype)


if __name__ == "__main__":
    key = jax.random.PRNGKey(0)
    B, C, H, W = 2, 16, 16, 16          # in_dim=16 -> query/key channels = in_dim // 8 = 2
    C8 = C // 8
    kx, kwq, kbq, kwk, kbk, kwv, kbv = jax.random.split(key, 7)

    x = jax.random.normal(kx, (B, C, H, W, 1), dtype=jnp.float32)
    wq = 0.2 * jax.random.normal(kwq, (C8, C), dtype=jnp.float32)
    bq = 0.1 * jax.random.normal(kbq, (C8,), dtype=jnp.float32)
    wk = 0.2 * jax.random.normal(kwk, (C8, C), dtype=jnp.float32)
    bk = 0.1 * jax.random.normal(kbk, (C8,), dtype=jnp.float32)
    wv = 0.2 * jax.random.normal(kwv, (C, C), dtype=jnp.float32)
    bv = 0.1 * jax.random.normal(kbv, (C,), dtype=jnp.float32)

    out = jax.jit(pam_forward)(x, wq, bq, wk, bk, wv, bv)
    out = jax.block_until_ready(out)

    ref = pam_reference(x, wq, bq, wk, bk, wv, bv)
    assert out.shape == (B, C, H, W, 1) and out.dtype == x.dtype
    max_err = float(jnp.max(jnp.abs(out - ref)))
    assert bool(jnp.allclose(out, ref, atol=2e-2, rtol=2e-2)), f"max abs err {max_err}"
    print("KERNEL_OK")
</pallas_src>

<mosaic_0001>
module attributes {stable_mosaic.version = 11 : i64} {
  func.func @_pam_attention_kernel(%arg0: i32, %arg1: i32, %arg2: i32, %arg3: memref<1x2x256xf32, #tpu.memory_space<vmem>>, %arg4: memref<1x256x2xf32, #tpu.memory_space<vmem>>, %arg5: memref<1x16x256xf32, #tpu.memory_space<vmem>>, %arg6: memref<1x16x256xf32, #tpu.memory_space<vmem>>, %arg7: memref<1x256xf32, #tpu.memory_space<vmem>>, %arg8: memref<1x256xf32, #tpu.memory_space<vmem>>, %arg9: memref<16x256xf32, #tpu.memory_space<vmem>>) attributes {dimension_semantics = [#tpu.dimension_semantics<parallel>, #tpu.dimension_semantics<parallel>, #tpu.dimension_semantics<arbitrary>], iteration_bounds = array<i64: 2, 1, 1>, scalar_prefetch = 0 : i64, scratch_operands = 3 : i64, tpu.core_type = #tpu.core_type<tc>, window_params = [{transform_indices = @transform_0, window_bounds = array<i64: 1, 2, 256>}, {transform_indices = @transform_1, window_bounds = array<i64: 1, 256, 2>}, {transform_indices = @transform_2, window_bounds = array<i64: 1, 16, 256>}, {transform_indices = @transform_3, window_bounds = array<i64: 1, 16, 256>}]} {
    %c0_i32 = arith.constant 0 : i32
    %0 = arith.cmpi eq, %arg2, %c0_i32 : i32
    %1 = arith.extui %0 : i1 to i32
    %c0_i32_0 = arith.constant 0 : i32
    %2 = arith.cmpi ne, %1, %c0_i32_0 : i32
    scf.if %2 {
      %cst_26 = arith.constant 0xFF800000 : f32
      %35 = vector.broadcast %cst_26 : f32 to vector<1x256xf32>
      %c0_27 = arith.constant 0 : index
      %c0_28 = arith.constant 0 : index
      %36 = vector.load %arg7[%c0_27, %c0_28] : memref<1x256xf32, #tpu.memory_space<vmem>>, vector<1x256xf32>
      tpu.vector_store %arg7[%c0_27, %c0_28], %35 {strides = array<i32>} : memref<1x256xf32, #tpu.memory_space<vmem>>, vector<1x256xf32>,
      %cst_29 = arith.constant 0.000000e+00 : f32
      %37 = vector.broadcast %cst_29 : f32 to vector<1x256xf32>
      %c0_30 = arith.constant 0 : index
      %c0_31 = arith.constant 0 : index
      %38 = vector.load %arg8[%c0_30, %c0_31] : memref<1x256xf32, #tpu.memory_space<vmem>>, vector<1x256xf32>
      tpu.vector_store %arg8[%c0_30, %c0_31], %37 {strides = array<i32>} : memref<1x256xf32, #tpu.memory_space<vmem>>, vector<1x256xf32>,
      %cst_32 = arith.constant 0.000000e+00 : f32
      %39 = vector.broadcast %cst_32 : f32 to vector<16x256xf32>
      %c0_33 = arith.constant 0 : index
      %c0_34 = arith.constant 0 : index
      %40 = vector.load %arg9[%c0_33, %c0_34] : memref<16x256xf32, #tpu.memory_space<vmem>>, vector<16x256xf32>
      tpu.vector_store %arg9[%c0_33, %c0_34], %39 {strides = array<i32>} : memref<16x256xf32, #tpu.memory_space<vmem>>, vector<16x256xf32>,
    } else {
    }
    %c0 = arith.constant 0 : index
    %c0_1 = arith.constant 0 : index
    %c0_2 = arith.constant 0 : index
    %3 = vector.load %arg3[%c0, %c0_1, %c0_2] : memref<1x2x256xf32, #tpu.memory_space<vmem>>, vector<1x2x256xf32>
    %4 = vector.shape_cast %3 : vector<1x2x256xf32> to vector<2x256xf32>
    %c0_3 = arith.constant 0 : index
    %c0_4 = arith.constant 0 : index
    %c0_5 = arith.constant 0 : index
    %5 = vector.load %arg4[%c0_3, %c0_4, %c0_5] : memref<1x256x2xf32, #tpu.memory_space<vmem>>, vector<1x256x2xf32>
    %6 = vector.shape_cast %5 : vector<1x256x2xf32> to vector<256x2xf32>
    %c0_6 = arith.constant 0 : index
    %c0_7 = arith.constant 0 : index
    %c0_8 = arith.constant 0 : index
    %7 = vector.load %arg5[%c0_6, %c0_7, %c0_8] : memref<1x16x256xf32, #tpu.memory_space<vmem>>, vector<1x16x256xf32>
    %8 = vector.shape_cast %7 : vector<1x16x256xf32> to vector<16x256xf32>
    %cst = arith.constant dense<0.000000e+00> : vector<256x256xf32>
    %9 = tpu.matmul %6, %4, %cst {dimension_numbers = #tpu.dot_dimension_numbers<[1], [0], [0], [1], [0, 0, 1, 1], [], []>} : vector<256x2xf32>, vector<2x256xf32>, vector<256x256xf32> -> vector<256x256xf32>
    %c0_9 = arith.constant 0 : index
    %c0_10 = arith.constant 0 : index
    %10 = vector.load %arg7[%c0_9, %c0_10] : memref<1x256xf32, #tpu.memory_space<vmem>>, vector<1x256xf32>
    %cst_11 = arith.constant dense<0xFF800000> : vector<256xf32>
    %11 = vector.multi_reduction <maximumf>, %9, %cst_11 [0] : vector<256x256xf32> to vector<256xf32>
    %12 = vector.shape_cast %11 : vector<256xf32> to vector<1x256xf32>
    %13 = arith.maximumf %10, %12 : vector<1x256xf32>
    %14 = arith.subf %10, %13 : vector<1x256xf32>
    %15 = math.exp %14 : vector<1x256xf32>
    %16 = vector.broadcast %13 : vector<1x256xf32> to vector<256x256xf32>
    %17 = arith.subf %9, %16 : vector<256x256xf32>
    %18 = math.exp %17 : vector<256x256xf32>
    %c0_12 = arith.constant 0 : index
    %c0_13 = arith.constant 0 : index
    %19 = vector.load %arg8[%c0_12, %c0_13] : memref<1x256xf32, #tpu.memory_space<vmem>>, vector<1x256xf32>
    %20 = arith.mulf %15, %19 : vector<1x256xf32>
    %cst_14 = arith.constant dense<0.000000e+00> : vector<256xf32>
    %21 = vector.multi_reduction <add>, %18, %cst_14 [0] : vector<256x256xf32> to vector<256xf32>
    %22 = vector.shape_cast %21 : vector<256xf32> to vector<1x256xf32>
    %23 = arith.addf %20, %22 : vector<1x256xf32>
    %c0_15 = arith.constant 0 : index
    %c0_16 = arith.constant 0 : index
    %24 = vector.load %arg8[%c0_15, %c0_16] : memref<1x256xf32, #tpu.memory_space<vmem>>, vector<1x256xf32>
    tpu.vector_store %arg8[%c0_15, %c0_16], %23 {strides = array<i32>} : memref<1x256xf32, #tpu.memory_space<vmem>>, vector<1x256xf32>,
    %c0_17 = arith.constant 0 : index
    %c0_18 = arith.constant 0 : index
    %25 = vector.load %arg9[%c0_17, %c0_18] : memref<16x256xf32, #tpu.memory_space<vmem>>, vector<16x256xf32>
    %26 = vector.broadcast %15 : vector<1x256xf32> to vector<16x256xf32>
    %27 = arith.mulf %26, %25 : vector<16x256xf32>
    %cst_19 = arith.constant dense<0.000000e+00> : vector<16x256xf32>
    %28 = tpu.matmul %8, %18, %cst_19 {dimension_numbers = #tpu.dot_dimension_numbers<[1], [0], [0], [1], [0, 0, 1, 1], [], []>} : vector<16x256xf32>, vector<256x256xf32>, vector<16x256xf32> -> vector<16x256xf32>
    %29 = arith.addf %27, %28 : vector<16x256xf32>
    %c0_20 = arith.constant 0 : index
    %c0_21 = arith.constant 0 : index
    %30 = vector.load %arg9[%c0_20, %c0_21] : memref<16x256xf32, #tpu.memory_space<vmem>>, vector<16x256xf32>
    tpu.vector_store %arg9[%c0_20, %c0_21], %29 {strides = array<i32>} : memref<16x256xf32, #tpu.memory_space<vmem>>, vector<16x256xf32>,
    %c0_22 = arith.constant 0 : index
    %c0_23 = arith.constant 0 : index
    %31 = vector.load %arg7[%c0_22, %c0_23] : memref<1x256xf32, #tpu.memory_space<vmem>>, vector<1x256xf32>
    tpu.vector_store %arg7[%c0_22, %c0_23], %13 {strides = array<i32>} : memref<1x256xf32, #tpu.memory_space<vmem>>, vector<1x256xf32>,
    %c0_i32_24 = arith.constant 0 : i32
    %32 = arith.cmpi eq, %arg2, %c0_i32_24 : i32
    %33 = arith.extui %32 : i1 to i32
    %c0_i32_25 = arith.constant 0 : i32
    %34 = arith.cmpi ne, %33, %c0_i32_25 : i32
    scf.if %34 {
      %c0_26 = arith.constant 0 : index
      %c0_27 = arith.constant 0 : index
      %35 = vector.load %arg8[%c0_26, %c0_27] : memref<1x256xf32, #tpu.memory_space<vmem>>, vector<1x256xf32>
      %36 = tpu.reciprocal %35 {approx = true} : vector<1x256xf32> -> vector<1x256xf32>
      %c0_28 = arith.constant 0 : index
      %c0_29 = arith.constant 0 : index
      %37 = vector.load %arg9[%c0_28, %c0_29] : memref<16x256xf32, #tpu.memory_space<vmem>>, vector<16x256xf32>
      %38 = vector.broadcast %36 : vector<1x256xf32> to vector<16x256xf32>
      %39 = arith.mulf %37, %38 : vector<16x256xf32>
      %c0_30 = arith.constant 0 : index
      %c0_31 = arith.constant 0 : index
      %c0_32 = arith.constant 0 : index
      %40 = vector.load %arg6[%c0_30, %c0_31, %c0_32] : memref<1x16x256xf32, #tpu.memory_space<vmem>>, vector<1x16x256xf32>
      %41 = vector.shape_cast %40 : vector<1x16x256xf32> to vector<16x256xf32>
      %42 = vector.shape_cast %39 : vector<16x256xf32> to vector<1x16x256xf32>
      tpu.vector_store %arg6[%c0_30, %c0_31, %c0_32], %42 {strides = array<i32>} : memref<1x16x256xf32, #tpu.memory_space<vmem>>, vector<1x16x256xf32>,
    } else {
    }
    return
  }
  func.func @transform_0(%arg0: i32, %arg1: i32, %arg2: i32) -> (i32, i32, i32) {
    %c0_i32 = arith.constant 0 : i32
    %c0_i32_0 = arith.constant 0 : i32
    return %arg0, %c0_i32, %arg1 : i32, i32, i32
  }
  func.func @transform_1(%arg0: i32, %arg1: i32, %arg2: i32) -> (i32, i32, i32) {
    %c0_i32 = arith.constant 0 : i32
    %c0_i32_0 = arith.constant 0 : i32
    return %arg0, %arg2, %c0_i32 : i32, i32, i32
  }
  func.func @transform_2(%arg0: i32, %arg1: i32, %arg2: i32) -> (i32, i32, i32) {
    %c0_i32 = arith.constant 0 : i32
    %c0_i32_0 = arith.constant 0 : i32
    return %arg0, %c0_i32, %arg2 : i32, i32, i32
  }
  func.func @transform_3(%arg0: i32, %arg1: i32, %arg2: i32) -> (i32, i32, i32) {
    %c0_i32 = arith.constant 0 : i32
    %c0_i32_0 = arith.constant 0 : i32
    return %arg0, %c0_i32, %arg1 : i32, i32, i32
  }
}

module attributes {stable_mosaic.version = 11 : i64} {
  func.func @_pam_project_kernel(%arg0: i32, %arg1: i32, %arg2: memref<1x16x256xf32, #tpu.memory_space<vmem>>, %arg3: memref<2x16xf32, #tpu.memory_space<vmem>>, %arg4: memref<2x16xf32, #tpu.memory_space<vmem>>, %arg5: memref<16x16xf32, #tpu.memory_space<vmem>>, %arg6: memref<2x1xf32, #tpu.memory_space<vmem>>, %arg7: memref<2x1xf32, #tpu.memory_space<vmem>>, %arg8: memref<16x1xf32, #tpu.memory_space<vmem>>, %arg9: memref<1x2x256xf32, #tpu.memory_space<vmem>>, %arg10: memref<1x256x2xf32, #tpu.memory_space<vmem>>, %arg11: memref<1x16x256xf32, #tpu.memory_space<vmem>>) attributes {dimension_semantics = [#tpu.dimension_semantics<parallel>, #tpu.dimension_semantics<parallel>], iteration_bounds = array<i64: 2, 1>, scalar_prefetch = 0 : i64, scratch_operands = 0 : i64, tpu.core_type = #tpu.core_type<tc>, window_params = [{transform_indices = @transform_0, window_bounds = array<i64: 1, 16, 256>}, {pipeline_mode = #tpu.pipeline_mode<synchronous>, transform_indices = @transform_1, window_bounds = array<i64: 2, 16>}, {pipeline_mode = #tpu.pipeline_mode<synchronous>, transform_indices = @transform_2, window_bounds = array<i64: 2, 16>}, {pipeline_mode = #tpu.pipeline_mode<synchronous>, transform_indices = @transform_3, window_bounds = array<i64: 16, 16>}, {pipeline_mode = #tpu.pipeline_mode<synchronous>, transform_indices = @transform_4, window_bounds = array<i64: 2, 1>}, {pipeline_mode = #tpu.pipeline_mode<synchronous>, transform_indices = @transform_5, window_bounds = array<i64: 2, 1>}, {pipeline_mode = #tpu.pipeline_mode<synchronous>, transform_indices = @transform_6, window_bounds = array<i64: 16, 1>}, {transform_indices = @transform_7, window_bounds = array<i64: 1, 2, 256>}, {transform_indices = @transform_8, window_bounds = array<i64: 1, 256, 2>}, {transform_indices = @transform_9, window_bounds = array<i64: 1, 16, 256>}]} {
    %c0 = arith.constant 0 : index
    %c0_0 = arith.constant 0 : index
    %c0_1 = arith.constant 0 : index
    %0 = vector.load %arg2[%c0, %c0_0, %c0_1] : memref<1x16x256xf32, #tpu.memory_space<vmem>>, vector<1x16x256xf32>
    %1 = vector.shape_cast %0 : vector<1x16x256xf32> to vector<16x256xf32>
    %c0_2 = arith.constant 0 : index
    %c0_3 = arith.constant 0 : index
    %2 = vector.load %arg3[%c0_2, %c0_3] : memref<2x16xf32, #tpu.memory_space<vmem>>, vector<2x16xf32>
    %cst = arith.constant dense<0.000000e+00> : vector<2x256xf32>
    %3 = tpu.matmul %2, %1, %cst {dimension_numbers = #tpu.dot_dimension_numbers<[1], [0], [0], [1], [0, 0, 1, 1], [], []>} : vector<2x16xf32>, vector<16x256xf32>, vector<2x256xf32> -> vector<2x256xf32>
    %c0_4 = arith.constant 0 : index
    %c0_5 = arith.constant 0 : index
    %4 = vector.load %arg6[%c0_4, %c0_5] : memref<2x1xf32, #tpu.memory_space<vmem>>, vector<2x1xf32>
    %5 = vector.broadcast %4 : vector<2x1xf32> to vector<2x256xf32>
    %6 = arith.addf %3, %5 : vector<2x256xf32>
    %c0_6 = arith.constant 0 : index
    %c0_7 = arith.constant 0 : index
    %7 = vector.load %arg4[%c0_6, %c0_7] : memref<2x16xf32, #tpu.memory_space<vmem>>, vector<2x16xf32>
    %cst_8 = arith.constant dense<0.000000e+00> : vector<2x256xf32>
    %8 = tpu.matmul %7, %1, %cst_8 {dimension_numbers = #tpu.dot_dimension_numbers<[1], [0], [0], [1], [0, 0, 1, 1], [], []>} : vector<2x16xf32>, vector<16x256xf32>, vector<2x256xf32> -> vector<2x256xf32>
    %c0_9 = arith.constant 0 : index
    %c0_10 = arith.constant 0 : index
    %9 = vector.load %arg7[%c0_9, %c0_10] : memref<2x1xf32, #tpu.memory_space<vmem>>, vector<2x1xf32>
    %10 = vector.broadcast %9 : vector<2x1xf32> to vector<2x256xf32>
    %11 = arith.addf %8, %10 : vector<2x256xf32>
    %c0_11 = arith.constant 0 : index
    %c0_12 = arith.constant 0 : index
    %12 = vector.load %arg5[%c0_11, %c0_12] : memref<16x16xf32, #tpu.memory_space<vmem>>, vector<16x16xf32>
    %cst_13 = arith.constant dense<0.000000e+00> : vector<16x256xf32>
    %13 = tpu.matmul %12, %1, %cst_13 {dimension_numbers = #tpu.dot_dimension_numbers<[1], [0], [0], [1], [0, 0, 1, 1], [], []>} : vector<16x16xf32>, vector<16x256xf32>, vector<16x256xf32> -> vector<16x256xf32>
    %c0_14 = arith.constant 0 : index
    %c0_15 = arith.constant 0 : index
    %14 = vector.load %arg8[%c0_14, %c0_15] : memref<16x1xf32, #tpu.memory_space<vmem>>, vector<16x1xf32>
    %15 = vector.broadcast %14 : vector<16x1xf32> to vector<16x256xf32>
    %16 = arith.addf %13, %15 : vector<16x256xf32>
    %c0_16 = arith.constant 0 : index
    %c0_17 = arith.constant 0 : index
    %c0_18 = arith.constant 0 : index
    %17 = vector.load %arg9[%c0_16, %c0_17, %c0_18] : memref<1x2x256xf32, #tpu.memory_space<vmem>>, vector<1x2x256xf32>
    %18 = vector.shape_cast %17 : vector<1x2x256xf32> to vector<2x256xf32>
    %19 = vector.shape_cast %6 : vector<2x256xf32> to vector<1x2x256xf32>
    tpu.vector_store %arg9[%c0_16, %c0_17, %c0_18], %19 {strides = array<i32>} : memref<1x2x256xf32, #tpu.memory_space<vmem>>, vector<1x2x256xf32>,
    %20 = tpu.transpose %11, [1, 0] : vector<2x256xf32> -> vector<256x2xf32>
    %c0_19 = arith.constant 0 : index
    %c0_20 = arith.constant 0 : index
    %c0_21 = arith.constant 0 : index
    %21 = vector.load %arg10[%c0_19, %c0_20, %c0_21] : memref<1x256x2xf32, #tpu.memory_space<vmem>>, vector<1x256x2xf32>
    %22 = vector.shape_cast %21 : vector<1x256x2xf32> to vector<256x2xf32>
    %23 = vector.shape_cast %20 : vector<256x2xf32> to vector<1x256x2xf32>
    tpu.vector_store %arg10[%c0_19, %c0_20, %c0_21], %23 {strides = array<i32>} : memref<1x256x2xf32, #tpu.memory_space<vmem>>, vector<1x256x2xf32>,
    %c0_22 = arith.constant 0 : index
    %c0_23 = arith.constant 0 : index
    %c0_24 = arith.constant 0 : index
    %24 = vector.load %arg11[%c0_22, %c0_23, %c0_24] : memref<1x16x256xf32, #tpu.memory_space<vmem>>, vector<1x16x256xf32>
    %25 = vector.shape_cast %24 : vector<1x16x256xf32> to vector<16x256xf32>
    %26 = vector.shape_cast %16 : vector<16x256xf32> to vector<1x16x256xf32>
    tpu.vector_store %arg11[%c0_22, %c0_23, %c0_24], %26 {strides = array<i32>} : memref<1x16x256xf32, #tpu.memory_space<vmem>>, vector<1x16x256xf32>,
    return
  }
  func.func @transform_0(%arg0: i32, %arg1: i32) -> (i32, i32, i32) {
    %c0_i32 = arith.constant 0 : i32
    %c0_i32_0 = arith.constant 0 : i32
    return %arg0, %c0_i32, %arg1 : i32, i32, i32
  }
  func.func @transform_1(%arg0: i32, %arg1: i32) -> (i32, i32) {
    %c0_i32 = arith.constant 0 : i32
    %c0_i32_0 = arith.constant 0 : i32
    %c0_i32_1 = arith.constant 0 : i32
    return %c0_i32, %c0_i32_0 : i32, i32
  }
  func.func @transform_2(%arg0: i32, %arg1: i32) -> (i32, i32) {
    %c0_i32 = arith.constant 0 : i32
    %c0_i32_0 = arith.constant 0 : i32
    %c0_i32_1 = arith.constant 0 : i32
    return %c0_i32, %c0_i32_0 : i32, i32
  }
  func.func @transform_3(%arg0: i32, %arg1: i32) -> (i32, i32) {
    %c0_i32 = arith.constant 0 : i32
    %c0_i32_0 = arith.constant 0 : i32
    %c0_i32_1 = arith.constant 0 : i32
    return %c0_i32, %c0_i32_0 : i32, i32
  }
  func.func @transform_4(%arg0: i32, %arg1: i32) -> (i32, i32) {
    %c0_i32 = arith.constant 0 : i32
    %c0_i32_0 = arith.constant 0 : i32
    %c0_i32_1 = arith.constant 0 : i32
    return %c0_i32, %c0_i32_0 : i32, i32
  }
  func.func @transform_5(%arg0: i32, %arg1: i32) -> (i32, i32) {
    %c0_i32 = arith.constant 0 : i32
    %c0_i32_0 = arith.constant 0 : i32
    %c0_i32_1 = arith.constant 0 : i32
    return %c0_i32, %c0_i32_0 : i32, i32
  }
  func.func @transform_6(%arg0: i32, %arg1: i32) -> (i32, i32) {
    %c0_i32 = arith.constant 0 : i32
    %c0_i32_0 = arith.constant 0 : i32
    %c0_i32_1 = arith.constant 0 : i32
    return %c0_i32, %c0_i32_0 : i32, i32
  }
  func.func @transform_7(%arg0: i32, %arg1: i32) -> (i32, i32, i32) {
    %c0_i32 = arith.constant 0 : i32
    %c0_i32_0 = arith.constant 0 : i32
    return %arg0, %c0_i32, %arg1 : i32, i32, i32
  }
  func.func @transform_8(%arg0: i32, %arg1: i32) -> (i32, i32, i32) {
    %c0_i32 = arith.constant 0 : i32
    %c0_i32_0 = arith.constant 0 : i32
    return %arg0, %arg1, %c0_i32 : i32, i32, i32
  }
  func.func @transform_9(%arg0: i32, %arg1: i32) -> (i32, i32, i32) {
    %c0_i32 = arith.constant 0 : i32
    %c0_i32_0 = arith.constant 0 : i32
    return %arg0, %c0_i32, %arg1 : i32, i32, i32
  }
}

</mosaic_0001>

<llo_original>
// kernel: squeeze.1
$region0: #{squeeze.1}
  %s0 = inlined_call_operand.vmem [shape: f32[2,16,16,16], index: 0, kind: input, shape index: {}]
  %s1 = inlined_call_operand.vmem [shape: f32[2,16,256], index: 1, kind: output, shape index: {}]
  %v2 = vld [vmem:[%s0] ss:$8 sm:$0xf]
  %v3 = vld [vmem:[%s0] ss:$8 sm:$0xf0]
  %vm4 = vcmask 1047556
  %v5 = vsel %vm4, %v3, %v2
  %vm6 = vcmask 130048
  %7 = vst.msk [vmem:[%s1] ss:$8 sm:$0x3] %vm6, %v5
  %s8 = scalar_lea.vmem %s1, 4294967281
  %9 = vst.msk [vmem:[%s8] ss:$8 sm:$0xc] %vm6, %v5
  %s10 = scalar_lea.vmem %s1, 4294967266
  %11 = vst.msk [vmem:[%s10] ss:$8 sm:$0x30] %vm6, %v5
  %s12 = scalar_lea.vmem %s1, 4294967251
  %13 = vst.msk [vmem:[%s12] ss:$8 sm:$0xc0] %vm6, %v5
  %s14 = scalar_lea.vmem %s0, 64
  %v15 = vld [vmem:[%s14] ss:$8 sm:$0xf]
  %s16 = scalar_lea.vmem %s0, 64
  %v17 = vld [vmem:[%s16] ss:$8 sm:$0xf0]
  %vm18 = vcmask 1047556
  %v19 = vsel %vm18, %v17, %v15
  %vm20 = vcmask 130048
  %s21 = scalar_lea.vmem %s1, 4
  %22 = vst.msk [vmem:[%s21] ss:$8 sm:$0x3] %vm20, %v19
  %s23 = scalar_lea.vmem %s1, 4294967285
  %24 = vst.msk [vmem:[%s23] ss:$8 sm:$0xc] %vm20, %v19
  %s25 = scalar_lea.vmem %s1, 4294967270
  %26 = vst.msk [vmem:[%s25] ss:$8 sm:$0x30] %vm20, %v19
  %s27 = scalar_lea.vmem %s1, 4294967255
  %28 = vst.msk [vmem:[%s27] ss:$8 sm:$0xc0] %vm20, %v19
  %s29 = scalar_lea.vmem %s0, 128
  %v30 = vld [vmem:[%s29] ss:$8 sm:$0xf]
  %s31 = scalar_lea.vmem %s0, 128
  %v32 = vld [vmem:[%s31] ss:$8 sm:$0xf0]
  %vm33 = vcmask 1047556
  %v34 = vsel %vm33, %v32, %v30
  %vm35 = vcmask 130048
  %s36 = scalar_lea.vmem %s1, 16
  %37 = vst.msk [vmem:[%s36] ss:$8 sm:$0x3] %vm35, %v34
  %s38 = scalar_lea.vmem %s1, 1
  %39 = vst.msk [vmem:[%s38] ss:$8 sm:$0xc] %vm35, %v34
  %s40 = scalar_lea.vmem %s1, 4294967282
  %41 = vst.msk [vmem:[%s40] ss:$8 sm:$0x30] %vm35, %v34
  %s42 = scalar_lea.vmem %s1, 4294967267
  %43 = vst.msk [vmem:[%s42] ss:$8 sm:$0xc0] %vm35, %v34
  %s44 = scalar_lea.vmem %s0, 192
  %v45 = vld [vmem:[%s44] ss:$8 sm:$0xf]
  %s46 = scalar_lea.vmem %s0, 192
  %v47 = vld [vmem:[%s46] ss:$8 sm:$0xf0]
  %vm48 = vcmask 1047556
  %v49 = vsel %vm48, %v47, %v45
  %vm50 = vcmask 130048
  %s51 = scalar_lea.vmem %s1, 20
  %52 = vst.msk [vmem:[%s51] ss:$8 sm:$0x3] %vm50, %v49
  %s53 = scalar_lea.vmem %s1, 5
  %54 = vst.msk [vmem:[%s53] ss:$8 sm:$0xc] %vm50, %v49
  %s55 = scalar_lea.vmem %s1, 4294967286
  %56 = vst.msk [vmem:[%s55] ss:$8 sm:$0x30] %vm50, %v49
  %s57 = scalar_lea.vmem %s1, 4294967271
  %58 = vst.msk [vmem:[%s57] ss:$8 sm:$0xc0] %vm50, %v49
  %s59 = scalar_lea.vmem %s0, 256
  %v60 = vld [vmem:[%s59] ss:$8 sm:$0xf]
  %s61 = scalar_lea.vmem %s0, 256
  %v62 = vld [vmem:[%s61] ss:$8 sm:$0xf0]
  %vm63 = vcmask 1047556
  %v64 = vsel %vm63, %v62, %v60
  %vm65 = vcmask 130048
  %s66 = scalar_lea.vmem %s1, 32
  %67 = vst.msk [vmem:[%s66] ss:$8 sm:$0x3] %vm65, %v64
  %s68 = scalar_lea.vmem %s1, 17
  %69 = vst.msk [vmem:[%s68] ss:$8 sm:$0xc] %vm65, %v64
  %s70 = scalar_lea.vmem %s1, 2
  %71 = vst.msk [vmem:[%s70] ss:$8 sm:$0x30] %vm65, %v64
  %s72 = scalar_lea.vmem %s1, 4294967283
  %73 = vst.msk [vmem:[%s72] ss:$8 sm:$0xc0] %vm65, %v64
  %s74 = scalar_lea.vmem %s0, 320
  %v75 = vld [vmem:[%s74] ss:$8 sm:$0xf]
  %s76 = scalar_lea.vmem %s0, 320
  %v77 = vld [vmem:[%s76] ss:$8 sm:$0xf0]
  %vm78 = vcmask 1047556
  %v79 = vsel %vm78, %v77, %v75
  %vm80 = vcmask 130048
  %s81 = scalar_lea.vmem %s1, 36
  %82 = vst.msk [vmem:[%s81] ss:$8 sm:$0x3] %vm80, %v79
  %s83 = scalar_lea.vmem %s1, 21
  %84 = vst.msk [vmem:[%s83] ss:$8 sm:$0xc] %vm80, %v79
  %s85 = scalar_lea.vmem %s1, 6
  %86 = vst.msk [vmem:[%s85] ss:$8 sm:$0x30] %vm80, %v79
  %s87 = scalar_lea.vmem %s1, 4294967287
  %88 = vst.msk [vmem:[%s87] ss:$8 sm:$0xc0] %vm80, %v79
  %s89 = scalar_lea.vmem %s0, 384
  %v90 = vld [vmem:[%s89] ss:$8 sm:$0xf]
  %s91 = scalar_lea.vmem %s0, 384
  %v92 = vld [vmem:[%s91] ss:$8 sm:$0xf0]
  %vm93 = vcmask 1047556
  %v94 = vsel %vm93, %v92, %v90
  %vm95 = vcmask 130048
  %s96 = scalar_lea.vmem %s1, 48
  %97 = vst.msk [vmem:[%s96] ss:$8 sm:$0x3] %vm95, %v94
  %s98 = scalar_lea.vmem %s1, 33
  %99 = vst.msk [vmem:[%s98] ss:$8 sm:$0xc] %vm95, %v94
  %s100 = scalar_lea.vmem %s1, 18
  %101 = vst.msk [vmem:[%s100] ss:$8 sm:$0x30] %vm95, %v94
  %s102 = scalar_lea.vmem %s1, 3
  %103 = vst.msk [vmem:[%s102] ss:$8 sm:$0xc0] %vm95, %v94
  %s104 = scalar_lea.vmem %s0, 448
  %v105 = vld [vmem:[%s104] ss:$8 sm:$0xf]
  %s106 = scalar_lea.vmem %s0, 448
  %v107 = vld [vmem:[%s106] ss:$8 sm:$0xf0]
  %vm108 = vcmask 1047556
  %v109 = vsel %vm108, %v107, %v105
  %vm110 = vcmask 130048
  %s111 = scalar_lea.vmem %s1, 52
  %112 = vst.msk [vmem:[%s111] ss:$8 sm:$0x3] %vm110, %v109
  %s113 = scalar_lea.vmem %s1, 37
  %114 = vst.msk [vmem:[%s113] ss:$8 sm:$0xc] %vm110, %v109
  %s115 = scalar_lea.vmem %s1, 22
  %116 = vst.msk [vmem:[%s115] ss:$8 sm:$0x30] %vm110, %v109
  %s117 = scalar_lea.vmem %s1, 7
  %118 = vst.msk [vmem:[%s117] ss:$8 sm:$0xc0] %vm110, %v109
  %s119 = scalar_lea.vmem %s0, 7
  %s120 = smov 3
  %v121 = vld [vmem:[%s119] ss:$16 sm:%s120]
  %s122 = scalar_lea.vmem %s0, 7
  %s123 = smov 12
  %v124 = vld [vmem:[%s122] ss:$16 sm:%s123]
  %vm125 = vcmask 1043458
  %v126 = vsel %vm125, %v124, %v121
  %s127 = scalar_lea.vmem %s0, 7
  %s128 = smov 48
  %v129 = vld [vmem:[%s127] ss:$16 sm:%s128]
  %vm130 = vcmask 1045508
  %v131 = vsel %vm130, %v129, %v126
  %s132 = scalar_lea.vmem %s0, 7
  %s133 = smov 192
  %v134 = vld [vmem:[%s132] ss:$16 sm:%s133]
  %vm135 = vcmask 1047558
  %v136 = vsel %vm135, %v134, %v131
  %137 = vrot.lane.b32.xlu0 %v136, 112
  %v138 = vpop.permute.xlu0 %137
  %vm139 = vcmask 1048448
  %140 = vst.msk [vmem:[%s1] sm:$0xff] %vm139, %v138
  %s141 = scalar_lea.vmem %s0, 263
  %s142 = smov 3
  %v143 = vld [vmem:[%s141] ss:$16 sm:%s142]
  %s144 = scalar_lea.vmem %s0, 263
  %s145 = smov 12
  %v146 = vld [vmem:[%s144] ss:$16 sm:%s145]
  %vm147 = vcmask 1043458
  %v148 = vsel %vm147, %v146, %v143
  %s149 = scalar_lea.vmem %s0, 263
  %s150 = smov 48
  %v151 = vld [vmem:[%s149] ss:$16 sm:%s150]
  %vm152 = vcmask 1045508
  %v153 = vsel %vm152, %v151, %v148
  %s154 = scalar_lea.vmem %s0, 263
  %s155 = smov 192
  %v156 = vld [vmem:[%s154] ss:$16 sm:%s155]
  %vm157 = vcmask 1047558
  %v158 = vsel %vm157, %v156, %v153
  %159 = vrot.lane.b32.xlu0 %v158, 112
  %v160 = vpop.permute.xlu0 %159
  %vm161 = vcmask 1048448
  %s162 = scalar_lea.vmem %s1, 32
  %163 = vst.msk [vmem:[%s162] sm:$0xff] %vm161, %v160
  %s164 = scalar_lea.vmem %s0, 15
  %s165 = smov 3
  %v166 = vld [vmem:[%s164] ss:$16 sm:%s165]
  %s167 = scalar_lea.vmem %s0, 15
  %s168 = smov 12
  %v169 = vld [vmem:[%s167] ss:$16 sm:%s168]
  %vm170 = vcmask 1043458
  %v171 = vsel %vm170, %v169, %v166
  %s172 = scalar_lea.vmem %s0, 15
  %s173 = smov 48
  %v174 = vld [vmem:[%s172] ss:$16 sm:%s173]
  %vm175 = vcmask 1045508
  %v176 = vsel %vm175, %v174, %v171
  %s177 = scalar_lea.vmem %s0, 15
  %s178 = smov 192
  %v179 = vld [vmem:[%s177] ss:$16 sm:%s178]
  %vm180 = vcmask 1047558
  %v181 = vsel %vm180, %v179, %v176
  %182 = vrot.lane.b32.xlu0 %v181, 112
  %v183 = vpop.permute.xlu0 %182
  %vm184 = vcmask 1048448
  %s185 = scalar_lea.vmem %s1, 8
  %186 = vst.msk [vmem:[%s185] sm:$0xff] %vm184, %v183
  %s187 = scalar_lea.vmem %s0, 271
  %s188 = smov 3
  %v189 = vld [vmem:[%s187] ss:$16 sm:%s188]
  %s190 = scalar_lea.vmem %s0, 271
  %s191 = smov 12
  %v192 = vld [vmem:[%s190] ss:$16 sm:%s191]
  %vm193 = vcmask 1043458
  %v194 = vsel %vm193, %v192, %v189
  %s195 = scalar_lea.vmem %s0, 271
  %s196 = smov 48
  %v197 = vld [vmem:[%s195] ss:$16 sm:%s196]
  %vm198 = vcmask 1045508
  %v199 = vsel %vm198, %v197, %v194
  %s200 = scalar_lea.vmem %s0, 271
  %s201 = smov 192
  %v202 = vld [vmem:[%s200] ss:$16 sm:%s201]
  %vm203 = vcmask 1047558
  %v204 = vsel %vm203, %v202, %v199
  %205 = vrot.lane.b32.xlu0 %v204, 112
  %v206 = vpop.permute.xlu0 %205
  %vm207 = vcmask 1048448
  %s208 = scalar_lea.vmem %s1, 40
  %209 = vst.msk [vmem:[%s208] sm:$0xff] %vm207, %v206
  %s210 = scalar_lea.vmem %s0, 135
  %s211 = smov 3
  %v212 = vld [vmem:[%s210] ss:$16 sm:%s211]
  %s213 = scalar_lea.vmem %s0, 135
  %s214 = smov 12
  %v215 = vld [vmem:[%s213] ss:$16 sm:%s214]
  %vm216 = vcmask 1043458
  %v217 = vsel %vm216, %v215, %v212
  %s218 = scalar_lea.vmem %s0, 135
  %s219 = smov 48
  %v220 = vld [vmem:[%s218] ss:$16 sm:%s219]
  %vm221 = vcmask 1045508
  %v222 = vsel %vm221, %v220, %v217
  %s223 = scalar_lea.vmem %s0, 135
  %s224 = smov 192
  %v225 = vld [vmem:[%s223] ss:$16 sm:%s224]
  %vm226 = vcmask 1047558
  %v227 = vsel %vm226, %v225, %v222
  %228 = vrot.lane.b32.xlu0 %v227, 112
  %v229 = vpop.permute.xlu0 %228
  %vm230 = vcmask 1048448
  %s231 = scalar_lea.vmem %s1, 16
  %232 = vst.msk [vmem:[%s231] sm:$0xff] %vm230, %v229
  %s233 = scalar_lea.vmem %s0, 391
  %s234 = smov 3
  %v235 = vld [vmem:[%s233] ss:$16 sm:%s234]
  %s236 = scalar_lea.vmem %s0, 391
  %s237 = smov 12
  %v238 = vld [vmem:[%s236] ss:$16 sm:%s237]
  %vm239 = vcmask 1043458
  %v240 = vsel %vm239, %v238, %v235
  %s241 = scalar_lea.vmem %s0, 391
  %s242 = smov 48
  %v243 = vld [vmem:[%s241] ss:$16 sm:%s242]
  %vm244 = vcmask 1045508
  %v245 = vsel %vm244, %v243, %v240
  %s246 = scalar_lea.vmem %s0, 391
  %s247 = smov 192
  %v248 = vld [vmem:[%s246] ss:$16 sm:%s247]
  %vm249 = vcmask 1047558
  %v250 = vsel %vm249, %v248, %v245
  %251 = vrot.lane.b32.xlu0 %v250, 112
  %v252 = vpop.permute.xlu0 %251
  %vm253 = vcmask 1048448
  %s254 = scalar_lea.vmem %s1, 48
  %255 = vst.msk [vmem:[%s254] sm:$0xff] %vm253, %v252
  %s256 = scalar_lea.vmem %s0, 143
  %s257 = smov 3
  %v258 = vld [vmem:[%s256] ss:$16 sm:%s257]
  %s259 = scalar_lea.vmem %s0, 143
  %s260 = smov 12
  %v261 = vld [vmem:[%s259] ss:$16 sm:%s260]
  %vm262 = vcmask 1043458
  %v263 = vsel %vm262, %v261, %v258
  %s264 = scalar_lea.vmem %s0, 143
  %s265 = smov 48
  %v266 = vld [vmem:[%s264] ss:$16 sm:%s265]
  %vm267 = vcmask 1045508
  %v268 = vsel %vm267, %v266, %v263
  %s269 = scalar_lea.vmem %s0, 143
  %s270 = smov 192
  %v271 = vld [vmem:[%s269] ss:$16 sm:%s270]
  %vm272 = vcmask 1047558
  %v273 = vsel %vm272, %v271, %v268
  %274 = vrot.lane.b32.xlu0 %v273, 112
  %v275 = vpop.permute.xlu0 %274
  %vm276 = vcmask 1048448
  %s277 = scalar_lea.vmem %s1, 24
  %278 = vst.msk [vmem:[%s277] sm:$0xff] %vm276, %v275
  %s279 = scalar_lea.vmem %s0, 399
  %s280 = smov 3
  %v281 = vld [vmem:[%s279] ss:$16 sm:%s280]
  %s282 = scalar_lea.vmem %s0, 399
  %s283 = smov 12
  %v284 = vld [vmem:[%s282] ss:$16 sm:%s283]
  %vm285 = vcmask 1043458
  %v286 = vsel %vm285, %v284, %v281
  %s287 = scalar_lea.vmem %s0, 399
  %s288 = smov 48
  %v289 = vld [vmem:[%s287] ss:$16 sm:%s288]
  %vm290 = vcmask 1045508
  %v291 = vsel %vm290, %v289, %v286
  %s292 = scalar_lea.vmem %s0, 399
  %s293 = smov 192
  %v294 = vld [vmem:[%s292] ss:$16 sm:%s293]
  %vm295 = vcmask 1047558
  %v296 = vsel %vm295, %v294, %v291
  %297 = vrot.lane.b32.xlu0 %v296, 112
  %v298 = vpop.permute.xlu0 %297
  %vm299 = vcmask 1048448
  %s300 = scalar_lea.vmem %s1, 56
  %301 = vst.msk [vmem:[%s300] sm:$0xff] %vm299, %v298
  %s302 = scalar_lea.vmem %s0, 6
  %s303 = smov 3
  %v304 = vld [vmem:[%s302] ss:$16 sm:%s303]
  %s305 = scalar_lea.vmem %s0, 6
  %s306 = smov 12
  %v307 = vld [vmem:[%s305] ss:$16 sm:%s306]
  %vm308 = vcmask 1043458
  %v309 = vsel %vm308, %v307, %v304
  %s310 = scalar_lea.vmem %s0, 6
  %s311 = smov 48
  %v312 = vld [vmem:[%s310] ss:$16 sm:%s311]
  %vm313 = vcmask 1045508
  %v314 = vsel %vm313, %v312, %v309
  %s315 = scalar_lea.vmem %s0, 6
  %s316 = smov 192
  %v317 = vld [vmem:[%s315] ss:$16 sm:%s316]
  %vm318 = vcmask 1047558
  %v319 = vsel %vm318, %v317, %v314
  %320 = vrot.lane.b32.xlu0 %v319, 96
  %v321 = vpop.permute.xlu0 %320
  %vm322 = vcmask 917248
  %323 = vst.msk [vmem:[%s1] sm:$0xff] %vm322, %v321
  %s324 = scalar_lea.vmem %s0, 262
  %s325 = smov 3
  %v326 = vld [vmem:[%s324] ss:$16 sm:%s325]
  %s327 = scalar_lea.vmem %s0, 262
  %s328 = smov 12
  %v329 = vld [vmem:[%s327] ss:$16 sm:%s328]
  %vm330 = vcmask 1043458
  %v331 = vsel %vm330, %v329, %v326
  %s332 = scalar_lea.vmem %s0, 262
  %s333 = smov 48
  %v334 = vld [vmem:[%s332] ss:$16 sm:%s333]
  %vm335 = vcmask 1045508
  %v336 = vsel %vm335, %v334, %v331
  %s337 = scalar_lea.vmem %s0, 262
  %s338 = smov 192
  %v339 = vld [vmem:[%s337] ss:$16 sm:%s338]
  %vm340 = vcmask 1047558
  %v341 = vsel %vm340, %v339, %v336
  %342 = vrot.lane.b32.xlu0 %v341, 96
  %v343 = vpop.permute.xlu0 %342
  %vm344 = vcmask 917248
  %s345 = scalar_lea.vmem %s1, 32
  %346 = vst.msk [vmem:[%s345] sm:$0xff] %vm344, %v343
  %s347 = scalar_lea.vmem %s0, 14
  %s348 = smov 3
  %v349 = vld [vmem:[%s347] ss:$16 sm:%s348]
  %s350 = scalar_lea.vmem %s0, 14
  %s351 = smov 12
  %v352 = vld [vmem:[%s350] ss:$16 sm:%s351]
  %vm353 = vcmask 1043458
  %v354 = vsel %vm353, %v352, %v349
  %s355 = scalar_lea.vmem %s0, 14
  %s356 = smov 48
  %v357 = vld [vmem:[%s355] ss:$16 sm:%s356]
  %vm358 = vcmask 1045508
  %v359 = vsel %vm358, %v357, %v354
  %s360 = scalar_lea.vmem %s0, 14
  %s361 = smov 192
  %v362 = vld [vmem:[%s360] ss:$16 sm:%s361]
  %vm363 = vcmask 1047558
  %v364 = vsel %vm363, %v362, %v359
  %365 = vrot.lane.b32.xlu0 %v364, 96
  %v366 = vpop.permute.xlu0 %365
  %vm367 = vcmask 917248
  %s368 = scalar_lea.vmem %s1, 8
  %369 = vst.msk [vmem:[%s368] sm:$0xff] %vm367, %v366
  %s370 = scalar_lea.vmem %s0, 270
  %s371 = smov 3
  %v372 = vld [vmem:[%s370] ss:$16 sm:%s371]
  %s373 = scalar_lea.vmem %s0, 270
  %s374 = smov 12
  %v375 = vld [vmem:[%s373] ss:$16 sm:%s374]
  %vm376 = vcmask 1043458
  %v377 = vsel %vm376, %v375, %v372
  %s378 = scalar_lea.vmem %s0, 270
  %s379 = smov 48
  %v380 = vld [vmem:[%s378] ss:$16 sm:%s379]
  %vm381 = vcmask 1045508
  %v382 = vsel %vm381, %v380, %v377
  %s383 = scalar_lea.vmem %s0, 270
  %s384 = smov 192
  %v385 = vld [vmem:[%s383] ss:$16 sm:%s384]
  %vm386 = vcmask 1047558
  %v387 = vsel %vm386, %v385, %v382
  %388 = vrot.lane.b32.xlu0 %v387, 96
  %v389 = vpop.permute.xlu0 %388
  %vm390 = vcmask 917248
  %s391 = scalar_lea.vmem %s1, 40
  %392 = vst.msk [vmem:[%s391] sm:$0xff] %vm390, %v389
  %s393 = scalar_lea.vmem %s0, 134
  %s394 = smov 3
  %v395 = vld [vmem:[%s393] ss:$16 sm:%s394]
  %s396 = scalar_lea.vmem %s0, 134
  %s397 = smov 12
  %v398 = vld [vmem:[%s396] ss:$16 sm:%s397]
  %vm399 = vcmask 1043458
  %v400 = vsel %vm399, %v398, %v395
  %s401 = scalar_lea.vmem %s0, 134
  %s402 = smov 48
  %v403 = vld [vmem:[%s401] ss:$16 sm:%s402]
  %vm404 = vcmask 1045508
  %v405 = vsel %vm404, %v403, %v400
  %s406 = scalar_lea.vmem %s0, 134
  %s407 = smov 192
  %v408 = vld [vmem:[%s406] ss:$16 sm:%s407]
  %vm409 = vcmask 1047558
  %v410 = vsel %vm409, %v408, %v405
  %411 = vrot.lane.b32.xlu0 %v410, 96
  %v412 = vpop.permute.xlu0 %411
  %vm413 = vcmask 917248
  %s414 = scalar_lea.vmem %s1, 16
  %415 = vst.msk [vmem:[%s414] sm:$0xff] %vm413, %v412
  %s416 = scalar_lea.vmem %s0, 390
  %s417 = smov 3
  %v418 = vld [vmem:[%s416] ss:$16 sm:%s417]
  %s419 = scalar_lea.vmem %s0, 390
  %s420 = smov 12
  %v421 = vld [vmem:[%s419] ss:$16 sm:%s420]
  %vm422 = vcmask 1043458
  %v423 = vsel %vm422, %v421, %v418
  %s424 = scalar_lea.vmem %s0, 390
  %s425 = smov 48
  %v426 = vld [vmem:[%s424] ss:$16 sm:%s425]
  %vm427 = vcmask 1045508
  %v428 = vsel %vm427, %v426, %v423
  %s429 = scalar_lea.vmem %s0, 390
  %s430 = smov 192
  %v431 = vld [vmem:[%s429] ss:$16 sm:%s430]
  %vm432 = vcmask 1047558
  %v433 = vsel %vm432, %v431, %v428
  %434 = vrot.lane.b32.xlu0 %v433, 96
  %v435 = vpop.permute.xlu0 %434
  %vm436 = vcmask 917248
  %s437 = scalar_lea.vmem %s1, 48
  %438 = vst.msk [vmem:[%s437] sm:$0xff] %vm436, %v435
  %s439 = scalar_lea.vmem %s0, 142
  %s440 = smov 3
  %v441 = vld [vmem:[%s439] ss:$16 sm:%s440]
  %s442 = scalar_lea.vmem %s0, 142
  %s443 = smov 12
  %v444 = vld [vmem:[%s442] ss:$16 sm:%s443]
  %vm445 = vcmask 1043458
  %v446 = vsel %vm445, %v444, %v441
  %s447 = scalar_lea.vmem %s0, 142
  %s448 = smov 48
  %v449 = vld [vmem:[%s447] ss:$16 sm:%s448]
  %vm450 = vcmask 1045508
  %v451 = vsel %vm450, %v449, %v446
  %s452 = scalar_lea.vmem %s0, 142
  %s453 = smov 192
  %v454 = vld [vmem:[%s452] ss:$16 sm:%s453]
  %vm455 = vcmask 1047558
  %v456 = vsel %vm455, %v454, %v451
  %457 = vrot.lane.b32.xlu0 %v456, 96
  %v458 = vpop.permute.xlu0 %457
  %vm459 = vcmask 917248
  %s460 = scalar_lea.vmem %s1, 24
  %461 = vst.msk [vmem:[%s460] sm:$0xff] %vm459, %v458
  %s462 = scalar_lea.vmem %s0, 398
  %s463 = smov 3
  %v464 = vld [vmem:[%s462] ss:$16 sm:%s463]
  %s465 = scalar_lea.vmem %s0, 398
  %s466 = smov 12
  %v467 = vld [vmem:[%s465] ss:$16 sm:%s466]
  %vm468 = vcmask 1043458
  %v469 = vsel %vm468, %v467, %v464
  %s470 = scalar_lea.vmem %s0, 398
  %s471 = smov 48
  %v472 = vld [vmem:[%s470] ss:$16 sm:%s471]
  %vm473 = vcmask 1045508
  %v474 = vsel %vm473, %v472, %v469
  %s475 = scalar_lea.vmem %s0, 398
  %s476 = smov 192
  %v477 = vld [vmem:[%s475] ss:$16 sm:%s476]
  %vm478 = vcmask 1047558
  %v479 = vsel %vm478, %v477, %v474
  %480 = vrot.lane.b32.xlu0 %v479, 96
  %v481 = vpop.permute.xlu0 %480
  %vm482 = vcmask 917248
  %s483 = scalar_lea.vmem %s1, 56
  %484 = vst.msk [vmem:[%s483] sm:$0xff] %vm482, %v481
  %s485 = scalar_lea.vmem %s0, 5
  %s486 = smov 3
  %v487 = vld [vmem:[%s485] ss:$16 sm:%s486]
  %s488 = scalar_lea.vmem %s0, 5
  %s489 = smov 12
  %v490 = vld [vmem:[%s488] ss:$16 sm:%s489]
  %vm491 = vcmask 1043458
  %v492 = vsel %vm491, %v490, %v487
  %s493 = scalar_lea.vmem %s0, 5
  %s494 = smov 48
  %v495 = vld [vmem:[%s493] ss:$16 sm:%s494]
  %vm496 = vcmask 1045508
  %v497 = vsel %vm496, %v495, %v492
  %s498 = scalar_lea.vmem %s0, 5
  %s499 = smov 192
  %v500 = vld [vmem:[%s498] ss:$16 sm:%s499]
  %vm501 = vcmask 1047558
  %v502 = vsel %vm501, %v500, %v497
  %503 = vrot.lane.b32.xlu0 %v502, 80
  %v504 = vpop.permute.xlu0 %503
  %vm505 = vcmask 786048
  %506 = vst.msk [vmem:[%s1] sm:$0xff] %vm505, %v504
  %s507 = scalar_lea.vmem %s0, 261
  %s508 = smov 3
  %v509 = vld [vmem:[%s507] ss:$16 sm:%s508]
  %s510 = scalar_lea.vmem %s0, 261
  %s511 = smov 12
  %v512 = vld [vmem:[%s510] ss:$16 sm:%s511]
  %vm513 = vcmask 1043458
  %v514 = vsel %vm513, %v512, %v509
  %s515 = scalar_lea.vmem %s0, 261
  %s516 = smov 48
  %v517 = vld [vmem:[%s515] ss:$16 sm:%s516]
  %vm518 = vcmask 1045508
  %v519 = vsel %vm518, %v517, %v514
  %s520 = scalar_lea.vmem %s0, 261
  %s521 = smov 192
  %v522 = vld [vmem:[%s520] ss:$16 sm:%s521]
  %vm523 = vcmask 1047558
  %v524 = vsel %vm523, %v522, %v519
  %525 = vrot.lane.b32.xlu0 %v524, 80
  %v526 = vpop.permute.xlu0 %525
  %vm527 = vcmask 786048
  %s528 = scalar_lea.vmem %s1, 32
  %529 = vst.msk [vmem:[%s528] sm:$0xff] %vm527, %v526
  %s530 = scalar_lea.vmem %s0, 13
  %s531 = smov 3
  %v532 = vld [vmem:[%s530] ss:$16 sm:%s531]
  %s533 = scalar_lea.vmem %s0, 13
  %s534 = smov 12
  %v535 = vld [vmem:[%s533] ss:$16 sm:%s534]
  %vm536 = vcmask 1043458
  %v537 = vsel %vm536, %v535, %v532
  %s538 = scalar_lea.vmem %s0, 13
  %s539 = smov 48
  %v540 = vld [vmem:[%s538] ss:$16 sm:%s539]
  %vm541 = vcmask 1045508
  %v542 = vsel %vm541, %v540, %v537
  %s543 = scalar_lea.vmem %s0, 13
  %s544 = smov 192
  %v545 = vld [vmem:[%s543] ss:$16 sm:%s544]
  %vm546 = vcmask 1047558
  %v547 = vsel %vm546, %v545, %v542
  %548 = vrot.lane.b32.xlu0 %v547, 80
  %v549 = vpop.permute.xlu0 %548
  %vm550 = vcmask 786048
  %s551 = scalar_lea.vmem %s1, 8
  %552 = vst.msk [vmem:[%s551] sm:$0xff] %vm550, %v549
  %s553 = scalar_lea.vmem %s0, 269
  %s554 = smov 3
  %v555 = vld [vmem:[%s553] ss:$16 sm:%s554]
  %s556 = scalar_lea.vmem %s0, 269
  %s557 = smov 12
  %v558 = vld [vmem:[%s556] ss:$16 sm:%s557]
  %vm559 = vcmask 1043458
  %v560 = vsel %vm559, %v558, %v555
  %s561 = scalar_lea.vmem %s0, 269
  %s562 = smov 48
  %v563 = vld [vmem:[%s561] ss:$16 sm:%s562]
  %vm564 = vcmask 1045508
  %v565 = vsel %vm564, %v563, %v560
  %s566 = scalar_lea.vmem %s0, 269
  %s567 = smov 192
  %v568 = vld [vmem:[%s566] ss:$16 sm:%s567]
  %vm569 = vcmask 1047558
  %v570 = vsel %vm569, %v568, %v565
  %571 = vrot.lane.b32.xlu0 %v570, 80
  %v572 = vpop.permute.xlu0 %571
  %vm573 = vcmask 786048
  %s574 = scalar_lea.vmem %s1, 40
  %575 = vst.msk [vmem:[%s574] sm:$0xff] %vm573, %v572
  %s576 = scalar_lea.vmem %s0, 133
  %s577 = smov 3
  %v578 = vld [vmem:[%s576] ss:$16 sm:%s577]
  %s579 = scalar_lea.vmem %s0, 133
  %s580 = smov 12
  %v581 = vld [vmem:[%s579] ss:$16 sm:%s580]
  %vm582 = vcmask 1043458
  %v583 = vsel %vm582, %v581, %v578
  %s584 = scalar_lea.vmem %s0, 133
  %s585 = smov 48
  %v586 = vld [vmem:[%s584] ss:$16 sm:%s585]
  %vm587 = vcmask 1045508
  %v588 = vsel %vm587, %v586, %v583
  %s589 = scalar_lea.vmem %s0, 133
  %s590 = smov 192
  %v591 = vld [vmem:[%s589] ss:$16 sm:%s590]
  %vm592 = vcmask 1047558
  %v593 = vsel %vm592, %v591, %v588
  %594 = vrot.lane.b32.xlu0 %v593, 80
  %v595 = vpop.permute.xlu0 %594
  %vm596 = vcmask 786048
  %s597 = scalar_lea.vmem %s1, 16
  %598 = vst.msk [vmem:[%s597] sm:$0xff] %vm596, %v595
  %s599 = scalar_lea.vmem %s0, 389
  %s600 = smov 3
  %v601 = vld [vmem:[%s599] ss:$16 sm:%s600]
  %s602 = scalar_lea.vmem %s0, 389
  %s603 = smov 12
  %v604 = vld [vmem:[%s602] ss:$16 sm:%s603]
  %vm605 = vcmask 1043458
  %v606 = vsel %vm605, %v604, %v601
  %s607 = scalar_lea.vmem %s0, 389
  %s608 = smov 48
  %v609 = vld [vmem:[%s607] ss:$16 sm:%s608]
  %vm610 = vcmask 1045508
  %v611 = vsel %vm610, %v609, %v606
  %s612 = scalar_lea.vmem %s0, 389
  %s613 = smov 192
  %v614 = vld [vmem:[%s612] ss:$16 sm:%s613]
  %vm615 = vcmask 1047558
  %v616 = vsel %vm615, %v614, %v611
  %617 = vrot.lane.b32.xlu0 %v616, 80
  %v618 = vpop.permute.xlu0 %617
  %vm619 = vcmask 786048
  %s620 = scalar_lea.vmem %s1, 48
  %621 = vst.msk [vmem:[%s620] sm:$0xff] %vm619, %v618
  %s622 = scalar_lea.vmem %s0, 141
  %s623 = smov 3
  %v624 = vld [vmem:[%s622] ss:$16 sm:%s623]
  %s625 = scalar_lea.vmem %s0, 141
  %s626 = smov 12
  %v627 = vld [vmem:[%s625] ss:$16 sm:%s626]
  %vm628 = vcmask 1043458
  %v629 = vsel %vm628, %v627, %v624
  %s630 = scalar_lea.vmem %s0, 141
  %s631 = smov 48
  %v632 = vld [vmem:[%s630] ss:$16 sm:%s631]
  %vm633 = vcmask 1045508
  %v634 = vsel %vm633, %v632, %v629
  %s635 = scalar_lea.vmem %s0, 141
  %s636 = smov 192
  %v637 = vld [vmem:[%s635] ss:$16 sm:%s636]
  %vm638 = vcmask 1047558
  %v639 = vsel %vm638, %v637, %v634
  %640 = vrot.lane.b32.xlu0 %v639, 80
  %v641 = vpop.permute.xlu0 %640
  %vm642 = vcmask 786048
  %s643 = scalar_lea.vmem %s1, 24
  %644 = vst.msk [vmem:[%s643] sm:$0xff] %vm642, %v641
  %s645 = scalar_lea.vmem %s0, 397
  %s646 = smov 3
  %v647 = vld [vmem:[%s645] ss:$16 sm:%s646]
  %s648 = scalar_lea.vmem %s0, 397
  %s649 = smov 12
  %v650 = vld [vmem:[%s648] ss:$16 sm:%s649]
  %vm651 = vcmask 1043458
  %v652 = vsel %vm651, %v650, %v647
  %s653 = scalar_lea.vmem %s0, 397
  %s654 = smov 48
  %v655 = vld [vmem:[%s653] ss:$16 sm:%s654]
  %vm656 = vcmask 1045508
  %v657 = vsel %vm656, %v655, %v652
  %s658 = scalar_lea.vmem %s0, 397
  %s659 = smov 192
  %v660 = vld [vmem:[%s658] ss:$16 sm:%s659]
  %vm661 = vcmask 1047558
  %v662 = vsel %vm661, %v660, %v657
  %663 = vrot.lane.b32.xlu0 %v662, 80
  %v664 = vpop.permute.xlu0 %663
  %vm665 = vcmask 786048
  %s666 = scalar_lea.vmem %s1, 56
  %667 = vst.msk [vmem:[%s666] sm:$0xff] %vm665, %v664
  %s668 = scalar_lea.vmem %s0, 4
  %s669 = smov 3
  %v670 = vld [vmem:[%s668] ss:$16 sm:%s669]
  %s671 = scalar_lea.vmem %s0, 4
  %s672 = smov 12
  %v673 = vld [vmem:[%s671] ss:$16 sm:%s672]
  %vm674 = vcmask 1043458
  %v675 = vsel %vm674, %v673, %v670
  %s676 = scalar_lea.vmem %s0, 4
  %s677 = smov 48
  %v678 = vld [vmem:[%s676] ss:$16 sm:%s677]
  %vm679 = vcmask 1045508
  %v680 = vsel %vm679, %v678, %v675
  %s681 = scalar_lea.vmem %s0, 4
  %s682 = smov 192
  %v683 = vld [vmem:[%s681] ss:$16 sm:%s682]
  %vm684 = vcmask 1047558
  %v685 = vsel %vm684, %v683, %v680
  %686 = vrot.lane.b32.xlu0 %v685, 64
  %v687 = vpop.permute.xlu0 %686
  %vm688 = vcmask 654848
  %689 = vst.msk [vmem:[%s1] sm:$0xff] %vm688, %v687
  %s690 = scalar_lea.vmem %s0, 260
  %s691 = smov 3
  %v692 = vld [vmem:[%s690] ss:$16 sm:%s691]
  %s693 = scalar_lea.vmem %s0, 260
  %s694 = smov 12
  %v695 = vld [vmem:[%s693] ss:$16 sm:%s694]
  %vm696 = vcmask 1043458
  %v697 = vsel %vm696, %v695, %v692
  %s698 = scalar_lea.vmem %s0, 260
  %s699 = smov 48
  %v700 = vld [vmem:[%s698] ss:$16 sm:%s699]
  %vm701 = vcmask 1045508
  %v702 = vsel %vm701, %v700, %v697
  %s703 = scalar_lea.vmem %s0, 260
  %s704 = smov 192
  %v705 = vld [vmem:[%s703] ss:$16 sm:%s704]
  %vm706 = vcmask 1047558
  %v707 = vsel %vm706, %v705, %v702
  %708 = vrot.lane.b32.xlu0 %v707, 64
  %v709 = vpop.permute.xlu0 %708
  %vm710 = vcmask 654848
  %s711 = scalar_lea.vmem %s1, 32
  %712 = vst.msk [vmem:[%s711] sm:$0xff] %vm710, %v709
  %s713 = scalar_lea.vmem %s0, 12
  %s714 = smov 3
  %v715 = vld [vmem:[%s713] ss:$16 sm:%s714]
  %s716 = scalar_lea.vmem %s0, 12
  %s717 = smov 12
  %v718 = vld [vmem:[%s716] ss:$16 sm:%s717]
  %vm719 = vcmask 1043458
  %v720 = vsel %vm719, %v718, %v715
  %s721 = scalar_lea.vmem %s0, 12
  %s722 = smov 48
  %v723 = vld [vmem:[%s721] ss:$16 sm:%s722]
  %vm724 = vcmask 1045508
  %v725 = vsel %vm724, %v723, %v720
  %s726 = scalar_lea.vmem %s0, 12
  %s727 = smov 192
  %v728 = vld [vmem:[%s726] ss:$16 sm:%s727]
  %vm729 = vcmask 1047558
  %v730 = vsel %vm729, %v728, %v725
  %731 = vrot.lane.b32.xlu0 %v730, 64
  %v732 = vpop.permute.xlu0 %731
  %vm733 = vcmask 654848
  %s734 = scalar_lea.vmem %s1, 8
  %735 = vst.msk [vmem:[%s734] sm:$0xff] %vm733, %v732
  %s736 = scalar_lea.vmem %s0, 268
  %s737 = smov 3
  %v738 = vld [vmem:[%s736] ss:$16 sm:%s737]
  %s739 = scalar_lea.vmem %s0, 268
  %s740 = smov 12
  %v741 = vld [vmem:[%s739] ss:$16 sm:%s740]
  %vm742 = vcmask 1043458
  %v743 = vsel %vm742, %v741, %v738
  %s744 = scalar_lea.vmem %s0, 268
  %s745 = smov 48
  %v746 = vld [vmem:[%s744] ss:$16 sm:%s745]
  %vm747 = vcmask 1045508
  %v748 = vsel %vm747, %v746, %v743
  %s749 = scalar_lea.vmem %s0, 268
  %s750 = smov 192
  %v751 = vld [vmem:[%s749] ss:$16 sm:%s750]
  %vm752 = vcmask 1047558
  %v753 = vsel %vm752, %v751, %v748
  %754 = vrot.lane.b32.xlu0 %v753, 64
  %v755 = vpop.permute.xlu0 %754
  %vm756 = vcmask 654848
  %s757 = scalar_lea.vmem %s1, 40
  %758 = vst.msk [vmem:[%s757] sm:$0xff] %vm756, %v755
  %s759 = scalar_lea.vmem %s0, 132
  %s760 = smov 3
  %v761 = vld [vmem:[%s759] ss:$16 sm:%s760]
  %s762 = scalar_lea.vmem %s0, 132
  %s763 = smov 12
  %v764 = vld [vmem:[%s762] ss:$16 sm:%s763]
  %vm765 = vcmask 1043458
  %v766 = vsel %vm765, %v764, %v761
  %s767 = scalar_lea.vmem %s0, 132
  %s768 = smov 48
  %v769 = vld [vmem:[%s767] ss:$16 sm:%s768]
  %vm770 = vcmask 1045508
  %v771 = vsel %vm770, %v769, %v766
  %s772 = scalar_lea.vmem %s0, 132
  %s773 = smov 192
  %v774 = vld [vmem:[%s772] ss:$16 sm:%s773]
  %vm775 = vcmask 1047558
  %v776 = vsel %vm775, %v774, %v771
  %777 = vrot.lane.b32.xlu0 %v776, 64
  %v778 = vpop.permute.xlu0 %777
  %vm779 = vcmask 654848
  %s780 = scalar_lea.vmem %s1, 16
  %781 = vst.msk [vmem:[%s780] sm:$0xff] %vm779, %v778
  %s782 = scalar_lea.vmem %s0, 388
  %s783 = smov 3
  %v784 = vld [vmem:[%s782] ss:$16 sm:%s783]
  %s785 = scalar_lea.vmem %s0, 388
  %s786 = smov 12
  %v787 = vld [vmem:[%s785] ss:$16 sm:%s786]
  %vm788 = vcmask 1043458
  %v789 = vsel %vm788, %v787, %v784
  %s790 = scalar_lea.vmem %s0, 388
  %s791 = smov 48
  %v792 = vld [vmem:[%s790] ss:$16 sm:%s791]
  %vm793 = vcmask 1045508
  %v794 = vsel %vm793, %v792, %v789
  %s795 = scalar_lea.vmem %s0, 388
  %s796 = smov 192
  %v797 = vld [vmem:[%s795] ss:$16 sm:%s796]
  %vm798 = vcmask 1047558
  %v799 = vsel %vm798, %v797, %v794
  %800 = vrot.lane.b32.xlu0 %v799, 64
  %v801 = vpop.permute.xlu0 %800
  %vm802 = vcmask 654848
  %s803 = scalar_lea.vmem %s1, 48
  %804 = vst.msk [vmem:[%s803] sm:$0xff] %vm802, %v801
  %s805 = scalar_lea.vmem %s0, 140
  %s806 = smov 3
  %v807 = vld [vmem:[%s805] ss:$16 sm:%s806]
  %s808 = scalar_lea.vmem %s0, 140
  %s809 = smov 12
  %v810 = vld [vmem:[%s808] ss:$16 sm:%s809]
  %vm811 = vcmask 1043458
  %v812 = vsel %vm811, %v810, %v807
  %s813 = scalar_lea.vmem %s0, 140
  %s814 = smov 48
  %v815 = vld [vmem:[%s813] ss:$16 sm:%s814]
  %vm816 = vcmask 1045508
  %v817 = vsel %vm816, %v815, %v812
  %s818 = scalar_lea.vmem %s0, 140
  %s819 = smov 192
  %v820 = vld [vmem:[%s818] ss:$16 sm:%s819]
  %vm821 = vcmask 1047558
  %v822 = vsel %vm821, %v820, %v817
  %823 = vrot.lane.b32.xlu0 %v822, 64
  %v824 = vpop.permute.xlu0 %823
  %vm825 = vcmask 654848
  %s826 = scalar_lea.vmem %s1, 24
  %827 = vst.msk [vmem:[%s826] sm:$0xff] %vm825, %v824
  %s828 = scalar_lea.vmem %s0, 396
  %s829 = smov 3
  %v830 = vld [vmem:[%s828] ss:$16 sm:%s829]
  %s831 = scalar_lea.vmem %s0, 396
  %s832 = smov 12
  %v833 = vld [vmem:[%s831] ss:$16 sm:%s832]
  %vm834 = vcmask 1043458
  %v835 = vsel %vm834, %v833, %v830
  %s836 = scalar_lea.vmem %s0, 396
  %s837 = smov 48
  %v838 = vld [vmem:[%s836] ss:$16 sm:%s837]
  %vm839 = vcmask 1045508
  %v840 = vsel %vm839, %v838, %v835
  %s841 = scalar_lea.vmem %s0, 396
  %s842 = smov 192
  %v843 = vld [vmem:[%s841] ss:$16 sm:%s842]
  %vm844 = vcmask 1047558
  %v845 = vsel %vm844, %v843, %v840
  %846 = vrot.lane.b32.xlu0 %v845, 64
  %v847 = vpop.permute.xlu0 %846
  %vm848 = vcmask 654848
  %s849 = scalar_lea.vmem %s1, 56
  %850 = vst.msk [vmem:[%s849] sm:$0xff] %vm848, %v847
  %s851 = scalar_lea.vmem %s0, 3
  %s852 = smov 3
  %v853 = vld [vmem:[%s851] ss:$16 sm:%s852]
  %s854 = scalar_lea.vmem %s0, 3
  %s855 = smov 12
  %v856 = vld [vmem:[%s854] ss:$16 sm:%s855]
  %vm857 = vcmask 1043458
  %v858 = vsel %vm857, %v856, %v853
  %s859 = scalar_lea.vmem %s0, 3
  %s860 = smov 48
  %v861 = vld [vmem:[%s859] ss:$16 sm:%s860]
  %vm862 = vcmask 1045508
  %v863 = vsel %vm862, %v861, %v858
  %s864 = scalar_lea.vmem %s0, 3
  %s865 = smov 192
  %v866 = vld [vmem:[%s864] ss:$16 sm:%s865]
  %vm867 = vcmask 1047558
  %v868 = vsel %vm867, %v866, %v863
  %869 = vrot.lane.b32.xlu0 %v868, 48
  %v870 = vpop.permute.xlu0 %869
  %vm871 = vcmask 523648
  %872 = vst.msk [vmem:[%s1] sm:$0xff] %vm871, %v870
  %s873 = scalar_lea.vmem %s0, 259
  %s874 = smov 3
  %v875 = vld [vmem:[%s873] ss:$16 sm:%s874]
  %s876 = scalar_lea.vmem %s0, 259
  %s877 = smov 12
  %v878 = vld [vmem:[%s876] ss:$16 sm:%s877]
  %vm879 = vcmask 1043458
  %v880 = vsel %vm879, %v878, %v875
  %s881 = scalar_lea.vmem %s0, 259
  %s882 = smov 48
  %v883 = vld [vmem:[%s881] ss:$16 sm:%s882]
  %vm884 = vcmask 1045508
  %v885 = vsel %vm884, %v883, %v880
  %s886 = scalar_lea.vmem %s0, 259
  %s887 = smov 192
  %v888 = vld [vmem:[%s886] ss:$16 sm:%s887]
  %vm889 = vcmask 1047558
  %v890 = vsel %vm889, %v888, %v885
  %891 = vrot.lane.b32.xlu0 %v890, 48
  %v892 = vpop.permute.xlu0 %891
  %vm893 = vcmask 523648
  %s894 = scalar_lea.vmem %s1, 32
  %895 = vst.msk [vmem:[%s894] sm:$0xff] %vm893, %v892
  %s896 = scalar_lea.vmem %s0, 11
  %s897 = smov 3
  %v898 = vld [vmem:[%s896] ss:$16 sm:%s897]
  %s899 = scalar_lea.vmem %s0, 11
  %s900 = smov 12
  %v901 = vld [vmem:[%s899] ss:$16 sm:%s900]
  %vm902 = vcmask 1043458
  %v903 = vsel %vm902, %v901, %v898
  %s904 = scalar_lea.vmem %s0, 11
  %s905 = smov 48
  %v906 = vld [vmem:[%s904] ss:$16 sm:%s905]
  %vm907 = vcmask 1045508
  %v908 = vsel %vm907, %v906, %v903
  %s909 = scalar_lea.vmem %s0, 11
  %s910 = smov 192
  %v911 = vld [vmem:[%s909] ss:$16 sm:%s910]
  %vm912 = vcmask 1047558
  %v913 = vsel %vm912, %v911, %v908
  %914 = vrot.lane.b32.xlu0 %v913, 48
  %v915 = vpop.permute.xlu0 %914
  %vm916 = vcmask 523648
  %s917 = scalar_lea.vmem %s1, 8
  %918 = vst.msk [vmem:[%s917] sm:$0xff] %vm916, %v915
  %s919 = scalar_lea.vmem %s0, 267
  %s920 = smov 3
  %v921 = vld [vmem:[%s919] ss:$16 sm:%s920]
  %s922 = scalar_lea.vmem %s0, 267
  %s923 = smov 12
  %v924 = vld [vmem:[%s922] ss:$16 sm:%s923]
  %vm925 = vcmask 1043458
  %v926 = vsel %vm925, %v924, %v921
  %s927 = scalar_lea.vmem %s0, 267
  %s928 = smov 48
  %v929 = vld [vmem:[%s927] ss:$16 sm:%s928]
  %vm930 = vcmask 1045508
  %v931 = vsel %vm930, %v929, %v926
  %s932 = scalar_lea.vmem %s0, 267
  %s933 = smov 192
  %v934 = vld [vmem:[%s932] ss:$16 sm:%s933]
  %vm935 = vcmask 1047558
  %v936 = vsel %vm935, %v934, %v931
  %937 = vrot.lane.b32.xlu0 %v936, 48
  %v938 = vpop.permute.xlu0 %937
  %vm939 = vcmask 523648
  %s940 = scalar_lea.vmem %s1, 40
  %941 = vst.msk [vmem:[%s940] sm:$0xff] %vm939, %v938
  %s942 = scalar_lea.vmem %s0, 131
  %s943 = smov 3
  %v944 = vld [vmem:[%s942] ss:$16 sm:%s943]
  %s945 = scalar_lea.vmem %s0, 131
  %s946 = smov 12
  %v947 = vld [vmem:[%s945] ss:$16 sm:%s946]
  %vm948 = vcmask 1043458
  %v949 = vsel %vm948, %v947, %v944
  %s950 = scalar_lea.vmem %s0, 131
  %s951 = smov 48
  %v952 = vld [vmem:[%s950] ss:$16 sm:%s951]
  %vm953 = vcmask 1045508
  %v954 = vsel %vm953, %v952, %v949
  %s955 = scalar_lea.vmem %s0, 131
  %s956 = smov 192
  %v957 = vld [vmem:[%s955] ss:$16 sm:%s956]
  %vm958 = vcmask 1047558
  %v959 = vsel %vm958, %v957, %v954
  %960 = vrot.lane.b32.xlu0 %v959, 48
  %v961 = vpop.permute.xlu0 %960
  %vm962 = vcmask 523648
  %s963 = scalar_lea.vmem %s1, 16
  %964 = vst.msk [vmem:[%s963] sm:$0xff] %vm962, %v961
  %s965 = scalar_lea.vmem %s0, 387
  %s966 = smov 3
  %v967 = vld [vmem:[%s965] ss:$16 sm:%s966]
  %s968 = scalar_lea.vmem %s0, 387
  %s969 = smov 12
  %v970 = vld [vmem:[%s968] ss:$16 sm:%s969]
  %vm971 = vcmask 1043458
  %v972 = vsel %vm971, %v970, %v967
  %s973 = scalar_lea.vmem %s0, 387
  %s974 = smov 48
  %v975 = vld [vmem:[%s973] ss:$16 sm:%s974]
  %vm976 = vcmask 1045508
  %v977 = vsel %vm976, %v975, %v972
  %s978 = scalar_lea.vmem %s0, 387
  %s979 = smov 192
  %v980 = vld [vmem:[%s978] ss:$16 sm:%s979]
  %vm981 = vcmask 1047558
  %v982 = vsel %vm981, %v980, %v977
  %983 = vrot.lane.b32.xlu0 %v982, 48
  %v984 = vpop.permute.xlu0 %983
  %vm985 = vcmask 523648
  %s986 = scalar_lea.vmem %s1, 48
  %987 = vst.msk [vmem:[%s986] sm:$0xff] %vm985, %v984
  %s988 = scalar_lea.vmem %s0, 139
  %s989 = smov 3
  %v990 = vld [vmem:[%s988] ss:$16 sm:%s989]
  %s991 = scalar_lea.vmem %s0, 139
  %s992 = smov 12
  %v993 = vld [vmem:[%s991] ss:$16 sm:%s992]
  %vm994 = vcmask 1043458
  %v995 = vsel %vm994, %v993, %v990
  %s996 = scalar_lea.vmem %s0, 139
  %s997 = smov 48
  %v998 = vld [vmem:[%s996] ss:$16 sm:%s997]
  %vm999 = vcmask 1045508
  %v1000 = vsel %vm999, %v998, %v995
  %s1001 = scalar_lea.vmem %s0, 139
  %s1002 = smov 192
  %v1003 = vld [vmem:[%s1001] ss:$16 sm:%s1002]
  %vm1004 = vcmask 1047558
  %v1005 = vsel %vm1004, %v1003, %v1000
  %1006 = vrot.lane.b32.xlu0 %v1005, 48
  %v1007 = vpop.permute.xlu0 %1006
  %vm1008 = vcmask 523648
  %s1009 = scalar_lea.vmem %s1, 24
  %1010 = vst.msk [vmem:[%s1009] sm:$0xff] %vm1008, %v1007
  %s1011 = scalar_lea.vmem %s0, 395
  %s1012 = smov 3
  %v1013 = vld [vmem:[%s1011] ss:$16 sm:%s1012]
  %s1014 = scalar_lea.vmem %s0, 395
  %s1015 = smov 12
  %v1016 = vld [vmem:[%s1014] ss:$16 sm:%s1015]
  %vm1017 = vcmask 1043458
  %v1018 = vsel %vm1017, %v1016, %v1013
  %s1019 = scalar_lea.vmem %s0, 395
  %s1020 = smov 48
  %v1021 = vld [vmem:[%s1019] ss:$16 sm:%s1020]
  %vm1022 = vcmask 1045508
  %v1023 = vsel %vm1022, %v1021, %v1018
  %s1024 = scalar_lea.vmem %s0, 395
  %s1025 = smov 192
  %v1026 = vld [vmem:[%s1024] ss:$16 sm:%s1025]
  %vm1027 = vcmask 1047558
  %v1028 = vsel %vm1027, %v1026, %v1023
  %1029 = vrot.lane.b32.xlu0 %v1028, 48
  %v1030 = vpop.permute.xlu0 %1029
  %vm1031 = vcmask 523648
  %s1032 = scalar_lea.vmem %s1, 56
  %1033 = vst.msk [vmem:[%s1032] sm:$0xff] %vm1031, %v1030
  %s1034 = scalar_lea.vmem %s0, 2
  %s1035 = smov 3
  %v1036 = vld [vmem:[%s1034] ss:$16 sm:%s1035]
  %s1037 = scalar_lea.vmem %s0, 2
  %s1038 = smov 12
  %v1039 = vld [vmem:[%s1037] ss:$16 sm:%s1038]
  %vm1040 = vcmask 1043458
  %v1041 = vsel %vm1040, %v1039, %v1036
  %s1042 = scalar_lea.vmem %s0, 2
  %s1043 = smov 48
  %v1044 = vld [vmem:[%s1042] ss:$16 sm:%s1043]
  %vm1045 = vcmask 1045508
  %v1046 = vsel %vm1045, %v1044, %v1041
  %s1047 = scalar_lea.vmem %s0, 2
  %s1048 = smov 192
  %v1049 = vld [vmem:[%s1047] ss:$16 sm:%s1048]
  %vm1050 = vcmask 1047558
  %v1051 = vsel %vm1050, %v1049, %v1046
  %1052 = vrot.lane.b32.xlu0 %v1051, 32
  %v1053 = vpop.permute.xlu0 %1052
  %vm1054 = vcmask 392448
  %1055 = vst.msk [vmem:[%s1] sm:$0xff] %vm1054, %v1053
  %s1056 = scalar_lea.vmem %s0, 258
  %s1057 = smov 3
  %v1058 = vld [vmem:[%s1056] ss:$16 sm:%s1057]
  %s1059 = scalar_lea.vmem %s0, 258
  %s1060 = smov 12
  %v1061 = vld [vmem:[%s1059] ss:$16 sm:%s1060]
  %vm1062 = vcmask 1043458
  %v1063 = vsel %vm1062, %v1061, %v1058
  %s1064 = scalar_lea.vmem %s0, 258
  %s1065 = smov 48
  %v1066 = vld [vmem:[%s1064] ss:$16 sm:%s1065]
  %vm1067 = vcmask 1045508
  %v1068 = vsel %vm1067, %v1066, %v1063
  %s1069 = scalar_lea.vmem %s0, 258
  %s1070 = smov 192
  %v1071 = vld [vmem:[%s1069] ss:$16 sm:%s1070]
  %vm1072 = vcmask 1047558
  %v1073 = vsel %vm1072, %v1071, %v1068
  %1074 = vrot.lane.b32.xlu0 %v1073, 32
  %v1075 = vpop.permute.xlu0 %1074
  %vm1076 = vcmask 392448
  %s1077 = scalar_lea.vmem %s1, 32
  %1078 = vst.msk [vmem:[%s1077] sm:$0xff] %vm1076, %v1075
  %s1079 = scalar_lea.vmem %s0, 10
  %s1080 = smov 3
  %v1081 = vld [vmem:[%s1079] ss:$16 sm:%s1080]
  %s1082 = scalar_lea.vmem %s0, 10
  %s1083 = smov 12
  %v1084 = vld [vmem:[%s1082] ss:$16 sm:%s1083]
  %vm1085 = vcmask 1043458
  %v1086 = vsel %vm1085, %v1084, %v1081
  %s1087 = scalar_lea.vmem %s0, 10
  %s1088 = smov 48
  %v1089 = vld [vmem:[%s1087] ss:$16 sm:%s1088]
  %vm1090 = vcmask 1045508
  %v1091 = vsel %vm1090, %v1089, %v1086
  %s1092 = scalar_lea.vmem %s0, 10
  %s1093 = smov 192
  %v1094 = vld [vmem:[%s1092] ss:$16 sm:%s1093]
  %vm1095 = vcmask 1047558
  %v1096 = vsel %vm1095, %v1094, %v1091
  %1097 = vrot.lane.b32.xlu0 %v1096, 32
  %v1098 = vpop.permute.xlu0 %1097
  %vm1099 = vcmask 392448
  %s1100 = scalar_lea.vmem %s1, 8
  %1101 = vst.msk [vmem:[%s1100] sm:$0xff] %vm1099, %v1098
  %s1102 = scalar_lea.vmem %s0, 266
  %s1103 = smov 3
  %v1104 = vld [vmem:[%s1102] ss:$16 sm:%s1103]
  %s1105 = scalar_lea.vmem %s0, 266
  %s1106 = smov 12
  %v1107 = vld [vmem:[%s1105] ss:$16 sm:%s1106]
  %vm1108 = vcmask 1043458
  %v1109 = vsel %vm1108, %v1107, %v1104
  %s1110 = scalar_lea.vmem %s0, 266
  %s1111 = smov 48
  %v1112 = vld [vmem:[%s1110] ss:$16 sm:%s1111]
  %vm1113 = vcmask 1045508
  %v1114 = vsel %vm1113, %v1112, %v1109
  %s1115 = scalar_lea.vmem %s0, 266
  %s1116 = smov 192
  %v1117 = vld [vmem:[%s1115] ss:$16 sm:%s1116]
  %vm1118 = vcmask 1047558
  %v1119 = vsel %vm1118, %v1117, %v1114
  %1120 = vrot.lane.b32.xlu0 %v1119, 32
  %v1121 = vpop.permute.xlu0 %1120
  %vm1122 = vcmask 392448
  %s1123 = scalar_lea.vmem %s1, 40
  %1124 = vst.msk [vmem:[%s1123] sm:$0xff] %vm1122, %v1121
  %s1125 = scalar_lea.vmem %s0, 130
  %s1126 = smov 3
  %v1127 = vld [vmem:[%s1125] ss:$16 sm:%s1126]
  %s1128 = scalar_lea.vmem %s0, 130
  %s1129 = smov 12
  %v1130 = vld [vmem:[%s1128] ss:$16 sm:%s1129]
  %vm1131 = vcmask 1043458
  %v1132 = vsel %vm1131, %v1130, %v1127
  %s1133 = scalar_lea.vmem %s0, 130
  %s1134 = smov 48
  %v1135 = vld [vmem:[%s1133] ss:$16 sm:%s1134]
  %vm1136 = vcmask 1045508
  %v1137 = vsel %vm1136, %v1135, %v1132
  %s1138 = scalar_lea.vmem %s0, 130
  %s1139 = smov 192
  %v1140 = vld [vmem:[%s1138] ss:$16 sm:%s1139]
  %vm1141 = vcmask 1047558
  %v1142 = vsel %vm1141, %v1140, %v1137
  %1143 = vrot.lane.b32.xlu0 %v1142, 32
  %v1144 = vpop.permute.xlu0 %1143
  %vm1145 = vcmask 392448
  %s1146 = scalar_lea.vmem %s1, 16
  %1147 = vst.msk [vmem:[%s1146] sm:$0xff] %vm1145, %v1144
  %s1148 = scalar_lea.vmem %s0, 386
  %s1149 = smov 3
  %v1150 = vld [vmem:[%s1148] ss:$16 sm:%s1149]
  %s1151 = scalar_lea.vmem %s0, 386
  %s1152 = smov 12
  %v1153 = vld [vmem:[%s1151] ss:$16 sm:%s1152]
  %vm1154 = vcmask 1043458
  %v1155 = vsel %vm1154, %v1153, %v1150
  %s1156 = scalar_lea.vmem %s0, 386
  %s1157 = smov 48
  %v1158 = vld [vmem:[%s1156] ss:$16 sm:%s1157]
  %vm1159 = vcmask 1045508
  %v1160 = vsel %vm1159, %v1158, %v1155
  %s1161 = scalar_lea.vmem %s0, 386
  %s1162 = smov 192
  %v1163 = vld [vmem:[%s1161] ss:$16 sm:%s1162]
  %vm1164 = vcmask 1047558
  %v1165 = vsel %vm1164, %v1163, %v1160
  %1166 = vrot.lane.b32.xlu0 %v1165, 32
  %v1167 = vpop.permute.xlu0 %1166
  %vm1168 = vcmask 392448
  %s1169 = scalar_lea.vmem %s1, 48
  %1170 = vst.msk [vmem:[%s1169] sm:$0xff] %vm1168, %v1167
  %s1171 = scalar_lea.vmem %s0, 138
  %s1172 = smov 3
  %v1173 = vld [vmem:[%s1171] ss:$16 sm:%s1172]
  %s1174 = scalar_lea.vmem %s0, 138
  %s1175 = smov 12
  %v1176 = vld [vmem:[%s1174] ss:$16 sm:%s1175]
  %vm1177 = vcmask 1043458
  %v1178 = vsel %vm1177, %v1176, %v1173
  %s1179 = scalar_lea.vmem %s0, 138
  %s1180 = smov 48
  %v1181 = vld [vmem:[%s1179] ss:$16 sm:%s1180]
  %vm1182 = vcmask 1045508
  %v1183 = vsel %vm1182, %v1181, %v1178
  %s1184 = scalar_lea.vmem %s0, 138
  %s1185 = smov 192
  %v1186 = vld [vmem:[%s1184] ss:$16 sm:%s1185]
  %vm1187 = vcmask 1047558
  %v1188 = vsel %vm1187, %v1186, %v1183
  %1189 = vrot.lane.b32.xlu0 %v1188, 32
  %v1190 = vpop.permute.xlu0 %1189
  %vm1191 = vcmask 392448
  %s1192 = scalar_lea.vmem %s1, 24
  %1193 = vst.msk [vmem:[%s1192] sm:$0xff] %vm1191, %v1190
  %s1194 = scalar_lea.vmem %s0, 394
  %s1195 = smov 3
  %v1196 = vld [vmem:[%s1194] ss:$16 sm:%s1195]
  %s1197 = scalar_lea.vmem %s0, 394
  %s1198 = smov 12
  %v1199 = vld [vmem:[%s1197] ss:$16 sm:%s1198]
  %vm1200 = vcmask 1043458
  %v1201 = vsel %vm1200, %v1199, %v1196
  %s1202 = scalar_lea.vmem %s0, 394
  %s1203 = smov 48
  %v1204 = vld [vmem:[%s1202] ss:$16 sm:%s1203]
  %vm1205 = vcmask 1045508
  %v1206 = vsel %vm1205, %v1204, %v1201
  %s1207 = scalar_lea.vmem %s0, 394
  %s1208 = smov 192
  %v1209 = vld [vmem:[%s1207] ss:$16 sm:%s1208]
  %vm1210 = vcmask 1047558
  %v1211 = vsel %vm1210, %v1209, %v1206
  %1212 = vrot.lane.b32.xlu0 %v1211, 32
  %v1213 = vpop.permute.xlu0 %1212
  %vm1214 = vcmask 392448
  %s1215 = scalar_lea.vmem %s1, 56
  %1216 = vst.msk [vmem:[%s1215] sm:$0xff] %vm1214, %v1213
  %s1217 = scalar_lea.vmem %s0, 1
  %s1218 = smov 3
  %v1219 = vld [vmem:[%s1217] ss:$16 sm:%s1218]
  %s1220 = scalar_lea.vmem %s0, 1
  %s1221 = smov 12
  %v1222 = vld [vmem:[%s1220] ss:$16 sm:%s1221]
  %vm1223 = vcmask 1043458
  %v1224 = vsel %vm1223, %v1222, %v1219
  %s1225 = scalar_lea.vmem %s0, 1
  %s1226 = smov 48
  %v1227 = vld [vmem:[%s1225] ss:$16 sm:%s1226]
  %vm1228 = vcmask 1045508
  %v1229 = vsel %vm1228, %v1227, %v1224
  %s1230 = scalar_lea.vmem %s0, 1
  %s1231 = smov 192
  %v1232 = vld [vmem:[%s1230] ss:$16 sm:%s1231]
  %vm1233 = vcmask 1047558
  %v1234 = vsel %vm1233, %v1232, %v1229
  %1235 = vrot.lane.b32.xlu0 %v1234, 16
  %v1236 = vpop.permute.xlu0 %1235
  %vm1237 = vcmask 261248
  %1238 = vst.msk [vmem:[%s1] sm:$0xff] %vm1237, %v1236
  %s1239 = scalar_lea.vmem %s0, 257
  %s1240 = smov 3
  %v1241 = vld [vmem:[%s1239] ss:$16 sm:%s1240]
  %s1242 = scalar_lea.vmem %s0, 257
  %s1243 = smov 12
  %v1244 = vld [vmem:[%s1242] ss:$16 sm:%s1243]
  %vm1245 = vcmask 1043458
  %v1246 = vsel %vm1245, %v1244, %v1241
  %s1247 = scalar_lea.vmem %s0, 257
  %s1248 = smov 48
  %v1249 = vld [vmem:[%s1247] ss:$16 sm:%s1248]
  %vm1250 = vcmask 1045508
  %v1251 = vsel %vm1250, %v1249, %v1246
  %s1252 = scalar_lea.vmem %s0, 257
  %s1253 = smov 192
  %v1254 = vld [vmem:[%s1252] ss:$16 sm:%s1253]
  %vm1255 = vcmask 1047558
  %v1256 = vsel %vm1255, %v1254, %v1251
  %1257 = vrot.lane.b32.xlu0 %v1256, 16
  %v1258 = vpop.permute.xlu0 %1257
  %vm1259 = vcmask 261248
  %s1260 = scalar_lea.vmem %s1, 32
  %1261 = vst.msk [vmem:[%s1260] sm:$0xff] %vm1259, %v1258
  %s1262 = scalar_lea.vmem %s0, 9
  %s1263 = smov 3
  %v1264 = vld [vmem:[%s1262] ss:$16 sm:%s1263]
  %s1265 = scalar_lea.vmem %s0, 9
  %s1266 = smov 12
  %v1267 = vld [vmem:[%s1265] ss:$16 sm:%s1266]
  %vm1268 = vcmask 1043458
  %v1269 = vsel %vm1268, %v1267, %v1264
  %s1270 = scalar_lea.vmem %s0, 9
  %s1271 = smov 48
  %v1272 = vld [vmem:[%s1270] ss:$16 sm:%s1271]
  %vm1273 = vcmask 1045508
  %v1274 = vsel %vm1273, %v1272, %v1269
  %s1275 = scalar_lea.vmem %s0, 9
  %s1276 = smov 192
  %v1277 = vld [vmem:[%s1275] ss:$16 sm:%s1276]
  %vm1278 = vcmask 1047558
  %v1279 = vsel %vm1278, %v1277, %v1274
  %1280 = vrot.lane.b32.xlu0 %v1279, 16
  %v1281 = vpop.permute.xlu0 %1280
  %vm1282 = vcmask 261248
  %s1283 = scalar_lea.vmem %s1, 8
  %1284 = vst.msk [vmem:[%s1283] sm:$0xff] %vm1282, %v1281
  %s1285 = scalar_lea.vmem %s0, 265
  %s1286 = smov 3
  %v1287 = vld [vmem:[%s1285] ss:$16 sm:%s1286]
  %s1288 = scalar_lea.vmem %s0, 265
  %s1289 = smov 12
  %v1290 = vld [vmem:[%s1288] ss:$16 sm:%s1289]
  %vm1291 = vcmask 1043458
  %v1292 = vsel %vm1291, %v1290, %v1287
  %s1293 = scalar_lea.vmem %s0, 265
  %s1294 = smov 48
  %v1295 = vld [vmem:[%s1293] ss:$16 sm:%s1294]
  %vm1296 = vcmask 1045508
  %v1297 = vsel %vm1296, %v1295, %v1292
  %s1298 = scalar_lea.vmem %s0, 265
  %s1299 = smov 192
  %v1300 = vld [vmem:[%s1298] ss:$16 sm:%s1299]
  %vm1301 = vcmask 1047558
  %v1302 = vsel %vm1301, %v1300, %v1297
  %1303 = vrot.lane.b32.xlu0 %v1302, 16
  %v1304 = vpop.permute.xlu0 %1303
  %vm1305 = vcmask 261248
  %s1306 = scalar_lea.vmem %s1, 40
  %1307 = vst.msk [vmem:[%s1306] sm:$0xff] %vm1305, %v1304
  %s1308 = scalar_lea.vmem %s0, 129
  %s1309 = smov 3
  %v1310 = vld [vmem:[%s1308] ss:$16 sm:%s1309]
  %s1311 = scalar_lea.vmem %s0, 129
  %s1312 = smov 12
  %v1313 = vld [vmem:[%s1311] ss:$16 sm:%s1312]
  %vm1314 = vcmask 1043458
  %v1315 = vsel %vm1314, %v1313, %v1310
  %s1316 = scalar_lea.vmem %s0, 129
  %s1317 = smov 48
  %v1318 = vld [vmem:[%s1316] ss:$16 sm:%s1317]
  %vm1319 = vcmask 1045508
  %v1320 = vsel %vm1319, %v1318, %v1315
  %s1321 = scalar_lea.vmem %s0, 129
  %s1322 = smov 192
  %v1323 = vld [vmem:[%s1321] ss:$16 sm:%s1322]
  %vm1324 = vcmask 1047558
  %v1325 = vsel %vm1324, %v1323, %v1320
  %1326 = vrot.lane.b32.xlu0 %v1325, 16
  %v1327 = vpop.permute.xlu0 %1326
  %vm1328 = vcmask 261248
  %s1329 = scalar_lea.vmem %s1, 16
  %1330 = vst.msk [vmem:[%s1329] sm:$0xff] %vm1328, %v1327
  %s1331 = scalar_lea.vmem %s0, 385
  %s1332 = smov 3
  %v1333 = vld [vmem:[%s1331] ss:$16 sm:%s1332]
  %s1334 = scalar_lea.vmem %s0, 385
  %s1335 = smov 12
  %v1336 = vld [vmem:[%s1334] ss:$16 sm:%s1335]
  %vm1337 = vcmask 1043458
  %v1338 = vsel %vm1337, %v1336, %v1333
  %s1339 = scalar_lea.vmem %s0, 385
  %s1340 = smov 48
  %v1341 = vld [vmem:[%s1339] ss:$16 sm:%s1340]
  %vm1342 = vcmask 1045508
  %v1343 = vsel %vm1342, %v1341, %v1338
  %s1344 = scalar_lea.vmem %s0, 385
  %s1345 = smov 192
  %v1346 = vld [vmem:[%s1344] ss:$16 sm:%s1345]
  %vm1347 = vcmask 1047558
  %v1348 = vsel %vm1347, %v1346, %v1343
  %1349 = vrot.lane.b32.xlu0 %v1348, 16
  %v1350 = vpop.permute.xlu0 %1349
  %vm1351 = vcmask 261248
  %s1352 = scalar_lea.vmem %s1, 48
  %1353 = vst.msk [vmem:[%s1352] sm:$0xff] %vm1351, %v1350
  %s1354 = scalar_lea.vmem %s0, 137
  %s1355 = smov 3
  %v1356 = vld [vmem:[%s1354] ss:$16 sm:%s1355]
  %s1357 = scalar_lea.vmem %s0, 137
  %s1358 = smov 12
  %v1359 = vld [vmem:[%s1357] ss:$16 sm:%s1358]
  %vm1360 = vcmask 1043458
  %v1361 = vsel %vm1360, %v1359, %v1356
  %s1362 = scalar_lea.vmem %s0, 137
  %s1363 = smov 48
  %v1364 = vld [vmem:[%s1362] ss:$16 sm:%s1363]
  %vm1365 = vcmask 1045508
  %v1366 = vsel %vm1365, %v1364, %v1361
  %s1367 = scalar_lea.vmem %s0, 137
  %s1368 = smov 192
  %v1369 = vld [vmem:[%s1367] ss:$16 sm:%s1368]
  %vm1370 = vcmask 1047558
  %v1371 = vsel %vm1370, %v1369, %v1366
  %1372 = vrot.lane.b32.xlu0 %v1371, 16
  %v1373 = vpop.permute.xlu0 %1372
  %vm1374 = vcmask 261248
  %s1375 = scalar_lea.vmem %s1, 24
  %1376 = vst.msk [vmem:[%s1375] sm:$0xff] %vm1374, %v1373
  %s1377 = scalar_lea.vmem %s0, 393
  %s1378 = smov 3
  %v1379 = vld [vmem:[%s1377] ss:$16 sm:%s1378]
  %s1380 = scalar_lea.vmem %s0, 393
  %s1381 = smov 12
  %v1382 = vld [vmem:[%s1380] ss:$16 sm:%s1381]
  %vm1383 = vcmask 1043458
  %v1384 = vsel %vm1383, %v1382, %v1379
  %s1385 = scalar_lea.vmem %s0, 393
  %s1386 = smov 48
  %v1387 = vld [vmem:[%s1385] ss:$16 sm:%s1386]
  %vm1388 = vcmask 1045508
  %v1389 = vsel %vm1388, %v1387, %v1384
  %s1390 = scalar_lea.vmem %s0, 393
  %s1391 = smov 192
  %v1392 = vld [vmem:[%s1390] ss:$16 sm:%s1391]
  %vm1393 = vcmask 1047558
  %v1394 = vsel %vm1393, %v1392, %v1389
  %1395 = vrot.lane.b32.xlu0 %v1394, 16
  %v1396 = vpop.permute.xlu0 %1395
  %vm1397 = vcmask 261248
  %s1398 = scalar_lea.vmem %s1, 56
  %1399 = vst.msk [vmem:[%s1398] sm:$0xff] %vm1397, %v1396

// kernel: pam_forward.2
$region0: #{pam_forward.2}
  #allocation0 [shape = 'u32[]', space=smem, size = 0x4, offset = 0x4, fixed_abs, tag = 'smem constant byte address 0x4 - core index']
  #allocation1 [shape = 'u32[72,128]{1,0:T(1,128)}', space=vmem, size = 0x9000, scoped, tag = 'internal scratch']
  %s0 = inlined_call_operand.vmem [shape: f32[2,16,256], index: 0, kind: input, shape index: {}]
  %s1 = inlined_call_operand.vmem [shape: f32[2,16], index: 1, kind: input, shape index: {}]
  %s2 = inlined_call_operand.vmem [shape: f32[2,16], index: 2, kind: input, shape index: {}]
  %s3 = inlined_call_operand.vmem [shape: f32[16,16], index: 3, kind: input, shape index: {}]
  %s4 = inlined_call_operand.vmem [shape: f32[2,1], index: 4, kind: input, shape index: {}]
  %s5 = inlined_call_operand.vmem [shape: f32[2,1], index: 5, kind: input, shape index: {}]
  %s6 = inlined_call_operand.vmem [shape: f32[16,1], index: 6, kind: input, shape index: {}]
  %s7 = inlined_call_operand.vmem [shape: f32[2,2,256], index: 7, kind: output, shape index: {0}]
  %s8 = inlined_call_operand.vmem [shape: f32[2,256,2], index: 8, kind: output, shape index: {1}]
  %s9 = inlined_call_operand.vmem [shape: f32[2,16,256], index: 9, kind: output, shape index: {2}]
  %10 = xla_tuple %s7, %s8, %s9
  %s11 = sld [smem:[#allocation0]]
  $region77: #{pam_forward.2} parent=0
    _
  %s13 = ssub.s32 1, %s11
  %s14 = scalar_select 0, %s13, %s11
  loop: start=0, step=1, limit=4
  $region2: #{pam_forward.2} parent=0 // loop_pre_header
    _
  $region3: #{pam_forward.2} parent=0 // loop_header
    %s16 = sphi 0, %s20
    %p17 = scmp.ge.s32.totalorder %s16, 4
    %s23 = sphi 0, %s35
    %s24 = sphi 0, %s31
    %s25 = sphi 0, %s23
    %s26 = sphi 0, %s24
    %s27 = sphi 0, %s25
    %s28 = sphi 0, %s26
    %s40 = sphi 0, %s42
    %s43 = sphi 0, %s40
    %s44 = sphi 0, %s43
    %s60 = sphi 0, %s44
    %s64 = sphi 0, %s64
    %s66 = sphi 0, %s64
    %s67 = sphi 0, %s66
    %s81 = sphi 0, %s67
    %s85 = sphi 0, %s85
    %s87 = sphi 0, %s85
    %s88 = sphi 0, %s87
    %s102 = sphi 0, %s88
    %s106 = sphi 0, %s106
    %s108 = sphi 0, %s106
    %s109 = sphi 0, %s108
    %s123 = sphi 0, %s109
    %s127 = sphi 0, %s127
    %s129 = sphi 0, %s127
    %s130 = sphi 0, %s129
    %s144 = sphi 0, %s130
    %s148 = sphi 0, %s148
    %s150 = sphi 0, %s148
    %s151 = sphi 0, %s150
    %s165 = sphi 0, %s151
    %s169 = sphi 0, %s169
    %s171 = sphi 0, %s169
    %s172 = sphi 0, %s171
    %s186 = sphi 0, %s172
    %s194 = sphi 0, %s196
    %s197 = sphi 0, %s194
    %s198 = sphi 0, %s197
    %s214 = sphi 0, %s198
    %s222 = sphi 0, %s224
    %s225 = sphi 0, %s222
    %s226 = sphi 0, %s225
    %s242 = sphi 0, %s226
    %s250 = sphi 0, %s252
    %s253 = sphi 0, %s250
    %s254 = sphi 0, %s253
    %s270 = sphi 0, %s254
  $region4: #{pam_forward.2} parent=0 // loop_header_branch
    %19 = sbr.rel (%p17) target = $region8
  $region5: #{pam_forward.2} parent=0 // loop_body
    %s21 = ssub.s32 %s16, 1
    %s22 = ssub.s32 %s16, 2
    %s29 = sadd.s32 1, %s24
    %p30 = scmp.ge.s32.totalorder %s29, 1
    %s31 = scalar_select %p30, 0, %s29
    %s32 = sadd.s32 1, %s23
    %s33 = scalar_select %p30, %s32, %s23
    %p34 = scmp.ge.s32.totalorder %s33, 2
    %s35 = scalar_select %p34, 0, %s33
    %s36 = ssub.s32 %s23, %s35
    %s37 = ssub.s32 %s24, %s31
    %s38 = sor.u32 %s36, %s37
    %p39 = scmp.eq.s32.totalorder %s38, 0
    %s41 = sadd.s32 %s40, 1
    %s42 = scalar_select %p39, %s40, %s41
    %p45 = pneg %p39
    %p46 = scmp.eq.s32.totalorder %s16, 1
    %p47 = por %p45, %p46
    %p48 = scmp.ne.s32.totalorder %s40, %s43
    %p49 = scmp.eq.s32.totalorder %s16, 0
    %p50 = por %p48, %p49
    %p51 = scmp.ne.s32.totalorder %s40, %s43
    %p52 = scmp.eq.s32.totalorder %s21, 1
    %p53 = por %p51, %p52
    %p54 = scmp.ne.s32.totalorder %s43, %s44
    %p55 = scmp.eq.s32.totalorder %s21, 0
    %p56 = por %p54, %p55
    %p57 = scmp.ne.s32.totalorder %s43, %s44
    %p58 = scmp.eq.s32.totalorder %s22, 1
    %p59 = por %p57, %p58
    %p61 = scmp.ne.s32.totalorder %s44, %s60
    %p62 = scmp.eq.s32.totalorder %s22, 0
    %p63 = por %p61, %p62
    %s65 = sadd.s32 %s64, 1
    %p68 = scmp.eq.s32.totalorder %s16, 1
    %p69 = scmp.ne.s32.totalorder %s64, %s66
    %p70 = scmp.eq.s32.totalorder %s16, 0
    %p71 = por %p69, %p70
    %p72 = scmp.ne.s32.totalorder %s64, %s66
    %p73 = scmp.eq.s32.totalorder %s21, 1
    %p74 = por %p72, %p73
    %p75 = scmp.ne.s32.totalorder %s66, %s67
    %p76 = scmp.eq.s32.totalorder %s21, 0
    %p77 = por %p75, %p76
    %p78 = scmp.ne.s32.totalorder %s66, %s67
    %p79 = scmp.eq.s32.totalorder %s22, 1
    %p80 = por %p78, %p79
    %p82 = scmp.ne.s32.totalorder %s67, %s81
    %p83 = scmp.eq.s32.totalorder %s22, 0
    %p84 = por %p82, %p83
    %s86 = sadd.s32 %s85, 1
    %p89 = scmp.eq.s32.totalorder %s16, 1
    %p90 = scmp.ne.s32.totalorder %s85, %s87
    %p91 = scmp.eq.s32.totalorder %s16, 0
    %p92 = por %p90, %p91
    %p93 = scmp.ne.s32.totalorder %s85, %s87
    %p94 = scmp.eq.s32.totalorder %s21, 1
    %p95 = por %p93, %p94
    %p96 = scmp.ne.s32.totalorder %s87, %s88
    %p97 = scmp.eq.s32.totalorder %s21, 0
    %p98 = por %p96, %p97
    %p99 = scmp.ne.s32.totalorder %s87, %s88
    %p100 = scmp.eq.s32.totalorder %s22, 1
    %p101 = por %p99, %p100
    %p103 = scmp.ne.s32.totalorder %s88, %s102
    %p104 = scmp.eq.s32.totalorder %s22, 0
    %p105 = por %p103, %p104
    %s107 = sadd.s32 %s106, 1
    %p110 = scmp.eq.s32.totalorder %s16, 1
    %p111 = scmp.ne.s32.totalorder %s106, %s108
    %p112 = scmp.eq.s32.totalorder %s16, 0
    %p113 = por %p111, %p112
    %p114 = scmp.ne.s32.totalorder %s106, %s108
    %p115 = scmp.eq.s32.totalorder %s21, 1
    %p116 = por %p114, %p115
    %p117 = scmp.ne.s32.totalorder %s108, %s109
    %p118 = scmp.eq.s32.totalorder %s21, 0
    %p119 = por %p117, %p118
    %p120 = scmp.ne.s32.totalorder %s108, %s109
    %p121 = scmp.eq.s32.totalorder %s22, 1
    %p122 = por %p120, %p121
    %p124 = scmp.ne.s32.totalorder %s109, %s123
    %p125 = scmp.eq.s32.totalorder %s22, 0
    %p126 = por %p124, %p125
    %s128 = sadd.s32 %s127, 1
    %p131 = scmp.eq.s32.totalorder %s16, 1
    %p132 = scmp.ne.s32.totalorder %s127, %s129
    %p133 = scmp.eq.s32.totalorder %s16, 0
    %p134 = por %p132, %p133
    %p135 = scmp.ne.s32.totalorder %s127, %s129
    %p136 = scmp.eq.s32.totalorder %s21, 1
    %p137 = por %p135, %p136
    %p138 = scmp.ne.s32.totalorder %s129, %s130
    %p139 = scmp.eq.s32.totalorder %s21, 0
    %p140 = por %p138, %p139
    %p141 = scmp.ne.s32.totalorder %s129, %s130
    %p142 = scmp.eq.s32.totalorder %s22, 1
    %p143 = por %p141, %p142
    %p145 = scmp.ne.s32.totalorder %s130, %s144
    %p146 = scmp.eq.s32.totalorder %s22, 0
    %p147 = por %p145, %p146
    %s149 = sadd.s32 %s148, 1
    %p152 = scmp.eq.s32.totalorder %s16, 1
    %p153 = scmp.ne.s32.totalorder %s148, %s150
    %p154 = scmp.eq.s32.totalorder %s16, 0
    %p155 = por %p153, %p154
    %p156 = scmp.ne.s32.totalorder %s148, %s150
    %p157 = scmp.eq.s32.totalorder %s21, 1
    %p158 = por %p156, %p157
    %p159 = scmp.ne.s32.totalorder %s150, %s151
    %p160 = scmp.eq.s32.totalorder %s21, 0
    %p161 = por %p159, %p160
    %p162 = scmp.ne.s32.totalorder %s150, %s151
    %p163 = scmp.eq.s32.totalorder %s22, 1
    %p164 = por %p162, %p163
    %p166 = scmp.ne.s32.totalorder %s151, %s165
    %p167 = scmp.eq.s32.totalorder %s22, 0
    %p168 = por %p166, %p167
    %s170 = sadd.s32 %s169, 1
    %p173 = scmp.eq.s32.totalorder %s16, 1
    %p174 = scmp.ne.s32.totalorder %s169, %s171
    %p175 = scmp.eq.s32.totalorder %s16, 0
    %p176 = por %p174, %p175
    %p177 = scmp.ne.s32.totalorder %s169, %s171
    %p178 = scmp.eq.s32.totalorder %s21, 1
    %p179 = por %p177, %p178
    %p180 = scmp.ne.s32.totalorder %s171, %s172
    %p181 = scmp.eq.s32.totalorder %s21, 0
    %p182 = por %p180, %p181
    %p183 = scmp.ne.s32.totalorder %s171, %s172
    %p184 = scmp.eq.s32.totalorder %s22, 1
    %p185 = por %p183, %p184
    %p187 = scmp.ne.s32.totalorder %s172, %s186
    %p188 = scmp.eq.s32.totalorder %s22, 0
    %p189 = por %p187, %p188
    %s190 = ssub.s32 %s23, %s35
    %s191 = ssub.s32 %s24, %s31
    %s192 = sor.u32 %s190, %s191
    %p193 = scmp.eq.s32.totalorder %s192, 0
    %s195 = sadd.s32 %s194, 1
    %s196 = scalar_select %p193, %s194, %s195
    %p199 = pneg %p193
    %p200 = scmp.eq.s32.totalorder %s16, 1
    %p201 = por %p199, %p200
    %p202 = scmp.ne.s32.totalorder %s194, %s197
    %p203 = scmp.eq.s32.totalorder %s16, 0
    %p204 = por %p202, %p203
    %p205 = scmp.ne.s32.totalorder %s194, %s197
    %p206 = scmp.eq.s32.totalorder %s21, 1
    %p207 = por %p205, %p206
    %p208 = scmp.ne.s32.totalorder %s197, %s198
    %p209 = scmp.eq.s32.totalorder %s21, 0
    %p210 = por %p208, %p209
    %p211 = scmp.ne.s32.totalorder %s197, %s198
    %p212 = scmp.eq.s32.totalorder %s22, 1
    %p213 = por %p211, %p212
    %p215 = scmp.ne.s32.totalorder %s198, %s214
    %p216 = scmp.eq.s32.totalorder %s22, 0
    %p217 = por %p215, %p216
    %s218 = ssub.s32 %s23, %s35
    %s219 = ssub.s32 %s24, %s31
    %s220 = sor.u32 %s218, %s219
    %p221 = scmp.eq.s32.totalorder %s220, 0
    %s223 = sadd.s32 %s222, 1
    %s224 = scalar_select %p221, %s222, %s223
    %p227 = pneg %p221
    %p228 = scmp.eq.s32.totalorder %s16, 1
    %p229 = por %p227, %p228
    %p230 = scmp.ne.s32.totalorder %s222, %s225
    %p231 = scmp.eq.s32.totalorder %s16, 0
    %p232 = por %p230, %p231
    %p233 = scmp.ne.s32.totalorder %s222, %s225
    %p234 = scmp.eq.s32.totalorder %s21, 1
    %p235 = por %p233, %p234
    %p236 = scmp.ne.s32.totalorder %s225, %s226
    %p237 = scmp.eq.s32.totalorder %s21, 0
    %p238 = por %p236, %p237
    %p239 = scmp.ne.s32.totalorder %s225, %s226
    %p240 = scmp.eq.s32.totalorder %s22, 1
    %p241 = por %p239, %p240
    %p243 = scmp.ne.s32.totalorder %s226, %s242
    %p244 = scmp.eq.s32.totalorder %s22, 0
    %p245 = por %p243, %p244
    %s246 = ssub.s32 %s23, %s35
    %s247 = ssub.s32 %s24, %s31
    %s248 = sor.u32 %s246, %s247
    %p249 = scmp.eq.s32.totalorder %s248, 0
    %s251 = sadd.s32 %s250, 1
    %s252 = scalar_select %p249, %s250, %s251
    %p255 = pneg %p249
    %p256 = scmp.eq.s32.totalorder %s16, 1
    %p257 = por %p255, %p256
    %p258 = scmp.ne.s32.totalorder %s250, %s253
    %p259 = scmp.eq.s32.totalorder %s16, 0
    %p260 = por %p258, %p259
    %p261 = scmp.ne.s32.totalorder %s250, %s253
    %p262 = scmp.eq.s32.totalorder %s21, 1
    %p263 = por %p261, %p262
    %p264 = scmp.ne.s32.totalorder %s253, %s254
    %p265 = scmp.eq.s32.totalorder %s21, 0
    %p266 = por %p264, %p265
    %p267 = scmp.ne.s32.totalorder %s253, %s254
    %p268 = scmp.eq.s32.totalorder %s22, 1
    %p269 = por %p267, %p268
    %p271 = scmp.ne.s32.totalorder %s254, %s270
    %p272 = scmp.eq.s32.totalorder %s22, 0
    %p273 = por %p271, %p272
    %p274 = scmp.le.s32.totalorder 1, %s16
    %p275 = scmp.lt.s32.totalorder %s16, 3
    %p276 = pnand %p274, %p275
    %p277 = pneg %p276
    // Predicated region
    $region9: #{pam_forward.2} parent=5 // pred_check
      _
    $region10: #{pam_forward.2} parent=5 // pred_check_branch
      %279 = sbr.rel (%p276) target = $region12
    $region11: #{pam_forward.2} parent=5 // pred_region
      %s280 = ssub.s32 %s16, 1
      // Predicated region
      $region13: #{pam_forward.2} parent=11 // pred_check
        %p281 = pneg %p77
      $region14: #{pam_forward.2} parent=11 // pred_check_branch
        %283 = sbr.rel (%p281) target = $region16
      $region15: #{pam_forward.2} parent=11 // pred_region
        _
      $region16: #{pam_forward.2} parent=11 // pred_fallthru
        _
      // Predicated region
      $region17: #{pam_forward.2} parent=11 // pred_check
        %p284 = pneg %p98
      $region18: #{pam_forward.2} parent=11 // pred_check_branch
        %286 = sbr.rel (%p284) target = $region20
      $region19: #{pam_forward.2} parent=11 // pred_region
        _
      $region20: #{pam_forward.2} parent=11 // pred_fallthru
        _
      // Predicated region
      $region21: #{pam_forward.2} parent=11 // pred_check
        %p287 = pneg %p119
      $region22: #{pam_forward.2} parent=11 // pred_check_branch
        %289 = sbr.rel (%p287) target = $region24
      $region23: #{pam_forward.2} parent=11 // pred_region
        _
      $region24: #{pam_forward.2} parent=11 // pred_fallthru
        _
      // Predicated region
      $region25: #{pam_forward.2} parent=11 // pred_check
        %p290 = pneg %p140
      $region26: #{pam_forward.2} parent=11 // pred_check_branch
        %292 = sbr.rel (%p290) target = $region28
      $region27: #{pam_forward.2} parent=11 // pred_region
        _
      $region28: #{pam_forward.2} parent=11 // pred_fallthru
        _
      // Predicated region
      $region29: #{pam_forward.2} parent=11 // pred_check
        %p293 = pneg %p161
      $region30: #{pam_forward.2} parent=11 // pred_check_branch
        %295 = sbr.rel (%p293) target = $region32
      $region31: #{pam_forward.2} parent=11 // pred_region
        _
      $region32: #{pam_forward.2} parent=11 // pred_fallthru
        _
      // Predicated region
      $region33: #{pam_forward.2} parent=11 // pred_check
        %p296 = pneg %p182
      $region34: #{pam_forward.2} parent=11 // pred_check_branch
        %298 = sbr.rel (%p296) target = $region36
      $region35: #{pam_forward.2} parent=11 // pred_region
        _
      $region36: #{pam_forward.2} parent=11 // pred_fallthru
        _
    $region12: #{pam_forward.2} parent=5 // pred_fallthru
      _
    %p299 = scmp.lt.s32.totalorder %s16, 2
    // Predicated region
    $region37: #{pam_forward.2} parent=5 // pred_check
      %p300 = pneg %p299
    $region38: #{pam_forward.2} parent=5 // pred_check_branch
      %302 = sbr.rel (%p300) target = $region40
    $region39: #{pam_forward.2} parent=5 // pred_region
      // Predicated region
      $region41: #{pam_forward.2} parent=39 // pred_check
        %p303 = pneg %p50
      $region42: #{pam_forward.2} parent=39 // pred_check_branch
        %305 = sbr.rel (%p303) target = $region44
      $region43: #{pam_forward.2} parent=39 // pred_region
        %s306 = smul.u32 2, %s24
        %p307 = scmp.lt.s32.totalorder %s23, 1
        %s308 = scalar_select %p307, %s23, 1
        %p309 = scmp.lt.s32.totalorder %s306, 1
        %s310 = scalar_select %p309, %s306, 1
        %s311 = smul.addr %s308, 4
        %s312 = sadd.s32 %s310, %s311
        %s313 = smul.addr %s312, 8
        %s314 = scalar_lea.vmem %s0, %s313
        %s315 = smul.u32 2, %s24
      $region44: #{pam_forward.2} parent=39 // pred_fallthru
        _
    $region40: #{pam_forward.2} parent=5 // pred_fallthru
      _
    %p316 = scmp.le.s32.totalorder 1, %s16
    %p317 = scmp.lt.s32.totalorder %s16, 3
    %p318 = pnand %p316, %p317
    %p319 = pneg %p318
    // Predicated region
    $region45: #{pam_forward.2} parent=5 // pred_check
      _
    $region46: #{pam_forward.2} parent=5 // pred_check_branch
      %321 = sbr.rel (%p318) target = $region48
    $region47: #{pam_forward.2} parent=5 // pred_region
      %s322 = ssub.s32 %s16, 1
      %s323 = smul.u32 2, %s26
      %p324 = scmp.lt.s32.totalorder %s25, 1
      %s325 = scalar_select %p324, %s25, 1
      %p326 = scmp.lt.s32.totalorder %s323, 1
      %s327 = scalar_select %p326, %s323, 1
      %s328 = smul.addr %s325, 4
      %s329 = sadd.s32 %s327, %s328
      %s330 = smul.addr %s329, 8
      %s331 = scalar_lea.vmem %s0, %s330
      %p332 = pneg %p56
      %p333 = pneg %p53
      %p334 = pneg %p77
      %p335 = pneg %p74
      %p336 = pneg %p98
      %p337 = pneg %p95
      %p338 = pneg %p119
      %p339 = pneg %p116
      %p340 = pneg %p140
      %p341 = pneg %p137
      %p342 = pneg %p161
      %p343 = pneg %p158
      %p344 = pneg %p182
      %p345 = pneg %p179
      %p346 = pneg %p210
      %p347 = pneg %p207
      %s348 = smul.u32 2, %s26
      %p349 = scmp.lt.s32.totalorder %s25, 1
      %s350 = scalar_select %p349, %s25, 1
      %p351 = scmp.lt.s32.totalorder %s348, 1
      %s352 = scalar_select %p351, %s348, 1
      %s353 = smul.addr %s350, 2
      %s354 = sadd.s32 %s352, %s353
      %s355 = smul.addr %s354, 2
      %s356 = scalar_lea.vmem %s7, %s355
      %p357 = pneg %p238
      %p358 = pneg %p235
      %s359 = smul.u32 32, %s26
      %p360 = scmp.lt.s32.totalorder %s25, 1
      %s361 = scalar_select %p360, %s25, 1
      %p362 = scmp.lt.s32.totalorder %s359, 31
      %s363 = scalar_select %p362, %s359, 31
      %s364 = smul.addr %s361, 32
      %s365 = sadd.s32 %s363, %s364
      %s366 = smul.addr %s365, 8
      %s367 = scalar_lea.vmem %s8, %s366
      %p368 = pneg %p266
      %p369 = pneg %p263
      %s370 = smul.u32 2, %s26
      %p371 = scmp.lt.s32.totalorder %s25, 1
      %s372 = scalar_select %p371, %s25, 1
      %p373 = scmp.lt.s32.totalorder %s370, 1
      %s374 = scalar_select %p373, %s370, 1
      %s375 = smul.addr %s372, 4
      %s376 = sadd.s32 %s374, %s375
      %s377 = smul.addr %s376, 8
      %s378 = scalar_lea.vmem %s9, %s377
      %s379 = smul.u32 2, %s26
      %p380 = scmp.lt.s32.totalorder %s25, 1
      %s381 = scalar_select %p380, %s25, 1
      %p382 = scmp.lt.s32.totalorder %s379, 1
      %s383 = scalar_select %p382, %s379, 1
      %s384 = smul.addr %s381, 4
      %s385 = sadd.s32 %s383, %s384
      %s386 = smul.addr %s385, 8
      %s387 = scalar_lea.vmem %s0, %s386
      %s388 = smul.u32 2, %s26
      %s389 = smul.u32 2, %s26
      %p390 = scmp.lt.s32.totalorder %s25, 1
      %s391 = scalar_select %p390, %s25, 1
      %p392 = scmp.lt.s32.totalorder %s389, 1
      %s393 = scalar_select %p392, %s389, 1
      %s394 = smul.addr %s391, 2
      %s395 = sadd.s32 %s393, %s394
      %s396 = smul.addr %s395, 2
      %s397 = scalar_lea.vmem %s7, %s396
      %s398 = smul.u32 2, %s26
      %s399 = smul.u32 32, %s26
      %p400 = scmp.lt.s32.totalorder %s25, 1
      %s401 = scalar_select %p400, %s25, 1
      %p402 = scmp.lt.s32.totalorder %s399, 31
      %s403 = scalar_select %p402, %s399, 31
      %s404 = smul.addr %s401, 32
      %s405 = sadd.s32 %s403, %s404
      %s406 = smul.addr %s405, 8
      %s407 = scalar_lea.vmem %s8, %s406
      %s408 = smul.u32 32, %s26
      %s409 = smul.u32 2, %s26
      %p410 = scmp.lt.s32.totalorder %s25, 1
      %s411 = scalar_select %p410, %s25, 1
      %p412 = scmp.lt.s32.totalorder %s409, 1
      %s413 = scalar_select %p412, %s409, 1
      %s414 = smul.addr %s411, 4
      %s415 = sadd.s32 %s413, %s414
      %s416 = smul.addr %s415, 8
      %s417 = scalar_lea.vmem %s9, %s416
      %s418 = smul.u32 2, %s26
      %v419 = vld [vmem:[%s387] sm:$0xff]
      %v420 = vld [vmem:[%s387 + $0x8] sm:$0xff]
      %v421 = vld [vmem:[%s387 + $0x10] sm:$0xff]
      %v422 = vld [vmem:[%s387 + $0x18] sm:$0xff]
      %v423 = vld [vmem:[%s1] sm:$0x3]
      %v424 = vld [vmem:[%s4] sm:$0x3]
      %426 = vset.pattern.permute.xlu0 0
      %427 = vperm.xlu0 %426, %v424
      %v428 = vpop.permute.xlu0 %427
      %vm430 = vcmask 130048
      %v432 = vsel %vm430, %v423, 0
      %434 = vmatpush.msra.mxu0 0.0
      %435 = vmatpush.msra.mxu0 0.0
      %436 = vmatpush.msra.mxu0 0.0
      %437 = vmatpush.msra.mxu0 0.0
      %438 = vmatpush.msra.mxu0 0.0
      %439 = vmatpush.msra.mxu0 0.0
      %440 = vmatpush.msra.mxu0 0.0
      %441 = vmatpush.msra.mxu0 0.0
      %442 = vmatpush.msra.mxu0 0.0
      %443 = vmatpush.msra.mxu0 0.0
      %444 = vmatpush.msra.mxu0 0.0
      %445 = vmatpush.msra.mxu0 0.0
      %446 = vmatpush.msra.mxu0 0.0
      %447 = vmatpush.msra.mxu0 0.0
      %448 = vmatpush.msra.mxu0 %v421
      %449 = vmatpush.msra.mxu0 %v419
      %450 = vmatmul.f32.gmra.mxu0 %v432
      %v451 = vpop.f32.mrf.mxu0
      %v452 = vadd.f32 %v428, %v451
      %453 = vdwg.mxu0
      %454 = vmatpush.msra.mxu0 0.0
      %455 = vmatpush.msra.mxu0 0.0
      %456 = vmatpush.msra.mxu0 0.0
      %457 = vmatpush.msra.mxu0 0.0
      %458 = vmatpush.msra.mxu0 0.0
      %459 = vmatpush.msra.mxu0 0.0
      %460 = vmatpush.msra.mxu0 0.0
      %461 = vmatpush.msra.mxu0 0.0
      %462 = vmatpush.msra.mxu0 0.0
      %463 = vmatpush.msra.mxu0 0.0
      %464 = vmatpush.msra.mxu0 0.0
      %465 = vmatpush.msra.mxu0 0.0
      %466 = vmatpush.msra.mxu0 0.0
      %467 = vmatpush.msra.mxu0 0.0
      %468 = vmatpush.msra.mxu0 %v422
      %469 = vmatpush.msra.mxu0 %v420
      %470 = vmatmul.f32.gmra.mxu0 %v432
      %v471 = vpop.f32.mrf.mxu0
      %v472 = vadd.f32 %v428, %v471
      %473 = vdwg.mxu0
      %v474 = vld [vmem:[%s2] sm:$0x3]
      %v475 = vld [vmem:[%s5] sm:$0x3]
      %477 = vset.pattern.permute.xlu0 0
      %478 = vperm.xlu0 %477, %v475
      %v479 = vpop.permute.xlu0 %478
      %v482 = vsel %vm430, %v474, 0
      %484 = vmatpush.msra.mxu0 0.0
      %485 = vmatpush.msra.mxu0 0.0
      %486 = vmatpush.msra.mxu0 0.0
      %487 = vmatpush.msra.mxu0 0.0
      %488 = vmatpush.msra.mxu0 0.0
      %489 = vmatpush.msra.mxu0 0.0
      %490 = vmatpush.msra.mxu0 0.0
      %491 = vmatpush.msra.mxu0 0.0
      %492 = vmatpush.msra.mxu0 0.0
      %493 = vmatpush.msra.mxu0 0.0
      %494 = vmatpush.msra.mxu0 0.0
      %495 = vmatpush.msra.mxu0 0.0
      %496 = vmatpush.msra.mxu0 0.0
      %497 = vmatpush.msra.mxu0 0.0
      %498 = vmatpush.msra.mxu0 %v421
      %499 = vmatpush.msra.mxu0 %v419
      %500 = vmatmul.f32.gmra.mxu0 %v482
      %v501 = vpop.f32.mrf.mxu0
      %v502 = vadd.f32 %v479, %v501
      %503 = vdwg.mxu0
      %504 = vmatpush.msra.mxu0 0.0
      %505 = vmatpush.msra.mxu0 0.0
      %506 = vmatpush.msra.mxu0 0.0
      %507 = vmatpush.msra.mxu0 0.0
      %508 = vmatpush.msra.mxu0 0.0
      %509 = vmatpush.msra.mxu0 0.0
      %510 = vmatpush.msra.mxu0 0.0
      %511 = vmatpush.msra.mxu0 0.0
      %512 = vmatpush.msra.mxu0 0.0
      %513 = vmatpush.msra.mxu0 0.0
      %514 = vmatpush.msra.mxu0 0.0
      %515 = vmatpush.msra.mxu0 0.0
      %516 = vmatpush.msra.mxu0 0.0
      %517 = vmatpush.msra.mxu0 0.0
      %518 = vmatpush.msra.mxu0 %v422
      %519 = vmatpush.msra.mxu0 %v420
      %520 = vmatmul.f32.gmra.mxu0 %v482
      %v521 = vpop.f32.mrf.mxu0
      %v522 = vadd.f32 %v479, %v521
      %523 = vdwg.mxu0
      %v524 = vld [vmem:[%s3] sm:$0xff]
      %v525 = vld [vmem:[%s3 + $0x8] sm:$0xff]
      %v526 = vld [vmem:[%s6] sm:$0xff]
      %v527 = vld [vmem:[%s6 + $0x8] sm:$0xff]
      %529 = vset.pattern.permute.xlu0 0
      %530 = vperm.xlu0 %529, %v526
      %v531 = vpop.permute.xlu0 %530
      %534 = vset.pattern.permute.xlu0 0
      %535 = vperm.xlu0 %534, %v527
      %v536 = vpop.permute.xlu0 %535
      %v539 = vsel %vm430, %v524, 0
      %v542 = vsel %vm430, %v525, 0
      %544 = vmatpush.msra.mxu0 0.0
      %545 = vmatpush.msra.mxu0 0.0
      %546 = vmatpush.msra.mxu0 0.0
      %547 = vmatpush.msra.mxu0 0.0
      %548 = vmatpush.msra.mxu0 0.0
      %549 = vmatpush.msra.mxu0 0.0
      %550 = vmatpush.msra.mxu0 0.0
      %551 = vmatpush.msra.mxu0 0.0
      %552 = vmatpush.msra.mxu0 0.0
      %553 = vmatpush.msra.mxu0 0.0
      %554 = vmatpush.msra.mxu0 0.0
      %555 = vmatpush.msra.mxu0 0.0
      %556 = vmatpush.msra.mxu0 0.0
      %557 = vmatpush.msra.mxu0 0.0
      %558 = vmatpush.msra.mxu0 %v421
      %559 = vmatpush.msra.mxu0 %v419
      %560 = vmatmul.f32.gmra.mxu0 %v539
      %v561 = vpop.f32.mrf.mxu0
      %v562 = vadd.f32 %v531, %v561
      %563 = vmatmul.f32.gmra.mxu0 %v542
      %v564 = vpop.f32.mrf.mxu0
      %v565 = vadd.f32 %v536, %v564
      %566 = vdwg.mxu0
      %567 = vmatpush.msra.mxu0 0.0
      %568 = vmatpush.msra.mxu0 0.0
      %569 = vmatpush.msra.mxu0 0.0
      %570 = vmatpush.msra.mxu0 0.0
      %571 = vmatpush.msra.mxu0 0.0
      %572 = vmatpush.msra.mxu0 0.0
      %573 = vmatpush.msra.mxu0 0.0
      %574 = vmatpush.msra.mxu0 0.0
      %575 = vmatpush.msra.mxu0 0.0
      %576 = vmatpush.msra.mxu0 0.0
      %577 = vmatpush.msra.mxu0 0.0
      %578 = vmatpush.msra.mxu0 0.0
      %579 = vmatpush.msra.mxu0 0.0
      %580 = vmatpush.msra.mxu0 0.0
      %581 = vmatpush.msra.mxu0 %v422
      %582 = vmatpush.msra.mxu0 %v420
      %583 = vmatmul.f32.gmra.mxu0 %v539
      %v584 = vpop.f32.mrf.mxu0
      %v585 = vadd.f32 %v531, %v584
      %586 = vmatmul.f32.gmra.mxu0 %v542
      %v587 = vpop.f32.mrf.mxu0
      %v588 = vadd.f32 %v536, %v587
      %589 = vdwg.mxu0
      %v592 = vrot.slane %v472, 6
      %vm593 = vcmask 1041408
      %v594 = vsel %vm593, %v452, %v592
      %596 = vst [vmem:[%s397] sm:$0xf] %v594
      %597 = vxpose.xlu0.b32.start [1/16] %v502, 128
      %598 = vxpose.xlu0.b32.cont [2/16] 0.0, 128
      %599 = vxpose.xlu0.b32.cont [3/16] 0.0, 128
      %600 = vxpose.xlu0.b32.cont [4/16] 0.0, 128
      %601 = vxpose.xlu0.b32.cont [5/16] 0.0, 128
      %602 = vxpose.xlu0.b32.cont [6/16] 0.0, 128
      %603 = vxpose.xlu0.b32.cont [7/16] 0.0, 128
      %604 = vxpose.xlu0.b32.cont [8/16] 0.0, 128
      %605 = vxpose.xlu0.b32.cont [9/16] 0.0, 128
      %606 = vxpose.xlu0.b32.cont [10/16] 0.0, 128
      %607 = vxpose.xlu0.b32.cont [11/16] 0.0, 128
      %608 = vxpose.xlu0.b32.cont [12/16] 0.0, 128
      %609 = vxpose.xlu0.b32.cont [13/16] 0.0, 128
      %610 = vxpose.xlu0.b32.cont [14/16] 0.0, 128
      %611 = vxpose.xlu0.b32.cont [15/16] 0.0, 128
      %612 = vxpose.xlu0.b32.end [16/16] 0.0, 128
      %v613 = vpop.trf.xlu0
      %v614 = vpop.trf.xlu0
      %v615 = vpop.trf.xlu0
      %v616 = vpop.trf.xlu0
      %v617 = vpop.trf.xlu0
      %v618 = vpop.trf.xlu0
      %v619 = vpop.trf.xlu0
      %v620 = vpop.trf.xlu0
      %v621 = vpop.trf.xlu0
      %v622 = vpop.trf.xlu0
      %v623 = vpop.trf.xlu0
      %v624 = vpop.trf.xlu0
      %v625 = vpop.trf.xlu0
      %v626 = vpop.trf.xlu0
      %v627 = vpop.trf.xlu0
      %v628 = vpop.trf.xlu0
      %629 = vxpose.xlu0.b32.start [1/16] %v522, 128
      %630 = vxpose.xlu0.b32.cont [2/16] 0.0, 128
      %631 = vxpose.xlu0.b32.cont [3/16] 0.0, 128
      %632 = vxpose.xlu0.b32.cont [4/16] 0.0, 128
      %633 = vxpose.xlu0.b32.cont [5/16] 0.0, 128
      %634 = vxpose.xlu0.b32.cont [6/16] 0.0, 128
      %635 = vxpose.xlu0.b32.cont [7/16] 0.0, 128
      %636 = vxpose.xlu0.b32.cont [8/16] 0.0, 128
      %637 = vxpose.xlu0.b32.cont [9/16] 0.0, 128
      %638 = vxpose.xlu0.b32.cont [10/16] 0.0, 128
      %639 = vxpose.xlu0.b32.cont [11/16] 0.0, 128
      %640 = vxpose.xlu0.b32.cont [12/16] 0.0, 128
      %641 = vxpose.xlu0.b32.cont [13/16] 0.0, 128
      %642 = vxpose.xlu0.b32.cont [14/16] 0.0, 128
      %643 = vxpose.xlu0.b32.cont [15/16] 0.0, 128
      %644 = vxpose.xlu0.b32.end [16/16] 0.0, 128
      %v645 = vpop.trf.xlu0
      %v646 = vpop.trf.xlu0
      %v647 = vpop.trf.xlu0
      %v648 = vpop.trf.xlu0
      %v649 = vpop.trf.xlu0
      %v650 = vpop.trf.xlu0
      %v651 = vpop.trf.xlu0
      %v652 = vpop.trf.xlu0
      %v653 = vpop.trf.xlu0
      %v654 = vpop.trf.xlu0
      %v655 = vpop.trf.xlu0
      %v656 = vpop.trf.xlu0
      %v657 = vpop.trf.xlu0
      %v658 = vpop.trf.xlu0
      %v659 = vpop.trf.xlu0
      %v660 = vpop.trf.xlu0
      %vm661 = vcmask 15360
      %662 = vst.msk [vmem:[%s407] sm:$0xff] %vm661, %v613
      %663 = vst.msk [vmem:[%s407 + $0x8] sm:$0xff] %vm661, %v614
      %664 = vst.msk [vmem:[%s407 + $0x10] sm:$0xff] %vm661, %v615
      %665 = vst.msk [vmem:[%s407 + $0x18] sm:$0xff] %vm661, %v616
      %666 = vst.msk [vmem:[%s407 + $0x20] sm:$0xff] %vm661, %v617
      %667 = vst.msk [vmem:[%s407 + $0x28] sm:$0xff] %vm661, %v618
      %668 = vst.msk [vmem:[%s407 + $0x30] sm:$0xff] %vm661, %v619
      %669 = vst.msk [vmem:[%s407 + $0x38] sm:$0xff] %vm661, %v620
      %670 = vst.msk [vmem:[%s407 + $0x40] sm:$0xff] %vm661, %v621
      %671 = vst.msk [vmem:[%s407 + $0x48] sm:$0xff] %vm661, %v622
      %672 = vst.msk [vmem:[%s407 + $0x50] sm:$0xff] %vm661, %v623
      %673 = vst.msk [vmem:[%s407 + $0x58] sm:$0xff] %vm661, %v624
      %674 = vst.msk [vmem:[%s407 + $0x60] sm:$0xff] %vm661, %v625
      %675 = vst.msk [vmem:[%s407 + $0x68] sm:$0xff] %vm661, %v626
      %676 = vst.msk [vmem:[%s407 + $0x70] sm:$0xff] %vm661, %v627
      %677 = vst.msk [vmem:[%s407 + $0x78] sm:$0xff] %vm661, %v628
      %678 = vst.msk [vmem:[%s407 + $0x80] sm:$0xff] %vm661, %v645
      %679 = vst.msk [vmem:[%s407 + $0x88] sm:$0xff] %vm661, %v646
      %680 = vst.msk [vmem:[%s407 + $0x90] sm:$0xff] %vm661, %v647
      %681 = vst.msk [vmem:[%s407 + $0x98] sm:$0xff] %vm661, %v648
      %682 = vst.msk [vmem:[%s407 + $0xa0] sm:$0xff] %vm661, %v649
      %683 = vst.msk [vmem:[%s407 + $0xa8] sm:$0xff] %vm661, %v650
      %684 = vst.msk [vmem:[%s407 + $0xb0] sm:$0xff] %vm661, %v651
      %685 = vst.msk [vmem:[%s407 + $0xb8] sm:$0xff] %vm661, %v652
      %686 = vst.msk [vmem:[%s407 + $0xc0] sm:$0xff] %vm661, %v653
      %687 = vst.msk [vmem:[%s407 + $0xc8] sm:$0xff] %vm661, %v654
      %688 = vst.msk [vmem:[%s407 + $0xd0] sm:$0xff] %vm661, %v655
      %689 = vst.msk [vmem:[%s407 + $0xd8] sm:$0xff] %vm661, %v656
      %690 = vst.msk [vmem:[%s407 + $0xe0] sm:$0xff] %vm661, %v657
      %691 = vst.msk [vmem:[%s407 + $0xe8] sm:$0xff] %vm661, %v658
      %692 = vst.msk [vmem:[%s407 + $0xf0] sm:$0xff] %vm661, %v659
      %693 = vst.msk [vmem:[%s407 + $0xf8] sm:$0xff] %vm661, %v660
      %694 = vst [vmem:[%s417] sm:$0xff] %v562
      %695 = vst [vmem:[%s417 + $0x8] sm:$0xff] %v585
      %696 = vst [vmem:[%s417 + $0x10] sm:$0xff] %v565
      %697 = vst [vmem:[%s417 + $0x18] sm:$0xff] %v588
      %s698 = smul.u32 2, %s26
      %p699 = scmp.lt.s32.totalorder %s25, 1
      %s700 = scalar_select %p699, %s25, 1
      %p701 = scmp.lt.s32.totalorder %s698, 1
      %s702 = scalar_select %p701, %s698, 1
      %s703 = smul.addr %s700, 2
      %s704 = sadd.s32 %s702, %s703
      %s705 = smul.addr %s704, 2
      %s706 = scalar_lea.vmem %s7, %s705
      %s707 = smul.u32 32, %s26
      %p708 = scmp.lt.s32.totalorder %s25, 1
      %s709 = scalar_select %p708, %s25, 1
      %p710 = scmp.lt.s32.totalorder %s707, 31
      %s711 = scalar_select %p710, %s707, 31
      %s712 = smul.addr %s709, 32
      %s713 = sadd.s32 %s711, %s712
      %s714 = smul.addr %s713, 8
      %s715 = scalar_lea.vmem %s8, %s714
      %s716 = smul.u32 2, %s26
      %p717 = scmp.lt.s32.totalorder %s25, 1
      %s718 = scalar_select %p717, %s25, 1
      %p719 = scmp.lt.s32.totalorder %s716, 1
      %s720 = scalar_select %p719, %s716, 1
      %s721 = smul.addr %s718, 4
      %s722 = sadd.s32 %s720, %s721
      %s723 = smul.addr %s722, 8
      %s724 = scalar_lea.vmem %s9, %s723
      // Predicated region
      $region49: #{pam_forward.2} parent=47 // pred_check
        %p725 = pneg %p207
      $region50: #{pam_forward.2} parent=47 // pred_check_branch
        %727 = sbr.rel (%p725) target = $region52
      $region51: #{pam_forward.2} parent=47 // pred_region
        %s728 = smul.u32 2, %s26
      $region52: #{pam_forward.2} parent=47 // pred_fallthru
        _
      // Predicated region
      $region53: #{pam_forward.2} parent=47 // pred_check
        %p729 = pneg %p235
      $region54: #{pam_forward.2} parent=47 // pred_check_branch
        %731 = sbr.rel (%p729) target = $region56
      $region55: #{pam_forward.2} parent=47 // pred_region
        %s732 = smul.u32 32, %s26
      $region56: #{pam_forward.2} parent=47 // pred_fallthru
        _
      // Predicated region
      $region57: #{pam_forward.2} parent=47 // pred_check
        %p733 = pneg %p263
      $region58: #{pam_forward.2} parent=47 // pred_check_branch
        %735 = sbr.rel (%p733) target = $region60
      $region59: #{pam_forward.2} parent=47 // pred_region
        %s736 = smul.u32 2, %s26
      $region60: #{pam_forward.2} parent=47 // pred_fallthru
        _
    $region48: #{pam_forward.2} parent=5 // pred_fallthru
      _
    %p737 = scmp.le.s32.totalorder 2, %s16
    // Predicated region
    $region61: #{pam_forward.2} parent=5 // pred_check
      %p738 = pneg %p737
    $region62: #{pam_forward.2} parent=5 // pred_check_branch
      %740 = sbr.rel (%p738) target = $region64
    $region63: #{pam_forward.2} parent=5 // pred_region
      %s741 = ssub.s32 %s16, 2
      // Predicated region
      $region65: #{pam_forward.2} parent=63 // pred_check
        %p742 = pneg %p213
      $region66: #{pam_forward.2} parent=63 // pred_check_branch
        %744 = sbr.rel (%p742) target = $region68
      $region67: #{pam_forward.2} parent=63 // pred_region
        %s745 = smul.u32 2, %s28
        %p746 = scmp.lt.s32.totalorder %s27, 1
        %s747 = scalar_select %p746, %s27, 1
        %p748 = scmp.lt.s32.totalorder %s745, 1
        %s749 = scalar_select %p748, %s745, 1
        %s750 = smul.addr %s747, 2
        %s751 = sadd.s32 %s749, %s750
        %s752 = smul.addr %s751, 2
        %s753 = scalar_lea.vmem %s7, %s752
      $region68: #{pam_forward.2} parent=63 // pred_fallthru
        _
      // Predicated region
      $region69: #{pam_forward.2} parent=63 // pred_check
        %p754 = pneg %p241
      $region70: #{pam_forward.2} parent=63 // pred_check_branch
        %756 = sbr.rel (%p754) target = $region72
      $region71: #{pam_forward.2} parent=63 // pred_region
        %s757 = smul.u32 32, %s28
        %p758 = scmp.lt.s32.totalorder %s27, 1
        %s759 = scalar_select %p758, %s27, 1
        %p760 = scmp.lt.s32.totalorder %s757, 31
        %s761 = scalar_select %p760, %s757, 31
        %s762 = smul.addr %s759, 32
        %s763 = sadd.s32 %s761, %s762
        %s764 = smul.addr %s763, 8
        %s765 = scalar_lea.vmem %s8, %s764
      $region72: #{pam_forward.2} parent=63 // pred_fallthru
        _
      // Predicated region
      $region73: #{pam_forward.2} parent=63 // pred_check
        %p766 = pneg %p269
      $region74: #{pam_forward.2} parent=63 // pred_check_branch
        %768 = sbr.rel (%p766) target = $region76
      $region75: #{pam_forward.2} parent=63 // pred_region
        %s769 = smul.u32 2, %s28
        %p770 = scmp.lt.s32.totalorder %s27, 1
        %s771 = scalar_select %p770, %s27, 1
        %p772 = scmp.lt.s32.totalorder %s769, 1
        %s773 = scalar_select %p772, %s769, 1
        %s774 = smul.addr %s771, 4
        %s775 = sadd.s32 %s773, %s774
        %s776 = smul.addr %s775, 8
        %s777 = scalar_lea.vmem %s9, %s776
      $region76: #{pam_forward.2} parent=63 // pred_fallthru
        _
    $region64: #{pam_forward.2} parent=5 // pred_fallthru
      _
  $region6: #{pam_forward.2} parent=0 // loop_footer
    %s20 = sadd.s32 1, %s16
  $region7: #{pam_forward.2} parent=0 // loop_footer_branch
    %15 = sbr.rel target = $region3
  $region8: #{pam_forward.2} parent=0 // loop_exit
    _

// kernel: pam_forward.3
$region0: #{pam_forward.3}
  #allocation0 [shape = 'u32[]', space=smem, size = 0x4, offset = 0x4, fixed_abs, tag = 'smem constant byte address 0x4 - core index']
  #allocation1 [shape = 'u32[72,128]{1,0:T(1,128)}', space=vmem, size = 0x9000, scoped, tag = 'internal scratch']
  #allocation2 [shape = 'f32[1,256]{1,0:T(1,128)}', space=vmem, size = 0x400, scoped, tag = 'scratch operand']
  #allocation3 [shape = 'f32[1,256]{1,0:T(1,128)}', space=vmem, size = 0x400, scoped, tag = 'scratch operand']
  #allocation4 [shape = 'f32[16,256]{1,0:T(8,128)}', space=vmem, size = 0x4000, scoped, tag = 'scratch operand']
  %s0 = inlined_call_operand.vmem [shape: f32[2,2,256], index: 0, kind: input, shape index: {}]
  %s1 = inlined_call_operand.vmem [shape: f32[2,256,2], index: 1, kind: input, shape index: {}]
  %s2 = inlined_call_operand.vmem [shape: f32[2,16,256], index: 2, kind: input, shape index: {}]
  %s3 = inlined_call_operand.vmem [shape: f32[2,16,256], index: 3, kind: output, shape index: {}]
  %s4 = sld [smem:[#allocation0]]
  $region53: #{pam_forward.3} parent=0
    _
  %s6 = ssub.s32 1, %s4
  %s7 = scalar_select 0, %s6, %s4
  loop: start=0, step=1, limit=4
  $region2: #{pam_forward.3} parent=0 // loop_pre_header
    _
  $region3: #{pam_forward.3} parent=0 // loop_header
    %s9 = sphi 0, %s13
    %p10 = scmp.ge.s32.totalorder %s9, 4
    %s16 = sphi 0, %s35
    %s17 = sphi 0, %s31
    %s18 = sphi 0, %s27
    %s19 = sphi 0, %s16
    %s20 = sphi 0, %s17
    %s21 = sphi 0, %s18
    %s22 = sphi 0, %s19
    %s23 = sphi 0, %s20
    %s24 = sphi 0, %s21
    %s40 = sphi 0, %s42
    %s43 = sphi 0, %s40
    %s44 = sphi 0, %s43
    %s60 = sphi 0, %s44
    %s68 = sphi 0, %s70
    %s71 = sphi 0, %s68
    %s72 = sphi 0, %s71
    %s88 = sphi 0, %s72
    %s96 = sphi 0, %s98
    %s99 = sphi 0, %s96
    %s100 = sphi 0, %s99
    %s116 = sphi 0, %s100
    %s124 = sphi 0, %s126
    %s127 = sphi 0, %s124
    %s128 = sphi 0, %s127
    %s144 = sphi 0, %s128
  $region4: #{pam_forward.3} parent=0 // loop_header_branch
    %12 = sbr.rel (%p10) target = $region8
  $region5: #{pam_forward.3} parent=0 // loop_body
    %s14 = ssub.s32 %s9, 1
    %s15 = ssub.s32 %s9, 2
    %s25 = sadd.s32 1, %s18
    %p26 = scmp.ge.s32.totalorder %s25, 1
    %s27 = scalar_select %p26, 0, %s25
    %s28 = sadd.s32 1, %s17
    %s29 = scalar_select %p26, %s28, %s17
    %p30 = scmp.ge.s32.totalorder %s29, 1
    %s31 = scalar_select %p30, 0, %s29
    %s32 = sadd.s32 1, %s16
    %s33 = scalar_select %p30, %s32, %s16
    %p34 = scmp.ge.s32.totalorder %s33, 2
    %s35 = scalar_select %p34, 0, %s33
    %s36 = ssub.s32 %s16, %s35
    %s37 = ssub.s32 %s17, %s31
    %s38 = sor.u32 %s36, %s37
    %p39 = scmp.eq.s32.totalorder %s38, 0
    %s41 = sadd.s32 %s40, 1
    %s42 = scalar_select %p39, %s40, %s41
    %p45 = pneg %p39
    %p46 = scmp.eq.s32.totalorder %s9, 1
    %p47 = por %p45, %p46
    %p48 = scmp.ne.s32.totalorder %s40, %s43
    %p49 = scmp.eq.s32.totalorder %s9, 0
    %p50 = por %p48, %p49
    %p51 = scmp.ne.s32.totalorder %s40, %s43
    %p52 = scmp.eq.s32.totalorder %s14, 1
    %p53 = por %p51, %p52
    %p54 = scmp.ne.s32.totalorder %s43, %s44
    %p55 = scmp.eq.s32.totalorder %s14, 0
    %p56 = por %p54, %p55
    %p57 = scmp.ne.s32.totalorder %s43, %s44
    %p58 = scmp.eq.s32.totalorder %s15, 1
    %p59 = por %p57, %p58
    %p61 = scmp.ne.s32.totalorder %s44, %s60
    %p62 = scmp.eq.s32.totalorder %s15, 0
    %p63 = por %p61, %p62
    %s64 = ssub.s32 %s16, %s35
    %s65 = ssub.s32 %s18, %s27
    %s66 = sor.u32 %s64, %s65
    %p67 = scmp.eq.s32.totalorder %s66, 0
    %s69 = sadd.s32 %s68, 1
    %s70 = scalar_select %p67, %s68, %s69
    %p73 = pneg %p67
    %p74 = scmp.eq.s32.totalorder %s9, 1
    %p75 = por %p73, %p74
    %p76 = scmp.ne.s32.totalorder %s68, %s71
    %p77 = scmp.eq.s32.totalorder %s9, 0
    %p78 = por %p76, %p77
    %p79 = scmp.ne.s32.totalorder %s68, %s71
    %p80 = scmp.eq.s32.totalorder %s14, 1
    %p81 = por %p79, %p80
    %p82 = scmp.ne.s32.totalorder %s71, %s72
    %p83 = scmp.eq.s32.totalorder %s14, 0
    %p84 = por %p82, %p83
    %p85 = scmp.ne.s32.totalorder %s71, %s72
    %p86 = scmp.eq.s32.totalorder %s15, 1
    %p87 = por %p85, %p86
    %p89 = scmp.ne.s32.totalorder %s72, %s88
    %p90 = scmp.eq.s32.totalorder %s15, 0
    %p91 = por %p89, %p90
    %s92 = ssub.s32 %s16, %s35
    %s93 = ssub.s32 %s18, %s27
    %s94 = sor.u32 %s92, %s93
    %p95 = scmp.eq.s32.totalorder %s94, 0
    %s97 = sadd.s32 %s96, 1
    %s98 = scalar_select %p95, %s96, %s97
    %p101 = pneg %p95
    %p102 = scmp.eq.s32.totalorder %s9, 1
    %p103 = por %p101, %p102
    %p104 = scmp.ne.s32.totalorder %s96, %s99
    %p105 = scmp.eq.s32.totalorder %s9, 0
    %p106 = por %p104, %p105
    %p107 = scmp.ne.s32.totalorder %s96, %s99
    %p108 = scmp.eq.s32.totalorder %s14, 1
    %p109 = por %p107, %p108
    %p110 = scmp.ne.s32.totalorder %s99, %s100
    %p111 = scmp.eq.s32.totalorder %s14, 0
    %p112 = por %p110, %p111
    %p113 = scmp.ne.s32.totalorder %s99, %s100
    %p114 = scmp.eq.s32.totalorder %s15, 1
    %p115 = por %p113, %p114
    %p117 = scmp.ne.s32.totalorder %s100, %s116
    %p118 = scmp.eq.s32.totalorder %s15, 0
    %p119 = por %p117, %p118
    %s120 = ssub.s32 %s16, %s35
    %s121 = ssub.s32 %s17, %s31
    %s122 = sor.u32 %s120, %s121
    %p123 = scmp.eq.s32.totalorder %s122, 0
    %s125 = sadd.s32 %s124, 1
    %s126 = scalar_select %p123, %s124, %s125
    %p129 = pneg %p123
    %p130 = scmp.eq.s32.totalorder %s9, 1
    %p131 = por %p129, %p130
    %p132 = scmp.ne.s32.totalorder %s124, %s127
    %p133 = scmp.eq.s32.totalorder %s9, 0
    %p134 = por %p132, %p133
    %p135 = scmp.ne.s32.totalorder %s124, %s127
    %p136 = scmp.eq.s32.totalorder %s14, 1
    %p137 = por %p135, %p136
    %p138 = scmp.ne.s32.totalorder %s127, %s128
    %p139 = scmp.eq.s32.totalorder %s14, 0
    %p140 = por %p138, %p139
    %p141 = scmp.ne.s32.totalorder %s127, %s128
    %p142 = scmp.eq.s32.totalorder %s15, 1
    %p143 = por %p141, %p142
    %p145 = scmp.ne.s32.totalorder %s128, %s144
    %p146 = scmp.eq.s32.totalorder %s15, 0
    %p147 = por %p145, %p146
    %p148 = scmp.le.s32.totalorder 1, %s9
    %p149 = scmp.lt.s32.totalorder %s9, 3
    %p150 = pnand %p148, %p149
    %p151 = pneg %p150
    // Predicated region
    $region9: #{pam_forward.3} parent=5 // pred_check
      _
    $region10: #{pam_forward.3} parent=5 // pred_check_branch
      %153 = sbr.rel (%p150) target = $region12
    $region11: #{pam_forward.3} parent=5 // pred_region
      %s154 = ssub.s32 %s9, 1
    $region12: #{pam_forward.3} parent=5 // pred_fallthru
      _
    %p155 = scmp.lt.s32.totalorder %s9, 2
    // Predicated region
    $region13: #{pam_forward.3} parent=5 // pred_check
      %p156 = pneg %p155
    $region14: #{pam_forward.3} parent=5 // pred_check_branch
      %158 = sbr.rel (%p156) target = $region16
    $region15: #{pam_forward.3} parent=5 // pred_region
      // Predicated region
      $region17: #{pam_forward.3} parent=15 // pred_check
        %p159 = pneg %p50
      $region18: #{pam_forward.3} parent=15 // pred_check_branch
        %161 = sbr.rel (%p159) target = $region20
      $region19: #{pam_forward.3} parent=15 // pred_region
        %s162 = smul.u32 2, %s17
        %p163 = scmp.lt.s32.totalorder %s16, 1
        %s164 = scalar_select %p163, %s16, 1
        %p165 = scmp.lt.s32.totalorder %s162, 1
        %s166 = scalar_select %p165, %s162, 1
        %s167 = smul.addr %s164, 2
        %s168 = sadd.s32 %s166, %s167
        %s169 = smul.addr %s168, 2
        %s170 = scalar_lea.vmem %s0, %s169
        %s171 = smul.u32 2, %s17
      $region20: #{pam_forward.3} parent=15 // pred_fallthru
        _
      // Predicated region
      $region21: #{pam_forward.3} parent=15 // pred_check
        %p172 = pneg %p78
      $region22: #{pam_forward.3} parent=15 // pred_check_branch
        %174 = sbr.rel (%p172) target = $region24
      $region23: #{pam_forward.3} parent=15 // pred_region
        %s175 = smul.u32 32, %s18
        %p176 = scmp.lt.s32.totalorder %s16, 1
        %s177 = scalar_select %p176, %s16, 1
        %p178 = scmp.lt.s32.totalorder %s175, 31
        %s179 = scalar_select %p178, %s175, 31
        %s180 = smul.addr %s177, 32
        %s181 = sadd.s32 %s179, %s180
        %s182 = smul.addr %s181, 8
        %s183 = scalar_lea.vmem %s1, %s182
        %s184 = smul.u32 32, %s18
      $region24: #{pam_forward.3} parent=15 // pred_fallthru
        _
      // Predicated region
      $region25: #{pam_forward.3} parent=15 // pred_check
        %p185 = pneg %p106
      $region26: #{pam_forward.3} parent=15 // pred_check_branch
        %187 = sbr.rel (%p185) target = $region28
      $region27: #{pam_forward.3} parent=15 // pred_region
        %s188 = smul.u32 2, %s18
        %p189 = scmp.lt.s32.totalorder %s16, 1
        %s190 = scalar_select %p189, %s16, 1
        %p191 = scmp.lt.s32.totalorder %s188, 1
        %s192 = scalar_select %p191, %s188, 1
        %s193 = smul.addr %s190, 4
        %s194 = sadd.s32 %s192, %s193
        %s195 = smul.addr %s194, 8
        %s196 = scalar_lea.vmem %s2, %s195
        %s197 = smul.u32 2, %s18
      $region28: #{pam_forward.3} parent=15 // pred_fallthru
        _
    $region16: #{pam_forward.3} parent=5 // pred_fallthru
      _
    %p198 = scmp.le.s32.totalorder 1, %s9
    %p199 = scmp.lt.s32.totalorder %s9, 3
    %p200 = pnand %p198, %p199
    %p201 = pneg %p200
    // Predicated region
    $region29: #{pam_forward.3} parent=5 // pred_check
      _
    $region30: #{pam_forward.3} parent=5 // pred_check_branch
      %203 = sbr.rel (%p200) target = $region32
    $region31: #{pam_forward.3} parent=5 // pred_region
      %s204 = ssub.s32 %s9, 1
      %s205 = smul.u32 2, %s20
      %p206 = scmp.lt.s32.totalorder %s19, 1
      %s207 = scalar_select %p206, %s19, 1
      %p208 = scmp.lt.s32.totalorder %s205, 1
      %s209 = scalar_select %p208, %s205, 1
      %s210 = smul.addr %s207, 2
      %s211 = sadd.s32 %s209, %s210
      %s212 = smul.addr %s211, 2
      %s213 = scalar_lea.vmem %s0, %s212
      %p214 = pneg %p56
      %p215 = pneg %p53
      %s216 = smul.u32 32, %s21
      %p217 = scmp.lt.s32.totalorder %s19, 1
      %s218 = scalar_select %p217, %s19, 1
      %p219 = scmp.lt.s32.totalorder %s216, 31
      %s220 = scalar_select %p219, %s216, 31
      %s221 = smul.addr %s218, 32
      %s222 = sadd.s32 %s220, %s221
      %s223 = smul.addr %s222, 8
      %s224 = scalar_lea.vmem %s1, %s223
      %p225 = pneg %p84
      %p226 = pneg %p81
      %s227 = smul.u32 2, %s21
      %p228 = scmp.lt.s32.totalorder %s19, 1
      %s229 = scalar_select %p228, %s19, 1
      %p230 = scmp.lt.s32.totalorder %s227, 1
      %s231 = scalar_select %p230, %s227, 1
      %s232 = smul.addr %s229, 4
      %s233 = sadd.s32 %s231, %s232
      %s234 = smul.addr %s233, 8
      %s235 = scalar_lea.vmem %s2, %s234
      %p236 = pneg %p112
      %p237 = pneg %p109
      %p238 = pneg %p140
      %p239 = pneg %p137
      %s240 = smul.u32 2, %s20
      %p241 = scmp.lt.s32.totalorder %s19, 1
      %s242 = scalar_select %p241, %s19, 1
      %p243 = scmp.lt.s32.totalorder %s240, 1
      %s244 = scalar_select %p243, %s240, 1
      %s245 = smul.addr %s242, 4
      %s246 = sadd.s32 %s244, %s245
      %s247 = smul.addr %s246, 8
      %s248 = scalar_lea.vmem %s3, %s247
      %s249 = smul.u32 2, %s20
      %p250 = scmp.lt.s32.totalorder %s19, 1
      %s251 = scalar_select %p250, %s19, 1
      %p252 = scmp.lt.s32.totalorder %s249, 1
      %s253 = scalar_select %p252, %s249, 1
      %s254 = smul.addr %s251, 2
      %s255 = sadd.s32 %s253, %s254
      %s256 = smul.addr %s255, 2
      %s257 = scalar_lea.vmem %s0, %s256
      %s258 = smul.u32 2, %s20
      %s259 = smul.u32 32, %s21
      %p260 = scmp.lt.s32.totalorder %s19, 1
      %s261 = scalar_select %p260, %s19, 1
      %p262 = scmp.lt.s32.totalorder %s259, 31
      %s263 = scalar_select %p262, %s259, 31
      %s264 = smul.addr %s261, 32
      %s265 = sadd.s32 %s263, %s264
      %s266 = smul.addr %s265, 8
      %s267 = scalar_lea.vmem %s1, %s266
      %s268 = smul.u32 32, %s21
      %s269 = smul.u32 2, %s21
      %p270 = scmp.lt.s32.totalorder %s19, 1
      %s271 = scalar_select %p270, %s19, 1
      %p272 = scmp.lt.s32.totalorder %s269, 1
      %s273 = scalar_select %p272, %s269, 1
      %s274 = smul.addr %s271, 4
      %s275 = sadd.s32 %s273, %s274
      %s276 = smul.addr %s275, 8
      %s277 = scalar_lea.vmem %s2, %s276
      %s278 = smul.u32 2, %s21
      %s279 = smul.u32 2, %s20
      %p280 = scmp.lt.s32.totalorder %s19, 1
      %s281 = scalar_select %p280, %s19, 1
      %p282 = scmp.lt.s32.totalorder %s279, 1
      %s283 = scalar_select %p282, %s279, 1
      %s284 = smul.addr %s281, 4
      %s285 = sadd.s32 %s283, %s284
      %s286 = smul.addr %s285, 8
      %s287 = scalar_lea.vmem %s3, %s286
      %s288 = smul.u32 2, %s20
      %p289 = scmp.eq.s32.totalorder %s21, 0
      // Predicated region
      $region33: #{pam_forward.3} parent=31 // pred_check
        %p290 = pneg %p289
      $region34: #{pam_forward.3} parent=31 // pred_check_branch
        %292 = sbr.rel (%p290) target = $region36
      $region35: #{pam_forward.3} parent=31 // pred_region
        %v293 = vlaneseq
        %vm294 = vcmp.ge.s32.totalorder %v293, 0
        %vm295 = vcmp.lt.s32.totalorder %v293, 256
        %vm296 = vmand %vm294, %vm295
        %297 = vst.msk [vmem:[#allocation2] sm:$0x3] %vm296, -inf
        %298 = vst.msk [vmem:[#allocation3] sm:$0x3] %vm296, 0.0
        %299 = vst [vmem:[#allocation4] sm:$0xff] 0.0
        %300 = vst [vmem:[#allocation4 + $0x8] sm:$0xff] 0.0
        %301 = vst [vmem:[#allocation4 + $0x10] sm:$0xff] 0.0
        %302 = vst [vmem:[#allocation4 + $0x18] sm:$0xff] 0.0
      $region36: #{pam_forward.3} parent=31 // pred_fallthru
        _
      %v303 = vld [vmem:[%s257] sm:$0xf]
      %v304 = vld [vmem:[%s267] sm:$0xff]
      %v305 = vld [vmem:[%s267 + $0x8] sm:$0xff]
      %v306 = vld [vmem:[%s267 + $0x10] sm:$0xff]
      %v307 = vld [vmem:[%s267 + $0x18] sm:$0xff]
      %v308 = vld [vmem:[%s267 + $0x20] sm:$0xff]
      %v309 = vld [vmem:[%s267 + $0x28] sm:$0xff]
      %v310 = vld [vmem:[%s267 + $0x30] sm:$0xff]
      %v311 = vld [vmem:[%s267 + $0x38] sm:$0xff]
      %v312 = vld [vmem:[%s267 + $0x40] sm:$0xff]
      %v313 = vld [vmem:[%s267 + $0x48] sm:$0xff]
      %v314 = vld [vmem:[%s267 + $0x50] sm:$0xff]
      %v315 = vld [vmem:[%s267 + $0x58] sm:$0xff]
      %v316 = vld [vmem:[%s267 + $0x60] sm:$0xff]
      %v317 = vld [vmem:[%s267 + $0x68] sm:$0xff]
      %v318 = vld [vmem:[%s267 + $0x70] sm:$0xff]
      %v319 = vld [vmem:[%s267 + $0x78] sm:$0xff]
      %v320 = vld [vmem:[%s267 + $0x80] sm:$0xff]
      %v321 = vld [vmem:[%s267 + $0x88] sm:$0xff]
      %v322 = vld [vmem:[%s267 + $0x90] sm:$0xff]
      %v323 = vld [vmem:[%s267 + $0x98] sm:$0xff]
      %v324 = vld [vmem:[%s267 + $0xa0] sm:$0xff]
      %v325 = vld [vmem:[%s267 + $0xa8] sm:$0xff]
      %v326 = vld [vmem:[%s267 + $0xb0] sm:$0xff]
      %v327 = vld [vmem:[%s267 + $0xb8] sm:$0xff]
      %v328 = vld [vmem:[%s267 + $0xc0] sm:$0xff]
      %v329 = vld [vmem:[%s267 + $0xc8] sm:$0xff]
      %v330 = vld [vmem:[%s267 + $0xd0] sm:$0xff]
      %v331 = vld [vmem:[%s267 + $0xd8] sm:$0xff]
      %v332 = vld [vmem:[%s267 + $0xe0] sm:$0xff]
      %v333 = vld [vmem:[%s267 + $0xe8] sm:$0xff]
      %v334 = vld [vmem:[%s267 + $0xf0] sm:$0xff]
      %v335 = vld [vmem:[%s267 + $0xf8] sm:$0xff]
      %v336 = vld [vmem:[%s277] sm:$0xff]
      %v337 = vld [vmem:[%s277 + $0x8] sm:$0xff]
      %v338 = vld [vmem:[%s277 + $0x10] sm:$0xff]
      %v339 = vld [vmem:[%s277 + $0x18] sm:$0xff]
      %341 = vst [vmem:[#allocation1] ss:$4 sm:$0xff] %v303
      %v342 = vld.sshfl [vmem:[#allocation1] sm:$0xff pattern:$0x73625140]
      %v343 = vld.sshfl [vmem:[#allocation1 + $0x8] sm:$0xff pattern:$0x73625140]
      %vm344 = vcmask 15360
      %v346 = vsel %vm344, %v304, 0
      %v349 = vsel %vm344, %v305, 0
      %v352 = vsel %vm344, %v306, 0
      %v355 = vsel %vm344, %v307, 0
      %v358 = vsel %vm344, %v308, 0
      %v361 = vsel %vm344, %v309, 0
      %v364 = vsel %vm344, %v310, 0
      %v367 = vsel %vm344, %v311, 0
      %v370 = vsel %vm344, %v312, 0
      %v373 = vsel %vm344, %v313, 0
      %v376 = vsel %vm344, %v314, 0
      %v379 = vsel %vm344, %v315, 0
      %v382 = vsel %vm344, %v316, 0
      %v385 = vsel %vm344, %v317, 0
      %v388 = vsel %vm344, %v318, 0
      %v391 = vsel %vm344, %v319, 0
      %v394 = vsel %vm344, %v320, 0
      %v397 = vsel %vm344, %v321, 0
      %v400 = vsel %vm344, %v322, 0
      %v403 = vsel %vm344, %v323, 0
      %v406 = vsel %vm344, %v324, 0
      %v409 = vsel %vm344, %v325, 0
      %v412 = vsel %vm344, %v326, 0
      %v415 = vsel %vm344, %v327, 0
      %v418 = vsel %vm344, %v328, 0
      %v421 = vsel %vm344, %v329, 0
      %v424 = vsel %vm344, %v330, 0
      %v427 = vsel %vm344, %v331, 0
      %v430 = vsel %vm344, %v332, 0
      %v433 = vsel %vm344, %v333, 0
      %v436 = vsel %vm344, %v334, 0
      %v439 = vsel %vm344, %v335, 0
      %vm441 = vcmask 1041408
      %v442 = vsel %vm441, %v342, 0
      %v444 = vsel %vm441, %v343, 0
      %446 = vmatpush.msra.mxu0 0.0
      %447 = vmatpush.msra.mxu0 0.0
      %448 = vmatpush.msra.mxu0 0.0
      %449 = vmatpush.msra.mxu0 0.0
      %450 = vmatpush.msra.mxu0 0.0
      %451 = vmatpush.msra.mxu0 0.0
      %452 = vmatpush.msra.mxu0 0.0
      %453 = vmatpush.msra.mxu0 0.0
      %454 = vmatpush.msra.mxu0 0.0
      %455 = vmatpush.msra.mxu0 0.0
      %456 = vmatpush.msra.mxu0 0.0
      %457 = vmatpush.msra.mxu0 0.0
      %458 = vmatpush.msra.mxu0 0.0
      %459 = vmatpush.msra.mxu0 0.0
      %460 = vmatpush.msra.mxu0 0.0
      %461 = vmatpush.msra.mxu0 %v442
      %462 = vmatmul.f32.gmra.mxu0 %v346
      %v463 = vpop.f32.mrf.mxu0
      %v464 = vadd.f32 0.0, %v463
      %465 = vmatmul.f32.gmra.mxu0 %v349
      %v466 = vpop.f32.mrf.mxu0
      %v467 = vadd.f32 0.0, %v466
      %468 = vmatmul.f32.gmra.mxu0 %v352
      %v469 = vpop.f32.mrf.mxu0
      %v470 = vadd.f32 0.0, %v469
      %471 = vmatmul.f32.gmra.mxu0 %v355
      %v472 = vpop.f32.mrf.mxu0
      %v473 = vadd.f32 0.0, %v472
      %474 = vmatmul.f32.gmra.mxu0 %v358
      %v475 = vpop.f32.mrf.mxu0
      %v476 = vadd.f32 0.0, %v475
      %477 = vmatmul.f32.gmra.mxu0 %v361
      %v478 = vpop.f32.mrf.mxu0
      %v479 = vadd.f32 0.0, %v478
      %480 = vmatmul.f32.gmra.mxu0 %v364
      %v481 = vpop.f32.mrf.mxu0
      %v482 = vadd.f32 0.0, %v481
      %483 = vmatmul.f32.gmra.mxu0 %v367
      %v484 = vpop.f32.mrf.mxu0
      %v485 = vadd.f32 0.0, %v484
      %486 = vmatmul.f32.gmra.mxu0 %v370
      %v487 = vpop.f32.mrf.mxu0
      %v488 = vadd.f32 0.0, %v487
      %489 = vmatmul.f32.gmra.mxu0 %v373
      %v490 = vpop.f32.mrf.mxu0
      %v491 = vadd.f32 0.0, %v490
      %492 = vmatmul.f32.gmra.mxu0 %v376
      %v493 = vpop.f32.mrf.mxu0
      %v494 = vadd.f32 0.0, %v493
      %495 = vmatmul.f32.gmra.mxu0 %v379
      %v496 = vpop.f32.mrf.mxu0
      %v497 = vadd.f32 0.0, %v496
      %498 = vmatmul.f32.gmra.mxu0 %v382
      %v499 = vpop.f32.mrf.mxu0
      %v500 = vadd.f32 0.0, %v499
      %501 = vmatmul.f32.gmra.mxu0 %v385
      %v502 = vpop.f32.mrf.mxu0
      %v503 = vadd.f32 0.0, %v502
      %504 = vmatmul.f32.gmra.mxu0 %v388
      %v505 = vpop.f32.mrf.mxu0
      %v506 = vadd.f32 0.0, %v505
      %507 = vmatmul.f32.gmra.mxu0 %v391
      %v508 = vpop.f32.mrf.mxu0
      %v509 = vadd.f32 0.0, %v508
      %510 = vmatmul.f32.gmra.mxu0 %v394
      %v511 = vpop.f32.mrf.mxu0
      %v512 = vadd.f32 0.0, %v511
      %513 = vmatmul.f32.gmra.mxu0 %v397
      %v514 = vpop.f32.mrf.mxu0
      %v515 = vadd.f32 0.0, %v514
      %516 = vmatmul.f32.gmra.mxu0 %v400
      %v517 = vpop.f32.mrf.mxu0
      %v518 = vadd.f32 0.0, %v517
      %519 = vmatmul.f32.gmra.mxu0 %v403
      %v520 = vpop.f32.mrf.mxu0
      %v521 = vadd.f32 0.0, %v520
      %522 = vmatmul.f32.gmra.mxu0 %v406
      %v523 = vpop.f32.mrf.mxu0
      %v524 = vadd.f32 0.0, %v523
      %525 = vmatmul.f32.gmra.mxu0 %v409
      %v526 = vpop.f32.mrf.mxu0
      %v527 = vadd.f32 0.0, %v526
      %528 = vmatmul.f32.gmra.mxu0 %v412
      %v529 = vpop.f32.mrf.mxu0
      %v530 = vadd.f32 0.0, %v529
      %531 = vmatmul.f32.gmra.mxu0 %v415
      %v532 = vpop.f32.mrf.mxu0
      %v533 = vadd.f32 0.0, %v532
      %534 = vmatmul.f32.gmra.mxu0 %v418
      %v535 = vpop.f32.mrf.mxu0
      %v536 = vadd.f32 0.0, %v535
      %537 = vmatmul.f32.gmra.mxu0 %v421
      %v538 = vpop.f32.mrf.mxu0
      %v539 = vadd.f32 0.0, %v538
      %540 = vmatmul.f32.gmra.mxu0 %v424
      %v541 = vpop.f32.mrf.mxu0
      %v542 = vadd.f32 0.0, %v541
      %543 = vmatmul.f32.gmra.mxu0 %v427
      %v544 = vpop.f32.mrf.mxu0
      %v545 = vadd.f32 0.0, %v544
      %546 = vmatmul.f32.gmra.mxu0 %v430
      %v547 = vpop.f32.mrf.mxu0
      %v548 = vadd.f32 0.0, %v547
      %549 = vmatmul.f32.gmra.mxu0 %v433
      %v550 = vpop.f32.mrf.mxu0
      %v551 = vadd.f32 0.0, %v550
      %552 = vmatmul.f32.gmra.mxu0 %v436
      %v553 = vpop.f32.mrf.mxu0
      %v554 = vadd.f32 0.0, %v553
      %555 = vmatmul.f32.gmra.mxu0 %v439
      %v556 = vpop.f32.mrf.mxu0
      %v557 = vadd.f32 0.0, %v556
      %558 = vdwg.mxu0
      %559 = vmatpush.msra.mxu0 0.0
      %560 = vmatpush.msra.mxu0 0.0
      %561 = vmatpush.msra.mxu0 0.0
      %562 = vmatpush.msra.mxu0 0.0
      %563 = vmatpush.msra.mxu0 0.0
      %564 = vmatpush.msra.mxu0 0.0
      %565 = vmatpush.msra.mxu0 0.0
      %566 = vmatpush.msra.mxu0 0.0
      %567 = vmatpush.msra.mxu0 0.0
      %568 = vmatpush.msra.mxu0 0.0
      %569 = vmatpush.msra.mxu0 0.0
      %570 = vmatpush.msra.mxu0 0.0
      %571 = vmatpush.msra.mxu0 0.0
      %572 = vmatpush.msra.mxu0 0.0
      %573 = vmatpush.msra.mxu0 0.0
      %574 = vmatpush.msra.mxu0 %v444
      %575 = vmatmul.f32.gmra.mxu0 %v346
      %v576 = vpop.f32.mrf.mxu0
      %v577 = vadd.f32 0.0, %v576
      %578 = vmatmul.f32.gmra.mxu0 %v349
      %v579 = vpop.f32.mrf.mxu0
      %v580 = vadd.f32 0.0, %v579
      %581 = vmatmul.f32.gmra.mxu0 %v352
      %v582 = vpop.f32.mrf.mxu0
      %v583 = vadd.f32 0.0, %v582
      %584 = vmatmul.f32.gmra.mxu0 %v355
      %v585 = vpop.f32.mrf.mxu0
      %v586 = vadd.f32 0.0, %v585
      %587 = vmatmul.f32.gmra.mxu0 %v358
      %v588 = vpop.f32.mrf.mxu0
      %v589 = vadd.f32 0.0, %v588
      %590 = vmatmul.f32.gmra.mxu0 %v361
      %v591 = vpop.f32.mrf.mxu0
      %v592 = vadd.f32 0.0, %v591
      %593 = vmatmul.f32.gmra.mxu0 %v364
      %v594 = vpop.f32.mrf.mxu0
      %v595 = vadd.f32 0.0, %v594
      %596 = vmatmul.f32.gmra.mxu0 %v367
      %v597 = vpop.f32.mrf.mxu0
      %v598 = vadd.f32 0.0, %v597
      %599 = vmatmul.f32.gmra.mxu0 %v370
      %v600 = vpop.f32.mrf.mxu0
      %v601 = vadd.f32 0.0, %v600
      %602 = vmatmul.f32.gmra.mxu0 %v373
      %v603 = vpop.f32.mrf.mxu0
      %v604 = vadd.f32 0.0, %v603
      %605 = vmatmul.f32.gmra.mxu0 %v376
      %v606 = vpop.f32.mrf.mxu0
      %v607 = vadd.f32 0.0, %v606
      %608 = vmatmul.f32.gmra.mxu0 %v379
      %v609 = vpop.f32.mrf.mxu0
      %v610 = vadd.f32 0.0, %v609
      %611 = vmatmul.f32.gmra.mxu0 %v382
      %v612 = vpop.f32.mrf.mxu0
      %v613 = vadd.f32 0.0, %v612
      %614 = vmatmul.f32.gmra.mxu0 %v385
      %v615 = vpop.f32.mrf.mxu0
      %v616 = vadd.f32 0.0, %v615
      %617 = vmatmul.f32.gmra.mxu0 %v388
      %v618 = vpop.f32.mrf.mxu0
      %v619 = vadd.f32 0.0, %v618
      %620 = vmatmul.f32.gmra.mxu0 %v391
      %v621 = vpop.f32.mrf.mxu0
      %v622 = vadd.f32 0.0, %v621
      %623 = vmatmul.f32.gmra.mxu0 %v394
      %v624 = vpop.f32.mrf.mxu0
      %v625 = vadd.f32 0.0, %v624
      %626 = vmatmul.f32.gmra.mxu0 %v397
      %v627 = vpop.f32.mrf.mxu0
      %v628 = vadd.f32 0.0, %v627
      %629 = vmatmul.f32.gmra.mxu0 %v400
      %v630 = vpop.f32.mrf.mxu0
      %v631 = vadd.f32 0.0, %v630
      %632 = vmatmul.f32.gmra.mxu0 %v403
      %v633 = vpop.f32.mrf.mxu0
      %v634 = vadd.f32 0.0, %v633
      %635 = vmatmul.f32.gmra.mxu0 %v406
      %v636 = vpop.f32.mrf.mxu0
      %v637 = vadd.f32 0.0, %v636
      %638 = vmatmul.f32.gmra.mxu0 %v409
      %v639 = vpop.f32.mrf.mxu0
      %v640 = vadd.f32 0.0, %v639
      %641 = vmatmul.f32.gmra.mxu0 %v412
      %v642 = vpop.f32.mrf.mxu0
      %v643 = vadd.f32 0.0, %v642
      %644 = vmatmul.f32.gmra.mxu0 %v415
      %v645 = vpop.f32.mrf.mxu0
      %v646 = vadd.f32 0.0, %v645
      %647 = vmatmul.f32.gmra.mxu0 %v418
      %v648 = vpop.f32.mrf.mxu0
      %v649 = vadd.f32 0.0, %v648
      %650 = vmatmul.f32.gmra.mxu0 %v421
      %v651 = vpop.f32.mrf.mxu0
      %v652 = vadd.f32 0.0, %v651
      %653 = vmatmul.f32.gmra.mxu0 %v424
      %v654 = vpop.f32.mrf.mxu0
      %v655 = vadd.f32 0.0, %v654
      %656 = vmatmul.f32.gmra.mxu0 %v427
      %v657 = vpop.f32.mrf.mxu0
      %v658 = vadd.f32 0.0, %v657
      %659 = vmatmul.f32.gmra.mxu0 %v430
      %v660 = vpop.f32.mrf.mxu0
      %v661 = vadd.f32 0.0, %v660
      %662 = vmatmul.f32.gmra.mxu0 %v433
      %v663 = vpop.f32.mrf.mxu0
      %v664 = vadd.f32 0.0, %v663
      %665 = vmatmul.f32.gmra.mxu0 %v436
      %v666 = vpop.f32.mrf.mxu0
      %v667 = vadd.f32 0.0, %v666
      %668 = vmatmul.f32.gmra.mxu0 %v439
      %v669 = vpop.f32.mrf.mxu0
      %v670 = vadd.f32 0.0, %v669
      %671 = vdwg.mxu0
      %v672 = vld [vmem:[#allocation2] sm:$0x3]
      %v673 = vmax.f32 %v464, %v470
      %v674 = vmax.f32 %v467, %v473
      %v675 = vmax.f32 %v673, %v476
      %v676 = vmax.f32 %v674, %v479
      %v677 = vmax.f32 %v675, %v482
      %v678 = vmax.f32 %v676, %v485
      %v679 = vmax.f32 %v677, %v488
      %v680 = vmax.f32 %v678, %v491
      %v681 = vmax.f32 %v679, %v494
      %v682 = vmax.f32 %v680, %v497
      %v683 = vmax.f32 %v681, %v500
      %v684 = vmax.f32 %v682, %v503
      %v685 = vmax.f32 %v683, %v506
      %v686 = vmax.f32 %v684, %v509
      %v687 = vmax.f32 %v685, %v512
      %v688 = vmax.f32 %v686, %v515
      %v689 = vmax.f32 %v687, %v518
      %v690 = vmax.f32 %v688, %v521
      %v691 = vmax.f32 %v689, %v524
      %v692 = vmax.f32 %v690, %v527
      %v693 = vmax.f32 %v691, %v530
      %v694 = vmax.f32 %v692, %v533
      %v695 = vmax.f32 %v693, %v536
      %v696 = vmax.f32 %v694, %v539
      %v697 = vmax.f32 %v695, %v542
      %v698 = vmax.f32 %v696, %v545
      %v699 = vmax.f32 %v697, %v548
      %v700 = vmax.f32 %v698, %v551
      %v701 = vmax.f32 %v699, %v554
      %v702 = vmax.f32 %v700, %v557
      %v703 = vmax.f32 %v701, %v702
      %v704 = vrot.slane %v703, 4
      %v705 = vmax.f32 %v703, %v704
      %v706 = vrot.slane %v705, 2
      %v707 = vmax.f32 %v705, %v706
      %v708 = vrot.slane %v707, 1
      %v709 = vmax.f32 %v707, %v708
      %v710 = vmax.f32 %v577, %v583
      %v711 = vmax.f32 %v580, %v586
      %v712 = vmax.f32 %v710, %v589
      %v713 = vmax.f32 %v711, %v592
      %v714 = vmax.f32 %v712, %v595
      %v715 = vmax.f32 %v713, %v598
      %v716 = vmax.f32 %v714, %v601
      %v717 = vmax.f32 %v715, %v604
      %v718 = vmax.f32 %v716, %v607
      %v719 = vmax.f32 %v717, %v610
      %v720 = vmax.f32 %v718, %v613
      %v721 = vmax.f32 %v719, %v616
      %v722 = vmax.f32 %v720, %v619
      %v723 = vmax.f32 %v721, %v622
      %v724 = vmax.f32 %v722, %v625
      %v725 = vmax.f32 %v723, %v628
      %v726 = vmax.f32 %v724, %v631
      %v727 = vmax.f32 %v725, %v634
      %v728 = vmax.f32 %v726, %v637
      %v729 = vmax.f32 %v727, %v640
      %v730 = vmax.f32 %v728, %v643
      %v731 = vmax.f32 %v729, %v646
      %v732 = vmax.f32 %v730, %v649
      %v733 = vmax.f32 %v731, %v652
      %v734 = vmax.f32 %v732, %v655
      %v735 = vmax.f32 %v733, %v658
      %v736 = vmax.f32 %v734, %v661
      %v737 = vmax.f32 %v735, %v664
      %v738 = vmax.f32 %v736, %v667
      %v739 = vmax.f32 %v737, %v670
      %v740 = vmax.f32 %v738, %v739
      %v741 = vrot.slane %v740, 4
      %v742 = vmax.f32 %v740, %v741
      %v743 = vrot.slane %v742, 2
      %v744 = vmax.f32 %v742, %v743
      %v745 = vrot.slane %v744, 1
      %v746 = vmax.f32 %v744, %v745
      %v749 = vrot.slane %v746, 7
      %vm750 = vcmask 1040384
      %v751 = vsel %vm750, %v709, %v749
      %v753 = vmax.f32 %v672, %v751
      %v754 = vsub.f32 %v672, %v753
      %v755 = vmul.f32 %v754, 1.442695
      %v756 = vpow.pop %v755
      %v758 = vperm.slane %v753, 0
      %v759 = vperm.slane %v753, 1
      %v762 = vsub.f32 %v464, %v758
      %v763 = vsub.f32 %v577, %v759
      %v764 = vsub.f32 %v467, %v758
      %v765 = vsub.f32 %v580, %v759
      %v766 = vsub.f32 %v470, %v758
      %v767 = vsub.f32 %v583, %v759
      %v768 = vsub.f32 %v473, %v758
      %v769 = vsub.f32 %v586, %v759
      %v770 = vsub.f32 %v476, %v758
      %v771 = vsub.f32 %v589, %v759
      %v772 = vsub.f32 %v479, %v758
      %v773 = vsub.f32 %v592, %v759
      %v774 = vsub.f32 %v482, %v758
      %v775 = vsub.f32 %v595, %v759
      %v776 = vsub.f32 %v485, %v758
      %v777 = vsub.f32 %v598, %v759
      %v778 = vsub.f32 %v488, %v758
      %v779 = vsub.f32 %v601, %v759
      %v780 = vsub.f32 %v491, %v758
      %v781 = vsub.f32 %v604, %v759
      %v782 = vsub.f32 %v494, %v758
      %v783 = vsub.f32 %v607, %v759
      %v784 = vsub.f32 %v497, %v758
      %v785 = vsub.f32 %v610, %v759
      %v786 = vsub.f32 %v500, %v758
      %v787 = vsub.f32 %v613, %v759
      %v788 = vsub.f32 %v503, %v758
      %v789 = vsub.f32 %v616, %v759
      %v790 = vsub.f32 %v506, %v758
      %v791 = vsub.f32 %v619, %v759
      %v792 = vsub.f32 %v509, %v758
      %v793 = vsub.f32 %v622, %v759
      %v794 = vsub.f32 %v512, %v758
      %v795 = vsub.f32 %v625, %v759
      %v796 = vsub.f32 %v515, %v758
      %v797 = vsub.f32 %v628, %v759
      %v798 = vsub.f32 %v518, %v758
      %v799 = vsub.f32 %v631, %v759
      %v800 = vsub.f32 %v521, %v758
      %v801 = vsub.f32 %v634, %v759
      %v802 = vsub.f32 %v524, %v758
      %v803 = vsub.f32 %v637, %v759
      %v804 = vsub.f32 %v527, %v758
      %v805 = vsub.f32 %v640, %v759
      %v806 = vsub.f32 %v530, %v758
      %v807 = vsub.f32 %v643, %v759
      %v808 = vsub.f32 %v533, %v758
      %v809 = vsub.f32 %v646, %v759
      %v810 = vsub.f32 %v536, %v758
      %v811 = vsub.f32 %v649, %v759
      %v812 = vsub.f32 %v539, %v758
      %v813 = vsub.f32 %v652, %v759
      %v814 = vsub.f32 %v542, %v758
      %v815 = vsub.f32 %v655, %v759
      %v816 = vsub.f32 %v545, %v758
      %v817 = vsub.f32 %v658, %v759
      %v818 = vsub.f32 %v548, %v758
      %v819 = vsub.f32 %v661, %v759
      %v820 = vsub.f32 %v551, %v758
      %v821 = vsub.f32 %v664, %v759
      %v822 = vsub.f32 %v554, %v758
      %v823 = vsub.f32 %v667, %v759
      %v824 = vsub.f32 %v557, %v758
      %v825 = vsub.f32 %v670, %v759
      %v826 = vmul.f32 %v762, 1.442695
      %v827 = vpow.pop %v826
      %v828 = vmul.f32 %v763, 1.442695
      %v829 = vpow.pop %v828
      %v830 = vmul.f32 %v764, 1.442695
      %v831 = vpow.pop %v830
      %v832 = vmul.f32 %v765, 1.442695
      %v833 = vpow.pop %v832
      %v834 = vmul.f32 %v766, 1.442695
      %v835 = vpow.pop %v834
      %v836 = vmul.f32 %v767, 1.442695
      %v837 = vpow.pop %v836
      %v838 = vmul.f32 %v768, 1.442695
      %v839 = vpow.pop %v838
      %v840 = vmul.f32 %v769, 1.442695
      %v841 = vpow.pop %v840
      %v842 = vmul.f32 %v770, 1.442695
      %v843 = vpow.pop %v842
      %v844 = vmul.f32 %v771, 1.442695
      %v845 = vpow.pop %v844
      %v846 = vmul.f32 %v772, 1.442695
      %v847 = vpow.pop %v846
      %v848 = vmul.f32 %v773, 1.442695
      %v849 = vpow.pop %v848
      %v850 = vmul.f32 %v774, 1.442695
      %v851 = vpow.pop %v850
      %v852 = vmul.f32 %v775, 1.442695
      %v853 = vpow.pop %v852
      %v854 = vmul.f32 %v776, 1.442695
      %v855 = vpow.pop %v854
      %v856 = vmul.f32 %v777, 1.442695
      %v857 = vpow.pop %v856
      %v858 = vmul.f32 %v778, 1.442695
      %v859 = vpow.pop %v858
      %v860 = vmul.f32 %v779, 1.442695
      %v861 = vpow.pop %v860
      %v862 = vmul.f32 %v780, 1.442695
      %v863 = vpow.pop %v862
      %v864 = vmul.f32 %v781, 1.442695
      %v865 = vpow.pop %v864
      %v866 = vmul.f32 %v782, 1.442695
      %v867 = vpow.pop %v866
      %v868 = vmul.f32 %v783, 1.442695
      %v869 = vpow.pop %v868
      %v870 = vmul.f32 %v784, 1.442695
      %v871 = vpow.pop %v870
      %v872 = vmul.f32 %v785, 1.442695
      %v873 = vpow.pop %v872
      %v874 = vmul.f32 %v786, 1.442695
      %v875 = vpow.pop %v874
      %v876 = vmul.f32 %v787, 1.442695
      %v877 = vpow.pop %v876
      %v878 = vmul.f32 %v788, 1.442695
      %v879 = vpow.pop %v878
      %v880 = vmul.f32 %v789, 1.442695
      %v881 = vpow.pop %v880
      %v882 = vmul.f32 %v790, 1.442695
      %v883 = vpow.pop %v882
      %v884 = vmul.f32 %v791, 1.442695
      %v885 = vpow.pop %v884
      %v886 = vmul.f32 %v792, 1.442695
      %v887 = vpow.pop %v886
      %v888 = vmul.f32 %v793, 1.442695
      %v889 = vpow.pop %v888
      %v890 = vmul.f32 %v794, 1.442695
      %v891 = vpow.pop %v890
      %v892 = vmul.f32 %v795, 1.442695
      %v893 = vpow.pop %v892
      %v894 = vmul.f32 %v796, 1.442695
      %v895 = vpow.pop %v894
      %v896 = vmul.f32 %v797, 1.442695
      %v897 = vpow.pop %v896
      %v898 = vmul.f32 %v798, 1.442695
      %v899 = vpow.pop %v898
      %v900 = vmul.f32 %v799, 1.442695
      %v901 = vpow.pop %v900
      %v902 = vmul.f32 %v800, 1.442695
      %v903 = vpow.pop %v902
      %v904 = vmul.f32 %v801, 1.442695
      %v905 = vpow.pop %v904
      %v906 = vmul.f32 %v802, 1.442695
      %v907 = vpow.pop %v906
      %v908 = vmul.f32 %v803, 1.442695
      %v909 = vpow.pop %v908
      %v910 = vmul.f32 %v804, 1.442695
      %v911 = vpow.pop %v910
      %v912 = vmul.f32 %v805, 1.442695
      %v913 = vpow.pop %v912
      %v914 = vmul.f32 %v806, 1.442695
      %v915 = vpow.pop %v914
      %v916 = vmul.f32 %v807, 1.442695
      %v917 = vpow.pop %v916
      %v918 = vmul.f32 %v808, 1.442695
      %v919 = vpow.pop %v918
      %v920 = vmul.f32 %v809, 1.442695
      %v921 = vpow.pop %v920
      %v922 = vmul.f32 %v810, 1.442695
      %v923 = vpow.pop %v922
      %v924 = vmul.f32 %v811, 1.442695
      %v925 = vpow.pop %v924
      %v926 = vmul.f32 %v812, 1.442695
      %v927 = vpow.pop %v926
      %v928 = vmul.f32 %v813, 1.442695
      %v929 = vpow.pop %v928
      %v930 = vmul.f32 %v814, 1.442695
      %v931 = vpow.pop %v930
      %v932 = vmul.f32 %v815, 1.442695
      %v933 = vpow.pop %v932
      %v934 = vmul.f32 %v816, 1.442695
      %v935 = vpow.pop %v934
      %v936 = vmul.f32 %v817, 1.442695
      %v937 = vpow.pop %v936
      %v938 = vmul.f32 %v818, 1.442695
      %v939 = vpow.pop %v938
      %v940 = vmul.f32 %v819, 1.442695
      %v941 = vpow.pop %v940
      %v942 = vmul.f32 %v820, 1.442695
      %v943 = vpow.pop %v942
      %v944 = vmul.f32 %v821, 1.442695
      %v945 = vpow.pop %v944
      %v946 = vmul.f32 %v822, 1.442695
      %v947 = vpow.pop %v946
      %v948 = vmul.f32 %v823, 1.442695
      %v949 = vpow.pop %v948
      %v950 = vmul.f32 %v824, 1.442695
      %v951 = vpow.pop %v950
      %v952 = vmul.f32 %v825, 1.442695
      %v953 = vpow.pop %v952
      %v954 = vld [vmem:[#allocation3] sm:$0x3]
      %v955 = vmul.f32 %v756, %v954
      %v956 = vadd.f32 %v827, %v831
      %v957 = vadd.f32 %v956, %v835
      %v958 = vadd.f32 %v957, %v839
      %v959 = vadd.f32 %v958, %v843
      %v960 = vadd.f32 %v959, %v847
      %v961 = vadd.f32 %v960, %v851
      %v962 = vadd.f32 %v961, %v855
      %v963 = vadd.f32 %v962, %v859
      %v964 = vadd.f32 %v963, %v863
      %v965 = vadd.f32 %v964, %v867
      %v966 = vadd.f32 %v965, %v871
      %v967 = vadd.f32 %v966, %v875
      %v968 = vadd.f32 %v967, %v879
      %v969 = vadd.f32 %v968, %v883
      %v970 = vadd.f32 %v969, %v887
      %v971 = vadd.f32 %v970, %v891
      %v972 = vadd.f32 %v971, %v895
      %v973 = vadd.f32 %v972, %v899
      %v974 = vadd.f32 %v973, %v903
      %v975 = vadd.f32 %v974, %v907
      %v976 = vadd.f32 %v975, %v911
      %v977 = vadd.f32 %v976, %v915
      %v978 = vadd.f32 %v977, %v919
      %v979 = vadd.f32 %v978, %v923
      %v980 = vadd.f32 %v979, %v927
      %v981 = vadd.f32 %v980, %v931
      %v982 = vadd.f32 %v981, %v935
      %v983 = vadd.f32 %v982, %v939
      %v984 = vadd.f32 %v983, %v943
      %v985 = vadd.f32 %v984, %v947
      %v986 = vadd.f32 %v985, %v951
      %v987 = vrot.slane %v986, 4
      %v988 = vadd.f32 %v986, %v987
      %v989 = vrot.slane %v988, 2
      %v990 = vadd.f32 %v988, %v989
      %v991 = vrot.slane %v990, 1
      %v992 = vadd.f32 %v990, %v991
      %v993 = vadd.f32 %v829, %v833
      %v994 = vadd.f32 %v993, %v837
      %v995 = vadd.f32 %v994, %v841
      %v996 = vadd.f32 %v995, %v845
      %v997 = vadd.f32 %v996, %v849
      %v998 = vadd.f32 %v997, %v853
      %v999 = vadd.f32 %v998, %v857
      %v1000 = vadd.f32 %v999, %v861
      %v1001 = vadd.f32 %v1000, %v865
      %v1002 = vadd.f32 %v1001, %v869
      %v1003 = vadd.f32 %v1002, %v873
      %v1004 = vadd.f32 %v1003, %v877
      %v1005 = vadd.f32 %v1004, %v881
      %v1006 = vadd.f32 %v1005, %v885
      %v1007 = vadd.f32 %v1006, %v889
      %v1008 = vadd.f32 %v1007, %v893
      %v1009 = vadd.f32 %v1008, %v897
      %v1010 = vadd.f32 %v1009, %v901
      %v1011 = vadd.f32 %v1010, %v905
      %v1012 = vadd.f32 %v1011, %v909
      %v1013 = vadd.f32 %v1012, %v913
      %v1014 = vadd.f32 %v1013, %v917
      %v1015 = vadd.f32 %v1014, %v921
      %v1016 = vadd.f32 %v1015, %v925
      %v1017 = vadd.f32 %v1016, %v929
      %v1018 = vadd.f32 %v1017, %v933
      %v1019 = vadd.f32 %v1018, %v937
      %v1020 = vadd.f32 %v1019, %v941
      %v1021 = vadd.f32 %v1020, %v945
      %v1022 = vadd.f32 %v1021, %v949
      %v1023 = vadd.f32 %v1022, %v953
      %v1024 = vrot.slane %v1023, 4
      %v1025 = vadd.f32 %v1023, %v1024
      %v1026 = vrot.slane %v1025, 2
      %v1027 = vadd.f32 %v1025, %v1026
      %v1028 = vrot.slane %v1027, 1
      %v1029 = vadd.f32 %v1027, %v1028
      %v1032 = vrot.slane %v1029, 7
      %v1033 = vsel %vm750, %v992, %v1032
      %v1035 = vadd.f32 %v955, %v1033
      %v1036 = vlaneseq
      %vm1037 = vcmp.ge.s32.totalorder %v1036, 0
      %vm1038 = vcmp.lt.s32.totalorder %v1036, 256
      %vm1039 = vmand %vm1037, %vm1038
      %1040 = vst.msk [vmem:[#allocation3] sm:$0x3] %vm1039, %v1035
      %v1041 = vld [vmem:[#allocation4] sm:$0xff]
      %v1042 = vld [vmem:[#allocation4 + $0x8] sm:$0xff]
      %v1043 = vld [vmem:[#allocation4 + $0x10] sm:$0xff]
      %v1044 = vld [vmem:[#allocation4 + $0x18] sm:$0xff]
      %v1046 = vperm.slane %v756, 0
      %v1047 = vperm.slane %v756, 1
      %v1050 = vmul.f32 %v1046, %v1041
      %v1051 = vmul.f32 %v1047, %v1042
      %v1052 = vmul.f32 %v1046, %v1043
      %v1053 = vmul.f32 %v1047, %v1044
      %1054 = vmatpush.msra.mxu0 %v887
      %1055 = vmatpush.msra.mxu0 %v883
      %1056 = vmatpush.msra.mxu0 %v879
      %1057 = vmatpush.msra.mxu0 %v875
      %1058 = vmatpush.msra.mxu0 %v871
      %1059 = vmatpush.msra.mxu0 %v867
      %1060 = vmatpush.msra.mxu0 %v863
      %1061 = vmatpush.msra.mxu0 %v859
      %1062 = vmatpush.msra.mxu0 %v855
      %1063 = vmatpush.msra.mxu0 %v851
      %1064 = vmatpush.msra.mxu0 %v847
      %1065 = vmatpush.msra.mxu0 %v843
      %1066 = vmatpush.msra.mxu0 %v839
      %1067 = vmatpush.msra.mxu0 %v835
      %1068 = vmatpush.msra.mxu0 %v831
      %1069 = vmatpush.msra.mxu0 %v827
      %1070 = vmatmul.f32.gmra.mxu0 %v336
      %v1071 = vpop.f32.mrf.mxu0
      %v1072 = vadd.f32 0.0, %v1071
      %1073 = vmatmul.f32.gmra.mxu0 %v338
      %v1074 = vpop.f32.mrf.mxu0
      %v1075 = vadd.f32 0.0, %v1074
      %1076 = vdwg.mxu0
      %1077 = vmatpush.msra.mxu0 %v951
      %1078 = vmatpush.msra.mxu0 %v947
      %1079 = vmatpush.msra.mxu0 %v943
      %1080 = vmatpush.msra.mxu0 %v939
      %1081 = vmatpush.msra.mxu0 %v935
      %1082 = vmatpush.msra.mxu0 %v931
      %1083 = vmatpush.msra.mxu0 %v927
      %1084 = vmatpush.msra.mxu0 %v923
      %1085 = vmatpush.msra.mxu0 %v919
      %1086 = vmatpush.msra.mxu0 %v915
      %1087 = vmatpush.msra.mxu0 %v911
      %1088 = vmatpush.msra.mxu0 %v907
      %1089 = vmatpush.msra.mxu0 %v903
      %1090 = vmatpush.msra.mxu0 %v899
      %1091 = vmatpush.msra.mxu0 %v895
      %1092 = vmatpush.msra.mxu0 %v891
      %1093 = vmatmul.f32.gmra.mxu0 %v337
      %v1094 = vpop.f32.mrf.mxu0
      %v1095 = vadd.f32 %v1072, %v1094
      %1096 = vmatmul.f32.gmra.mxu0 %v339
      %v1097 = vpop.f32.mrf.mxu0
      %v1098 = vadd.f32 %v1075, %v1097
      %1099 = vdwg.mxu0
      %1100 = vmatpush.msra.mxu0 %v889
      %1101 = vmatpush.msra.mxu0 %v885
      %1102 = vmatpush.msra.mxu0 %v881
      %1103 = vmatpush.msra.mxu0 %v877
      %1104 = vmatpush.msra.mxu0 %v873
      %1105 = vmatpush.msra.mxu0 %v869
      %1106 = vmatpush.msra.mxu0 %v865
      %1107 = vmatpush.msra.mxu0 %v861
      %1108 = vmatpush.msra.mxu0 %v857
      %1109 = vmatpush.msra.mxu0 %v853
      %1110 = vmatpush.msra.mxu0 %v849
      %1111 = vmatpush.msra.mxu0 %v845
      %1112 = vmatpush.msra.mxu0 %v841
      %1113 = vmatpush.msra.mxu0 %v837
      %1114 = vmatpush.msra.mxu0 %v833
      %1115 = vmatpush.msra.mxu0 %v829
      %1116 = vmatmul.f32.gmra.mxu0 %v336
      %v1117 = vpop.f32.mrf.mxu0
      %v1118 = vadd.f32 0.0, %v1117
      %1119 = vmatmul.f32.gmra.mxu0 %v338
      %v1120 = vpop.f32.mrf.mxu0
      %v1121 = vadd.f32 0.0, %v1120
      %1122 = vdwg.mxu0
      %1123 = vmatpush.msra.mxu0 %v953
      %1124 = vmatpush.msra.mxu0 %v949
      %1125 = vmatpush.msra.mxu0 %v945
      %1126 = vmatpush.msra.mxu0 %v941
      %1127 = vmatpush.msra.mxu0 %v937
      %1128 = vmatpush.msra.mxu0 %v933
      %1129 = vmatpush.msra.mxu0 %v929
      %1130 = vmatpush.msra.mxu0 %v925
      %1131 = vmatpush.msra.mxu0 %v921
      %1132 = vmatpush.msra.mxu0 %v917
      %1133 = vmatpush.msra.mxu0 %v913
      %1134 = vmatpush.msra.mxu0 %v909
      %1135 = vmatpush.msra.mxu0 %v905
      %1136 = vmatpush.msra.mxu0 %v901
      %1137 = vmatpush.msra.mxu0 %v897
      %1138 = vmatpush.msra.mxu0 %v893
      %1139 = vmatmul.f32.gmra.mxu0 %v337
      %v1140 = vpop.f32.mrf.mxu0
      %v1141 = vadd.f32 %v1118, %v1140
      %1142 = vmatmul.f32.gmra.mxu0 %v339
      %v1143 = vpop.f32.mrf.mxu0
      %v1144 = vadd.f32 %v1121, %v1143
      %1145 = vdwg.mxu0
      %v1146 = vadd.f32 %v1050, %v1095
      %v1147 = vadd.f32 %v1051, %v1141
      %v1148 = vadd.f32 %v1052, %v1098
      %v1149 = vadd.f32 %v1053, %v1144
      %1150 = vst [vmem:[#allocation4] sm:$0xff] %v1146
      %1151 = vst [vmem:[#allocation4 + $0x8] sm:$0xff] %v1147
      %1152 = vst [vmem:[#allocation4 + $0x10] sm:$0xff] %v1148
      %1153 = vst [vmem:[#allocation4 + $0x18] sm:$0xff] %v1149
      %1154 = vst.msk [vmem:[#allocation2] sm:$0x3] %vm1039, %v753
      // Predicated region
      $region37: #{pam_forward.3} parent=31 // pred_check
        %p1155 = pneg %p289
      $region38: #{pam_forward.3} parent=31 // pred_check_branch
        %1157 = sbr.rel (%p1155) target = $region40
      $region39: #{pam_forward.3} parent=31 // pred_region
        %v1158 = vld [vmem:[#allocation3] sm:$0x3]
        %v1159 = vrcp.pop %v1158
        %v1160 = vld [vmem:[#allocation4] sm:$0xff]
        %v1161 = vld [vmem:[#allocation4 + $0x8] sm:$0xff]
        %v1162 = vld [vmem:[#allocation4 + $0x10] sm:$0xff]
        %v1163 = vld [vmem:[#allocation4 + $0x18] sm:$0xff]
        %v1165 = vperm.slane %v1159, 0
        %v1166 = vperm.slane %v1159, 1
        %v1169 = vmul.f32 %v1160, %v1165
        %v1170 = vmul.f32 %v1161, %v1166
        %v1171 = vmul.f32 %v1162, %v1165
        %v1172 = vmul.f32 %v1163, %v1166
        %1173 = vst [vmem:[%s287] sm:$0xff] %v1169
        %1174 = vst [vmem:[%s287 + $0x8] sm:$0xff] %v1170
        %1175 = vst [vmem:[%s287 + $0x10] sm:$0xff] %v1171
        %1176 = vst [vmem:[%s287 + $0x18] sm:$0xff] %v1172
      $region40: #{pam_forward.3} parent=31 // pred_fallthru
        _
      %s1177 = smul.u32 2, %s20
      %p1178 = scmp.lt.s32.totalorder %s19, 1
      %s1179 = scalar_select %p1178, %s19, 1
      %p1180 = scmp.lt.s32.totalorder %s1177, 1
      %s1181 = scalar_select %p1180, %s1177, 1
      %s1182 = smul.addr %s1179, 4
      %s1183 = sadd.s32 %s1181, %s1182
      %s1184 = smul.addr %s1183, 8
      %s1185 = scalar_lea.vmem %s3, %s1184
      // Predicated region
      $region41: #{pam_forward.3} parent=31 // pred_check
        %p1186 = pneg %p137
      $region42: #{pam_forward.3} parent=31 // pred_check_branch
        %1188 = sbr.rel (%p1186) target = $region44
      $region43: #{pam_forward.3} parent=31 // pred_region
        %s1189 = smul.u32 2, %s20
      $region44: #{pam_forward.3} parent=31 // pred_fallthru
        _
    $region32: #{pam_forward.3} parent=5 // pred_fallthru
      _
    %p1190 = scmp.le.s32.totalorder 2, %s9
    // Predicated region
    $region45: #{pam_forward.3} parent=5 // pred_check
      %p1191 = pneg %p1190
    $region46: #{pam_forward.3} parent=5 // pred_check_branch
      %1193 = sbr.rel (%p1191) target = $region48
    $region47: #{pam_forward.3} parent=5 // pred_region
      %s1194 = ssub.s32 %s9, 2
      // Predicated region
      $region49: #{pam_forward.3} parent=47 // pred_check
        %p1195 = pneg %p143
      $region50: #{pam_forward.3} parent=47 // pred_check_branch
        %1197 = sbr.rel (%p1195) target = $region52
      $region51: #{pam_forward.3} parent=47 // pred_region
        %s1198 = smul.u32 2, %s23
        %p1199 = scmp.lt.s32.totalorder %s22, 1
        %s1200 = scalar_select %p1199, %s22, 1
        %p1201 = scmp.lt.s32.totalorder %s1198, 1
        %s1202 = scalar_select %p1201, %s1198, 1
        %s1203 = smul.addr %s1200, 4
        %s1204 = sadd.s32 %s1202, %s1203
        %s1205 = smul.addr %s1204, 8
        %s1206 = scalar_lea.vmem %s3, %s1205
      $region52: #{pam_forward.3} parent=47 // pred_fallthru
        _
    $region48: #{pam_forward.3} parent=5 // pred_fallthru
      _
  $region6: #{pam_forward.3} parent=0 // loop_footer
    %s13 = sadd.s32 1, %s9
  $region7: #{pam_forward.3} parent=0 // loop_footer_branch
    %8 = sbr.rel target = $region3
  $region8: #{pam_forward.3} parent=0 // loop_exit
    _

</llo_original>
